<compile_context>
chip_gen: v6e
topology: v6e:2x2x1
jax: 0.10.0
libtpu: 0.0.40
codegen_flags: <defaults>
</compile_context>

<pallas_src>
import functools

import jax
import jax.numpy as jnp
from jax.experimental import pallas as pl
from jax.experimental.pallas import tpu as pltpu

# ---------------- synthetic BERT config (small) ----------------
VOCAB = 100
TYPE_VOCAB = 2
MAX_POS = 32
HIDDEN = 32
N_HEADS = 2
HEAD_DIM = HIDDEN // N_HEADS
N_LAYERS = 2
INTERMEDIATE = 64
NUM_LABELS = 3
LN_EPS = 1e-12
INTENSITY_OFFSET = 0.0


# ---------------- the single fused Pallas kernel ----------------
def _fused_bert_kernel(
    # inputs
    x_ref, mask_ref, emb_g_ref, emb_b_ref,
    wqkv_ref, bqkv_ref, wo_ref, bo_ref, ln1g_ref, ln1b_ref,
    w1_ref, b1_ref, w2_ref, b2_ref, ln2g_ref, ln2b_ref,
    wp_ref, bp_ref, wc_ref, bc_ref, labels_ref, inten_ref,
    # outputs
    loss_ref, logits_ref,
    # scratch
    qkv_sc, attn_sc, cls_sc,
    *, batch, seq, n_heads, head_dim, n_layers, eps, offset,
):
    hidden = n_heads * head_dim
    scale = 1.0 / float(head_dim) ** 0.5

    def layernorm(v, g, b):
        mu = jnp.mean(v, axis=-1, keepdims=True)
        var = jnp.mean((v - mu) ** 2, axis=-1, keepdims=True)
        return (v - mu) * jax.lax.rsqrt(var + eps) * g + b

    # embedding LayerNorm (residual-free path, no zeros tensor)
    x = layernorm(x_ref[...], emb_g_ref[...], emb_b_ref[...])
    mask = mask_ref[...]                                   # (B, S) additive bias

    for l in range(n_layers):                              # static unroll (N_LAYERS=2)
        # ---- fused QKV projection: (B*S, 3H) ----
        qkv_sc[...] = (jnp.dot(x, wqkv_ref[l], preferred_element_type=jnp.float32)
                       + bqkv_ref[l])
        wo_l = wo_ref[l]

        # ---- multi-head self-attention (all heads/batches unrolled in-kernel) ----
        for b in range(batch):
            r0 = b * seq
            mrow = mask[b:b + 1, :]                        # (1, S) key-position bias
            out_b = None
            for h in range(n_heads):
                c0 = h * head_dim
                q = qkv_sc[r0:r0 + seq, c0:c0 + head_dim]
                k = qkv_sc[r0:r0 + seq, hidden + c0:hidden + c0 + head_dim]
                v = qkv_sc[r0:r0 + seq, 2 * hidden + c0:2 * hidden + c0 + head_dim]
                s = jax.lax.dot_general(
                    q, k, (((1,), (1,)), ((), ())),
                    preferred_element_type=jnp.float32) * scale + mrow      # (S, S)
                mx = jnp.max(s, axis=-1, keepdims=True)
                p = jnp.exp(s - mx)
                p = p * pl.reciprocal(jnp.sum(p, axis=-1, keepdims=True), approx=True)
                ctx = jnp.dot(p, v, preferred_element_type=jnp.float32)     # (S, Dh)
                # fold the per-head slice of the output projection in here so the
                # heads are merged by summation (no lane-axis concatenation)
                contrib = jnp.dot(ctx, wo_l[c0:c0 + head_dim, :],
                                  preferred_element_type=jnp.float32)       # (S, H)
                out_b = contrib if out_b is None else out_b + contrib
            attn_sc[r0:r0 + seq, :] = out_b
        attn_out = attn_sc[...] + bo_ref[l]                                 # (B*S, H)
        x = layernorm(attn_out + x, ln1g_ref[l], ln1b_ref[l])

        # ---- feed-forward ----
        ff = jnp.dot(x, w1_ref[l], preferred_element_type=jnp.float32) + b1_ref[l]
        # TODO(synk): HF BERT uses exact erf-GELU; tanh approximation kept for Mosaic-safe lowering.
        ff = 0.5 * ff * (1.0 + jnp.tanh(0.7978845608028654 * (ff + 0.044715 * ff * ff * ff)))
        ff = jnp.dot(ff, w2_ref[l], preferred_element_type=jnp.float32) + b2_ref[l]
        x = layernorm(ff + x, ln2g_ref[l], ln2b_ref[l])

    # ---- pooler on the [CLS] rows + classifier ----
    for b in range(batch):
        cls_sc[b:b + 1, :] = x[b * seq:b * seq + 1, :]
    cls = cls_sc[...]                                                       # (B, H)
    pooled = jnp.tanh(jnp.dot(cls, wp_ref[...],
                              preferred_element_type=jnp.float32) + bp_ref[...])
    logits = jnp.dot(pooled, wc_ref[...],
                     preferred_element_type=jnp.float32) + bc_ref[...]      # (B, L)
    logits_ref[...] = logits

    # ---- emotion-weighted cross-entropy: mean(per-example CE * (intensity+offset)*2) ----
    mx = jnp.max(logits, axis=-1, keepdims=True)
    shifted = logits - mx
    lse = jnp.log(jnp.sum(jnp.exp(shifted), axis=-1, keepdims=True))
    logprobs = shifted - lse
    col = jax.lax.broadcasted_iota(jnp.int32, logits.shape, 1)
    onehot = (col == labels_ref[...]).astype(jnp.float32)
    nll = -jnp.sum(logprobs * onehot, axis=-1, keepdims=True)               # (B, 1)
    w = (inten_ref[...] + offset) * 2.0                                     # intensity_around_1
    loss_ref[...] = jnp.mean(nll * w).reshape(1, 1)


def _full_spec(shape):
    nd = len(shape)
    return pl.BlockSpec(shape, lambda *_: (0,) * nd)


# ---------------- parameter init (deterministic, synthetic) ----------------
def init_params(key):
    ks = jax.random.split(key, 10)

    def dense(k, shape):
        return (jax.random.normal(k, shape, jnp.float32) * 0.02).astype(jnp.float32)

    H, I, L = HIDDEN, INTERMEDIATE, N_LAYERS
    return {
        "word_emb": dense(ks[0], (VOCAB, H)),
        "pos_emb": dense(ks[1], (MAX_POS, H)),
        "type_emb": dense(ks[2], (TYPE_VOCAB, H)),
        "emb_ln_g": jnp.ones((1, H), jnp.float32),
        "emb_ln_b": jnp.zeros((1, H), jnp.float32),
        # fused QKV weight/bias (wq|wk|wv concatenated along the output dim), stacked over layers
        "wqkv": dense(ks[3], (L, H, 3 * H)),
        "bqkv": jnp.zeros((L, 1, 3 * H), jnp.float32),
        "wo": dense(ks[4], (L, H, H)),
        "bo": jnp.zeros((L, 1, H), jnp.float32),
        "ln1_g": jnp.ones((L, 1, H), jnp.float32),
        "ln1_b": jnp.zeros((L, 1, H), jnp.float32),
        "w1": dense(ks[5], (L, H, I)),
        "b1": jnp.zeros((L, 1, I), jnp.float32),
        "w2": dense(ks[6], (L, I, H)),
        "b2": jnp.zeros((L, 1, H), jnp.float32),
        "ln2_g": jnp.ones((L, 1, H), jnp.float32),
        "ln2_b": jnp.zeros((L, 1, H), jnp.float32),
        "wp": dense(ks[7], (H, H)),
        "bp": jnp.zeros((1, H), jnp.float32),
        "wc": dense(ks[8], (H, NUM_LABELS)),
        "bc": jnp.zeros((1, NUM_LABELS), jnp.float32),
    }


# ---------------- forward (BertForSequenceClassification + emotion-weighted loss) ----------------
def bert_with_emotion_forward(params, input_ids, attention_mask, labels, intensity):
    B, S = input_ids.shape
    H = HIDDEN

    # --- embeddings (token/pos/type gathers are JAX glue; everything else is in-kernel) ---
    emb = (params["word_emb"][input_ids]
           + params["pos_emb"][jnp.arange(S)][None, :, :]
           + params["type_emb"][0][None, None, :])          # token_type_ids == 0
    x_emb = emb.reshape(B * S, H).astype(jnp.float32)

    # additive attention-mask bias, kept as (B, S); per-head replication happens in-kernel
    mask_bias = (1.0 - attention_mask.astype(jnp.float32)) * -10000.0
    labels2 = labels.reshape(B, 1).astype(jnp.int32)
    inten2 = intensity.reshape(B, 1).astype(jnp.float32)

    kernel = functools.partial(
        _fused_bert_kernel, batch=B, seq=S, n_heads=N_HEADS, head_dim=HEAD_DIM,
        n_layers=N_LAYERS, eps=LN_EPS, offset=INTENSITY_OFFSET)

    operands = (
        x_emb, mask_bias, params["emb_ln_g"], params["emb_ln_b"],
        params["wqkv"], params["bqkv"], params["wo"], params["bo"],
        params["ln1_g"], params["ln1_b"],
        params["w1"], params["b1"], params["w2"], params["b2"],
        params["ln2_g"], params["ln2_b"],
        params["wp"], params["bp"], params["wc"], params["bc"],
        labels2, inten2,
    )

    loss, logits = pl.pallas_call(
        kernel,
        out_shape=(jax.ShapeDtypeStruct((1, 1), jnp.float32),
                   jax.ShapeDtypeStruct((B, NUM_LABELS), jnp.float32)),
        in_specs=[_full_spec(op.shape) for op in operands],
        out_specs=(_full_spec((1, 1)), _full_spec((B, NUM_LABELS))),
        scratch_shapes=[
            pltpu.VMEM((B * S, 3 * H), jnp.float32),   # fused QKV
            pltpu.VMEM((B * S, H), jnp.float32),       # attention output assembly
            pltpu.VMEM((B, H), jnp.float32),           # [CLS] rows
        ],
    )(*operands)
    return loss[0, 0], logits


if __name__ == "__main__":
    key = jax.random.PRNGKey(0)
    pkey, ikey, lkey, nkey = jax.random.split(key, 4)

    B, S = 2, 8
    params = init_params(pkey)

    input_ids = jax.random.randint(ikey, (B, S), 0, VOCAB, dtype=jnp.int32)
    attention_mask = jnp.array([[1, 1, 1, 1, 1, 1, 1, 1],
                                [1, 1, 1, 1, 1, 1, 0, 0]], dtype=jnp.int32)
    labels = jax.random.randint(lkey, (B,), 0, NUM_LABELS, dtype=jnp.int32)
    intensity = jax.random.uniform(nkey, (B,), jnp.float32, 0.25, 0.75)

    fwd = jax.jit(bert_with_emotion_forward)
    loss, logits = fwd(params, input_ids, attention_mask, labels, intensity)
    jax.block_until_ready((loss, logits))
    print("KERNEL_OK")
</pallas_src>

<mosaic_0001>
module attributes {stable_mosaic.version = 11 : i64} {
  func.func @_fused_bert_kernel(%arg0: memref<16x32xf32, #tpu.memory_space<vmem>>, %arg1: memref<2x8xf32, #tpu.memory_space<vmem>>, %arg2: memref<1x32xf32, #tpu.memory_space<vmem>>, %arg3: memref<1x32xf32, #tpu.memory_space<vmem>>, %arg4: memref<2x32x96xf32, #tpu.memory_space<vmem>>, %arg5: memref<2x1x96xf32, #tpu.memory_space<vmem>>, %arg6: memref<2x32x32xf32, #tpu.memory_space<vmem>>, %arg7: memref<2x1x32xf32, #tpu.memory_space<vmem>>, %arg8: memref<2x1x32xf32, #tpu.memory_space<vmem>>, %arg9: memref<2x1x32xf32, #tpu.memory_space<vmem>>, %arg10: memref<2x32x64xf32, #tpu.memory_space<vmem>>, %arg11: memref<2x1x64xf32, #tpu.memory_space<vmem>>, %arg12: memref<2x64x32xf32, #tpu.memory_space<vmem>>, %arg13: memref<2x1x32xf32, #tpu.memory_space<vmem>>, %arg14: memref<2x1x32xf32, #tpu.memory_space<vmem>>, %arg15: memref<2x1x32xf32, #tpu.memory_space<vmem>>, %arg16: memref<32x32xf32, #tpu.memory_space<vmem>>, %arg17: memref<1x32xf32, #tpu.memory_space<vmem>>, %arg18: memref<32x3xf32, #tpu.memory_space<vmem>>, %arg19: memref<1x3xf32, #tpu.memory_space<vmem>>, %arg20: memref<2x1xi32, #tpu.memory_space<vmem>>, %arg21: memref<2x1xf32, #tpu.memory_space<vmem>>, %arg22: memref<1x1xf32, #tpu.memory_space<vmem>>, %arg23: memref<2x3xf32, #tpu.memory_space<vmem>>, %arg24: memref<16x96xf32, #tpu.memory_space<vmem>>, %arg25: memref<16x32xf32, #tpu.memory_space<vmem>>, %arg26: memref<2x32xf32, #tpu.memory_space<vmem>>) attributes {dimension_semantics = [], scalar_prefetch = 0 : i64, scratch_operands = 3 : i64, tpu.core_type = #tpu.core_type<tc>} {
    %c0 = arith.constant 0 : index
    %c0_0 = arith.constant 0 : index
    %0 = vector.load %arg0[%c0, %c0_0] : memref<16x32xf32, #tpu.memory_space<vmem>>, vector<16x32xf32>
    %c0_1 = arith.constant 0 : index
    %c0_2 = arith.constant 0 : index
    %1 = vector.load %arg2[%c0_1, %c0_2] : memref<1x32xf32, #tpu.memory_space<vmem>>, vector<1x32xf32>
    %c0_3 = arith.constant 0 : index
    %c0_4 = arith.constant 0 : index
    %2 = vector.load %arg3[%c0_3, %c0_4] : memref<1x32xf32, #tpu.memory_space<vmem>>, vector<1x32xf32>
    %cst = arith.constant dense<0.000000e+00> : vector<16xf32>
    %3 = vector.multi_reduction <add>, %0, %cst [1] : vector<16x32xf32> to vector<16xf32>
    %4 = vector.shape_cast %3 : vector<16xf32> to vector<16x1xf32>
    %cst_5 = arith.constant 3.200000e+01 : f32
    %5 = vector.broadcast %cst_5 : f32 to vector<16x1xf32>
    %6 = arith.divf %4, %5 : vector<16x1xf32>
    %7 = vector.broadcast %6 : vector<16x1xf32> to vector<16x32xf32>
    %8 = arith.subf %0, %7 : vector<16x32xf32>
    %9 = arith.mulf %8, %8 : vector<16x32xf32>
    %cst_6 = arith.constant dense<0.000000e+00> : vector<16xf32>
    %10 = vector.multi_reduction <add>, %9, %cst_6 [1] : vector<16x32xf32> to vector<16xf32>
    %11 = vector.shape_cast %10 : vector<16xf32> to vector<16x1xf32>
    %cst_7 = arith.constant 3.200000e+01 : f32
    %12 = vector.broadcast %cst_7 : f32 to vector<16x1xf32>
    %13 = arith.divf %11, %12 : vector<16x1xf32>
    %14 = vector.broadcast %6 : vector<16x1xf32> to vector<16x32xf32>
    %15 = arith.subf %0, %14 : vector<16x32xf32>
    %cst_8 = arith.constant 9.99999996E-13 : f32
    %16 = vector.broadcast %cst_8 : f32 to vector<16x1xf32>
    %17 = arith.addf %13, %16 : vector<16x1xf32>
    %18 = math.rsqrt %17 : vector<16x1xf32>
    %19 = vector.broadcast %18 : vector<16x1xf32> to vector<16x32xf32>
    %20 = arith.mulf %15, %19 : vector<16x32xf32>
    %21 = vector.broadcast %1 : vector<1x32xf32> to vector<16x32xf32>
    %22 = arith.mulf %20, %21 : vector<16x32xf32>
    %23 = vector.broadcast %2 : vector<1x32xf32> to vector<16x32xf32>
    %24 = arith.addf %22, %23 : vector<16x32xf32>
    %c0_9 = arith.constant 0 : index
    %c0_10 = arith.constant 0 : index
    %25 = vector.load %arg1[%c0_9, %c0_10] : memref<2x8xf32, #tpu.memory_space<vmem>>, vector<2x8xf32>
    %c0_11 = arith.constant 0 : index
    %c0_12 = arith.constant 0 : index
    %c0_13 = arith.constant 0 : index
    %26 = vector.load %arg4[%c0_11, %c0_12, %c0_13] : memref<2x32x96xf32, #tpu.memory_space<vmem>>, vector<1x32x96xf32>
    %27 = vector.shape_cast %26 : vector<1x32x96xf32> to vector<32x96xf32>
    %cst_14 = arith.constant dense<0.000000e+00> : vector<16x96xf32>
    %28 = tpu.matmul %24, %27, %cst_14 {dimension_numbers = #tpu.dot_dimension_numbers<[1], [0], [0], [1], [0, 0, 1, 1], [], []>} : vector<16x32xf32>, vector<32x96xf32>, vector<16x96xf32> -> vector<16x96xf32>
    %c0_15 = arith.constant 0 : index
    %c0_16 = arith.constant 0 : index
    %c0_17 = arith.constant 0 : index
    %29 = vector.load %arg5[%c0_15, %c0_16, %c0_17] : memref<2x1x96xf32, #tpu.memory_space<vmem>>, vector<1x1x96xf32>
    %30 = vector.shape_cast %29 : vector<1x1x96xf32> to vector<1x96xf32>
    %31 = vector.broadcast %30 : vector<1x96xf32> to vector<16x96xf32>
    %32 = arith.addf %28, %31 : vector<16x96xf32>
    %c0_18 = arith.constant 0 : index
    %c0_19 = arith.constant 0 : index
    %33 = vector.load %arg24[%c0_18, %c0_19] : memref<16x96xf32, #tpu.memory_space<vmem>>, vector<16x96xf32>
    tpu.vector_store %arg24[%c0_18, %c0_19], %32 {strides = array<i32>} : memref<16x96xf32, #tpu.memory_space<vmem>>, vector<16x96xf32>,
    %c0_20 = arith.constant 0 : index
    %c0_21 = arith.constant 0 : index
    %c0_22 = arith.constant 0 : index
    %34 = vector.load %arg6[%c0_20, %c0_21, %c0_22] : memref<2x32x32xf32, #tpu.memory_space<vmem>>, vector<1x32x32xf32>
    %35 = vector.shape_cast %34 : vector<1x32x32xf32> to vector<32x32xf32>
    %36 = vector.extract_strided_slice %25 {offsets = [0, 0], sizes = [1, 8], strides = [1, 1]} : vector<2x8xf32> to vector<1x8xf32>
    %c0_23 = arith.constant 0 : index
    %c0_24 = arith.constant 0 : index
    %37 = vector.load %arg24[%c0_23, %c0_24] : memref<16x96xf32, #tpu.memory_space<vmem>>, vector<8x16xf32>
    %c0_25 = arith.constant 0 : index
    %c32 = arith.constant 32 : index
    %38 = vector.load %arg24[%c0_25, %c32] : memref<16x96xf32, #tpu.memory_space<vmem>>, vector<8x16xf32>
    %c0_26 = arith.constant 0 : index
    %c64 = arith.constant 64 : index
    %39 = vector.load %arg24[%c0_26, %c64] : memref<16x96xf32, #tpu.memory_space<vmem>>, vector<8x16xf32>
    %cst_27 = arith.constant dense<0.000000e+00> : vector<8x8xf32>
    %40 = tpu.matmul %37, %38, %cst_27 {dimension_numbers = #tpu.dot_dimension_numbers<[1], [1], [0], [0], [0, 0, 1, 0], [], []>} : vector<8x16xf32>, vector<8x16xf32>, vector<8x8xf32> -> vector<8x8xf32>
    %cst_28 = arith.constant 2.500000e-01 : f32
    %41 = vector.broadcast %cst_28 : f32 to vector<8x8xf32>
    %42 = arith.mulf %40, %41 : vector<8x8xf32>
    %43 = vector.broadcast %36 : vector<1x8xf32> to vector<8x8xf32>
    %44 = arith.addf %42, %43 : vector<8x8xf32>
    %cst_29 = arith.constant dense<0xFF800000> : vector<8xf32>
    %45 = vector.multi_reduction <maximumf>, %44, %cst_29 [1] : vector<8x8xf32> to vector<8xf32>
    %46 = vector.shape_cast %45 : vector<8xf32> to vector<8x1xf32>
    %47 = vector.broadcast %46 : vector<8x1xf32> to vector<8x8xf32>
    %48 = arith.subf %44, %47 : vector<8x8xf32>
    %49 = math.exp %48 : vector<8x8xf32>
    %cst_30 = arith.constant dense<0.000000e+00> : vector<8xf32>
    %50 = vector.multi_reduction <add>, %49, %cst_30 [1] : vector<8x8xf32> to vector<8xf32>
    %51 = vector.shape_cast %50 : vector<8xf32> to vector<8x1xf32>
    %52 = tpu.reciprocal %51 {approx = true} : vector<8x1xf32> -> vector<8x1xf32>
    %53 = vector.broadcast %52 : vector<8x1xf32> to vector<8x8xf32>
    %54 = arith.mulf %49, %53 : vector<8x8xf32>
    %cst_31 = arith.constant dense<0.000000e+00> : vector<8x16xf32>
    %55 = tpu.matmul %54, %39, %cst_31 {dimension_numbers = #tpu.dot_dimension_numbers<[1], [0], [0], [1], [0, 0, 1, 1], [], []>} : vector<8x8xf32>, vector<8x16xf32>, vector<8x16xf32> -> vector<8x16xf32>
    %56 = vector.extract_strided_slice %35 {offsets = [0, 0], sizes = [16, 32], strides = [1, 1]} : vector<32x32xf32> to vector<16x32xf32>
    %cst_32 = arith.constant dense<0.000000e+00> : vector<8x32xf32>
    %57 = tpu.matmul %55, %56, %cst_32 {dimension_numbers = #tpu.dot_dimension_numbers<[1], [0], [0], [1], [0, 0, 1, 1], [], []>} : vector<8x16xf32>, vector<16x32xf32>, vector<8x32xf32> -> vector<8x32xf32>
    %c0_33 = arith.constant 0 : index
    %c16 = arith.constant 16 : index
    %58 = vector.load %arg24[%c0_33, %c16] : memref<16x96xf32, #tpu.memory_space<vmem>>, vector<8x16xf32>
    %c0_34 = arith.constant 0 : index
    %c48 = arith.constant 48 : index
    %59 = vector.load %arg24[%c0_34, %c48] : memref<16x96xf32, #tpu.memory_space<vmem>>, vector<8x16xf32>
    %c0_35 = arith.constant 0 : index
    %c80 = arith.constant 80 : index
    %60 = vector.load %arg24[%c0_35, %c80] : memref<16x96xf32, #tpu.memory_space<vmem>>, vector<8x16xf32>
    %cst_36 = arith.constant dense<0.000000e+00> : vector<8x8xf32>
    %61 = tpu.matmul %58, %59, %cst_36 {dimension_numbers = #tpu.dot_dimension_numbers<[1], [1], [0], [0], [0, 0, 1, 0], [], []>} : vector<8x16xf32>, vector<8x16xf32>, vector<8x8xf32> -> vector<8x8xf32>
    %cst_37 = arith.constant 2.500000e-01 : f32
    %62 = vector.broadcast %cst_37 : f32 to vector<8x8xf32>
    %63 = arith.mulf %61, %62 : vector<8x8xf32>
    %64 = vector.broadcast %36 : vector<1x8xf32> to vector<8x8xf32>
    %65 = arith.addf %63, %64 : vector<8x8xf32>
    %cst_38 = arith.constant dense<0xFF800000> : vector<8xf32>
    %66 = vector.multi_reduction <maximumf>, %65, %cst_38 [1] : vector<8x8xf32> to vector<8xf32>
    %67 = vector.shape_cast %66 : vector<8xf32> to vector<8x1xf32>
    %68 = vector.broadcast %67 : vector<8x1xf32> to vector<8x8xf32>
    %69 = arith.subf %65, %68 : vector<8x8xf32>
    %70 = math.exp %69 : vector<8x8xf32>
    %cst_39 = arith.constant dense<0.000000e+00> : vector<8xf32>
    %71 = vector.multi_reduction <add>, %70, %cst_39 [1] : vector<8x8xf32> to vector<8xf32>
    %72 = vector.shape_cast %71 : vector<8xf32> to vector<8x1xf32>
    %73 = tpu.reciprocal %72 {approx = true} : vector<8x1xf32> -> vector<8x1xf32>
    %74 = vector.broadcast %73 : vector<8x1xf32> to vector<8x8xf32>
    %75 = arith.mulf %70, %74 : vector<8x8xf32>
    %cst_40 = arith.constant dense<0.000000e+00> : vector<8x16xf32>
    %76 = tpu.matmul %75, %60, %cst_40 {dimension_numbers = #tpu.dot_dimension_numbers<[1], [0], [0], [1], [0, 0, 1, 1], [], []>} : vector<8x8xf32>, vector<8x16xf32>, vector<8x16xf32> -> vector<8x16xf32>
    %77 = vector.extract_strided_slice %35 {offsets = [16, 0], sizes = [16, 32], strides = [1, 1]} : vector<32x32xf32> to vector<16x32xf32>
    %cst_41 = arith.constant dense<0.000000e+00> : vector<8x32xf32>
    %78 = tpu.matmul %76, %77, %cst_41 {dimension_numbers = #tpu.dot_dimension_numbers<[1], [0], [0], [1], [0, 0, 1, 1], [], []>} : vector<8x16xf32>, vector<16x32xf32>, vector<8x32xf32> -> vector<8x32xf32>
    %79 = arith.addf %57, %78 : vector<8x32xf32>
    %c0_42 = arith.constant 0 : index
    %c0_43 = arith.constant 0 : index
    %80 = vector.load %arg25[%c0_42, %c0_43] : memref<16x32xf32, #tpu.memory_space<vmem>>, vector<8x32xf32>
    tpu.vector_store %arg25[%c0_42, %c0_43], %79 {strides = array<i32>} : memref<16x32xf32, #tpu.memory_space<vmem>>, vector<8x32xf32>,
    %81 = vector.extract_strided_slice %25 {offsets = [1, 0], sizes = [1, 8], strides = [1, 1]} : vector<2x8xf32> to vector<1x8xf32>
    %c8 = arith.constant 8 : index
    %c0_44 = arith.constant 0 : index
    %82 = vector.load %arg24[%c8, %c0_44] : memref<16x96xf32, #tpu.memory_space<vmem>>, vector<8x16xf32>
    %c8_45 = arith.constant 8 : index
    %c32_46 = arith.constant 32 : index
    %83 = vector.load %arg24[%c8_45, %c32_46] : memref<16x96xf32, #tpu.memory_space<vmem>>, vector<8x16xf32>
    %c8_47 = arith.constant 8 : index
    %c64_48 = arith.constant 64 : index
    %84 = vector.load %arg24[%c8_47, %c64_48] : memref<16x96xf32, #tpu.memory_space<vmem>>, vector<8x16xf32>
    %cst_49 = arith.constant dense<0.000000e+00> : vector<8x8xf32>
    %85 = tpu.matmul %82, %83, %cst_49 {dimension_numbers = #tpu.dot_dimension_numbers<[1], [1], [0], [0], [0, 0, 1, 0], [], []>} : vector<8x16xf32>, vector<8x16xf32>, vector<8x8xf32> -> vector<8x8xf32>
    %cst_50 = arith.constant 2.500000e-01 : f32
    %86 = vector.broadcast %cst_50 : f32 to vector<8x8xf32>
    %87 = arith.mulf %85, %86 : vector<8x8xf32>
    %88 = vector.broadcast %81 : vector<1x8xf32> to vector<8x8xf32>
    %89 = arith.addf %87, %88 : vector<8x8xf32>
    %cst_51 = arith.constant dense<0xFF800000> : vector<8xf32>
    %90 = vector.multi_reduction <maximumf>, %89, %cst_51 [1] : vector<8x8xf32> to vector<8xf32>
    %91 = vector.shape_cast %90 : vector<8xf32> to vector<8x1xf32>
    %92 = vector.broadcast %91 : vector<8x1xf32> to vector<8x8xf32>
    %93 = arith.subf %89, %92 : vector<8x8xf32>
    %94 = math.exp %93 : vector<8x8xf32>
    %cst_52 = arith.constant dense<0.000000e+00> : vector<8xf32>
    %95 = vector.multi_reduction <add>, %94, %cst_52 [1] : vector<8x8xf32> to vector<8xf32>
    %96 = vector.shape_cast %95 : vector<8xf32> to vector<8x1xf32>
    %97 = tpu.reciprocal %96 {approx = true} : vector<8x1xf32> -> vector<8x1xf32>
    %98 = vector.broadcast %97 : vector<8x1xf32> to vector<8x8xf32>
    %99 = arith.mulf %94, %98 : vector<8x8xf32>
    %cst_53 = arith.constant dense<0.000000e+00> : vector<8x16xf32>
    %100 = tpu.matmul %99, %84, %cst_53 {dimension_numbers = #tpu.dot_dimension_numbers<[1], [0], [0], [1], [0, 0, 1, 1], [], []>} : vector<8x8xf32>, vector<8x16xf32>, vector<8x16xf32> -> vector<8x16xf32>
    %101 = vector.extract_strided_slice %35 {offsets = [0, 0], sizes = [16, 32], strides = [1, 1]} : vector<32x32xf32> to vector<16x32xf32>
    %cst_54 = arith.constant dense<0.000000e+00> : vector<8x32xf32>
    %102 = tpu.matmul %100, %101, %cst_54 {dimension_numbers = #tpu.dot_dimension_numbers<[1], [0], [0], [1], [0, 0, 1, 1], [], []>} : vector<8x16xf32>, vector<16x32xf32>, vector<8x32xf32> -> vector<8x32xf32>
    %c8_55 = arith.constant 8 : index
    %c16_56 = arith.constant 16 : index
    %103 = vector.load %arg24[%c8_55, %c16_56] : memref<16x96xf32, #tpu.memory_space<vmem>>, vector<8x16xf32>
    %c8_57 = arith.constant 8 : index
    %c48_58 = arith.constant 48 : index
    %104 = vector.load %arg24[%c8_57, %c48_58] : memref<16x96xf32, #tpu.memory_space<vmem>>, vector<8x16xf32>
    %c8_59 = arith.constant 8 : index
    %c80_60 = arith.constant 80 : index
    %105 = vector.load %arg24[%c8_59, %c80_60] : memref<16x96xf32, #tpu.memory_space<vmem>>, vector<8x16xf32>
    %cst_61 = arith.constant dense<0.000000e+00> : vector<8x8xf32>
    %106 = tpu.matmul %103, %104, %cst_61 {dimension_numbers = #tpu.dot_dimension_numbers<[1], [1], [0], [0], [0, 0, 1, 0], [], []>} : vector<8x16xf32>, vector<8x16xf32>, vector<8x8xf32> -> vector<8x8xf32>
    %cst_62 = arith.constant 2.500000e-01 : f32
    %107 = vector.broadcast %cst_62 : f32 to vector<8x8xf32>
    %108 = arith.mulf %106, %107 : vector<8x8xf32>
    %109 = vector.broadcast %81 : vector<1x8xf32> to vector<8x8xf32>
    %110 = arith.addf %108, %109 : vector<8x8xf32>
    %cst_63 = arith.constant dense<0xFF800000> : vector<8xf32>
    %111 = vector.multi_reduction <maximumf>, %110, %cst_63 [1] : vector<8x8xf32> to vector<8xf32>
    %112 = vector.shape_cast %111 : vector<8xf32> to vector<8x1xf32>
    %113 = vector.broadcast %112 : vector<8x1xf32> to vector<8x8xf32>
    %114 = arith.subf %110, %113 : vector<8x8xf32>
    %115 = math.exp %114 : vector<8x8xf32>
    %cst_64 = arith.constant dense<0.000000e+00> : vector<8xf32>
    %116 = vector.multi_reduction <add>, %115, %cst_64 [1] : vector<8x8xf32> to vector<8xf32>
    %117 = vector.shape_cast %116 : vector<8xf32> to vector<8x1xf32>
    %118 = tpu.reciprocal %117 {approx = true} : vector<8x1xf32> -> vector<8x1xf32>
    %119 = vector.broadcast %118 : vector<8x1xf32> to vector<8x8xf32>
    %120 = arith.mulf %115, %119 : vector<8x8xf32>
    %cst_65 = arith.constant dense<0.000000e+00> : vector<8x16xf32>
    %121 = tpu.matmul %120, %105, %cst_65 {dimension_numbers = #tpu.dot_dimension_numbers<[1], [0], [0], [1], [0, 0, 1, 1], [], []>} : vector<8x8xf32>, vector<8x16xf32>, vector<8x16xf32> -> vector<8x16xf32>
    %122 = vector.extract_strided_slice %35 {offsets = [16, 0], sizes = [16, 32], strides = [1, 1]} : vector<32x32xf32> to vector<16x32xf32>
    %cst_66 = arith.constant dense<0.000000e+00> : vector<8x32xf32>
    %123 = tpu.matmul %121, %122, %cst_66 {dimension_numbers = #tpu.dot_dimension_numbers<[1], [0], [0], [1], [0, 0, 1, 1], [], []>} : vector<8x16xf32>, vector<16x32xf32>, vector<8x32xf32> -> vector<8x32xf32>
    %124 = arith.addf %102, %123 : vector<8x32xf32>
    %c8_67 = arith.constant 8 : index
    %c0_68 = arith.constant 0 : index
    %125 = vector.load %arg25[%c8_67, %c0_68] : memref<16x32xf32, #tpu.memory_space<vmem>>, vector<8x32xf32>
    tpu.vector_store %arg25[%c8_67, %c0_68], %124 {strides = array<i32>} : memref<16x32xf32, #tpu.memory_space<vmem>>, vector<8x32xf32>,
    %c0_69 = arith.constant 0 : index
    %c0_70 = arith.constant 0 : index
    %126 = vector.load %arg25[%c0_69, %c0_70] : memref<16x32xf32, #tpu.memory_space<vmem>>, vector<16x32xf32>
    %c0_71 = arith.constant 0 : index
    %c0_72 = arith.constant 0 : index
    %c0_73 = arith.constant 0 : index
    %127 = vector.load %arg7[%c0_71, %c0_72, %c0_73] : memref<2x1x32xf32, #tpu.memory_space<vmem>>, vector<1x1x32xf32>
    %128 = vector.shape_cast %127 : vector<1x1x32xf32> to vector<1x32xf32>
    %129 = vector.broadcast %128 : vector<1x32xf32> to vector<16x32xf32>
    %130 = arith.addf %126, %129 : vector<16x32xf32>
    %131 = arith.addf %130, %24 : vector<16x32xf32>
    %c0_74 = arith.constant 0 : index
    %c0_75 = arith.constant 0 : index
    %c0_76 = arith.constant 0 : index
    %132 = vector.load %arg8[%c0_74, %c0_75, %c0_76] : memref<2x1x32xf32, #tpu.memory_space<vmem>>, vector<1x1x32xf32>
    %133 = vector.shape_cast %132 : vector<1x1x32xf32> to vector<1x32xf32>
    %c0_77 = arith.constant 0 : index
    %c0_78 = arith.constant 0 : index
    %c0_79 = arith.constant 0 : index
    %134 = vector.load %arg9[%c0_77, %c0_78, %c0_79] : memref<2x1x32xf32, #tpu.memory_space<vmem>>, vector<1x1x32xf32>
    %135 = vector.shape_cast %134 : vector<1x1x32xf32> to vector<1x32xf32>
    %cst_80 = arith.constant dense<0.000000e+00> : vector<16xf32>
    %136 = vector.multi_reduction <add>, %131, %cst_80 [1] : vector<16x32xf32> to vector<16xf32>
    %137 = vector.shape_cast %136 : vector<16xf32> to vector<16x1xf32>
    %cst_81 = arith.constant 3.200000e+01 : f32
    %138 = vector.broadcast %cst_81 : f32 to vector<16x1xf32>
    %139 = arith.divf %137, %138 : vector<16x1xf32>
    %140 = vector.broadcast %139 : vector<16x1xf32> to vector<16x32xf32>
    %141 = arith.subf %131, %140 : vector<16x32xf32>
    %142 = arith.mulf %141, %141 : vector<16x32xf32>
    %cst_82 = arith.constant dense<0.000000e+00> : vector<16xf32>
    %143 = vector.multi_reduction <add>, %142, %cst_82 [1] : vector<16x32xf32> to vector<16xf32>
    %144 = vector.shape_cast %143 : vector<16xf32> to vector<16x1xf32>
    %cst_83 = arith.constant 3.200000e+01 : f32
    %145 = vector.broadcast %cst_83 : f32 to vector<16x1xf32>
    %146 = arith.divf %144, %145 : vector<16x1xf32>
    %147 = vector.broadcast %139 : vector<16x1xf32> to vector<16x32xf32>
    %148 = arith.subf %131, %147 : vector<16x32xf32>
    %cst_84 = arith.constant 9.99999996E-13 : f32
    %149 = vector.broadcast %cst_84 : f32 to vector<16x1xf32>
    %150 = arith.addf %146, %149 : vector<16x1xf32>
    %151 = math.rsqrt %150 : vector<16x1xf32>
    %152 = vector.broadcast %151 : vector<16x1xf32> to vector<16x32xf32>
    %153 = arith.mulf %148, %152 : vector<16x32xf32>
    %154 = vector.broadcast %133 : vector<1x32xf32> to vector<16x32xf32>
    %155 = arith.mulf %153, %154 : vector<16x32xf32>
    %156 = vector.broadcast %135 : vector<1x32xf32> to vector<16x32xf32>
    %157 = arith.addf %155, %156 : vector<16x32xf32>
    %c0_85 = arith.constant 0 : index
    %c0_86 = arith.constant 0 : index
    %c0_87 = arith.constant 0 : index
    %158 = vector.load %arg10[%c0_85, %c0_86, %c0_87] : memref<2x32x64xf32, #tpu.memory_space<vmem>>, vector<1x32x64xf32>
    %159 = vector.shape_cast %158 : vector<1x32x64xf32> to vector<32x64xf32>
    %cst_88 = arith.constant dense<0.000000e+00> : vector<16x64xf32>
    %160 = tpu.matmul %157, %159, %cst_88 {dimension_numbers = #tpu.dot_dimension_numbers<[1], [0], [0], [1], [0, 0, 1, 1], [], []>} : vector<16x32xf32>, vector<32x64xf32>, vector<16x64xf32> -> vector<16x64xf32>
    %c0_89 = arith.constant 0 : index
    %c0_90 = arith.constant 0 : index
    %c0_91 = arith.constant 0 : index
    %161 = vector.load %arg11[%c0_89, %c0_90, %c0_91] : memref<2x1x64xf32, #tpu.memory_space<vmem>>, vector<1x1x64xf32>
    %162 = vector.shape_cast %161 : vector<1x1x64xf32> to vector<1x64xf32>
    %163 = vector.broadcast %162 : vector<1x64xf32> to vector<16x64xf32>
    %164 = arith.addf %160, %163 : vector<16x64xf32>
    %cst_92 = arith.constant 5.000000e-01 : f32
    %165 = vector.broadcast %cst_92 : f32 to vector<16x64xf32>
    %166 = arith.mulf %165, %164 : vector<16x64xf32>
    %cst_93 = arith.constant 4.471500e-02 : f32
    %167 = vector.broadcast %cst_93 : f32 to vector<16x64xf32>
    %168 = arith.mulf %167, %164 : vector<16x64xf32>
    %169 = arith.mulf %168, %164 : vector<16x64xf32>
    %170 = arith.mulf %169, %164 : vector<16x64xf32>
    %171 = arith.addf %164, %170 : vector<16x64xf32>
    %cst_94 = arith.constant 0.797884583 : f32
    %172 = vector.broadcast %cst_94 : f32 to vector<16x64xf32>
    %173 = arith.mulf %172, %171 : vector<16x64xf32>
    %174 = math.tanh %173 : vector<16x64xf32>
    %cst_95 = arith.constant 1.000000e+00 : f32
    %175 = vector.broadcast %cst_95 : f32 to vector<16x64xf32>
    %176 = arith.addf %175, %174 : vector<16x64xf32>
    %177 = arith.mulf %166, %176 : vector<16x64xf32>
    %c0_96 = arith.constant 0 : index
    %c0_97 = arith.constant 0 : index
    %c0_98 = arith.constant 0 : index
    %178 = vector.load %arg12[%c0_96, %c0_97, %c0_98] : memref<2x64x32xf32, #tpu.memory_space<vmem>>, vector<1x64x32xf32>
    %179 = vector.shape_cast %178 : vector<1x64x32xf32> to vector<64x32xf32>
    %cst_99 = arith.constant dense<0.000000e+00> : vector<16x32xf32>
    %180 = tpu.matmul %177, %179, %cst_99 {dimension_numbers = #tpu.dot_dimension_numbers<[1], [0], [0], [1], [0, 0, 1, 1], [], []>} : vector<16x64xf32>, vector<64x32xf32>, vector<16x32xf32> -> vector<16x32xf32>
    %c0_100 = arith.constant 0 : index
    %c0_101 = arith.constant 0 : index
    %c0_102 = arith.constant 0 : index
    %181 = vector.load %arg13[%c0_100, %c0_101, %c0_102] : memref<2x1x32xf32, #tpu.memory_space<vmem>>, vector<1x1x32xf32>
    %182 = vector.shape_cast %181 : vector<1x1x32xf32> to vector<1x32xf32>
    %183 = vector.broadcast %182 : vector<1x32xf32> to vector<16x32xf32>
    %184 = arith.addf %180, %183 : vector<16x32xf32>
    %185 = arith.addf %184, %157 : vector<16x32xf32>
    %c0_103 = arith.constant 0 : index
    %c0_104 = arith.constant 0 : index
    %c0_105 = arith.constant 0 : index
    %186 = vector.load %arg14[%c0_103, %c0_104, %c0_105] : memref<2x1x32xf32, #tpu.memory_space<vmem>>, vector<1x1x32xf32>
    %187 = vector.shape_cast %186 : vector<1x1x32xf32> to vector<1x32xf32>
    %c0_106 = arith.constant 0 : index
    %c0_107 = arith.constant 0 : index
    %c0_108 = arith.constant 0 : index
    %188 = vector.load %arg15[%c0_106, %c0_107, %c0_108] : memref<2x1x32xf32, #tpu.memory_space<vmem>>, vector<1x1x32xf32>
    %189 = vector.shape_cast %188 : vector<1x1x32xf32> to vector<1x32xf32>
    %cst_109 = arith.constant dense<0.000000e+00> : vector<16xf32>
    %190 = vector.multi_reduction <add>, %185, %cst_109 [1] : vector<16x32xf32> to vector<16xf32>
    %191 = vector.shape_cast %190 : vector<16xf32> to vector<16x1xf32>
    %cst_110 = arith.constant 3.200000e+01 : f32
    %192 = vector.broadcast %cst_110 : f32 to vector<16x1xf32>
    %193 = arith.divf %191, %192 : vector<16x1xf32>
    %194 = vector.broadcast %193 : vector<16x1xf32> to vector<16x32xf32>
    %195 = arith.subf %185, %194 : vector<16x32xf32>
    %196 = arith.mulf %195, %195 : vector<16x32xf32>
    %cst_111 = arith.constant dense<0.000000e+00> : vector<16xf32>
    %197 = vector.multi_reduction <add>, %196, %cst_111 [1] : vector<16x32xf32> to vector<16xf32>
    %198 = vector.shape_cast %197 : vector<16xf32> to vector<16x1xf32>
    %cst_112 = arith.constant 3.200000e+01 : f32
    %199 = vector.broadcast %cst_112 : f32 to vector<16x1xf32>
    %200 = arith.divf %198, %199 : vector<16x1xf32>
    %201 = vector.broadcast %193 : vector<16x1xf32> to vector<16x32xf32>
    %202 = arith.subf %185, %201 : vector<16x32xf32>
    %cst_113 = arith.constant 9.99999996E-13 : f32
    %203 = vector.broadcast %cst_113 : f32 to vector<16x1xf32>
    %204 = arith.addf %200, %203 : vector<16x1xf32>
    %205 = math.rsqrt %204 : vector<16x1xf32>
    %206 = vector.broadcast %205 : vector<16x1xf32> to vector<16x32xf32>
    %207 = arith.mulf %202, %206 : vector<16x32xf32>
    %208 = vector.broadcast %187 : vector<1x32xf32> to vector<16x32xf32>
    %209 = arith.mulf %207, %208 : vector<16x32xf32>
    %210 = vector.broadcast %189 : vector<1x32xf32> to vector<16x32xf32>
    %211 = arith.addf %209, %210 : vector<16x32xf32>
    %c1 = arith.constant 1 : index
    %c0_114 = arith.constant 0 : index
    %c0_115 = arith.constant 0 : index
    %212 = vector.load %arg4[%c1, %c0_114, %c0_115] : memref<2x32x96xf32, #tpu.memory_space<vmem>>, vector<1x32x96xf32>
    %213 = vector.shape_cast %212 : vector<1x32x96xf32> to vector<32x96xf32>
    %cst_116 = arith.constant dense<0.000000e+00> : vector<16x96xf32>
    %214 = tpu.matmul %211, %213, %cst_116 {dimension_numbers = #tpu.dot_dimension_numbers<[1], [0], [0], [1], [0, 0, 1, 1], [], []>} : vector<16x32xf32>, vector<32x96xf32>, vector<16x96xf32> -> vector<16x96xf32>
    %c1_117 = arith.constant 1 : index
    %c0_118 = arith.constant 0 : index
    %c0_119 = arith.constant 0 : index
    %215 = vector.load %arg5[%c1_117, %c0_118, %c0_119] : memref<2x1x96xf32, #tpu.memory_space<vmem>>, vector<1x1x96xf32>
    %216 = vector.shape_cast %215 : vector<1x1x96xf32> to vector<1x96xf32>
    %217 = vector.broadcast %216 : vector<1x96xf32> to vector<16x96xf32>
    %218 = arith.addf %214, %217 : vector<16x96xf32>
    %c0_120 = arith.constant 0 : index
    %c0_121 = arith.constant 0 : index
    %219 = vector.load %arg24[%c0_120, %c0_121] : memref<16x96xf32, #tpu.memory_space<vmem>>, vector<16x96xf32>
    tpu.vector_store %arg24[%c0_120, %c0_121], %218 {strides = array<i32>} : memref<16x96xf32, #tpu.memory_space<vmem>>, vector<16x96xf32>,
    %c1_122 = arith.constant 1 : index
    %c0_123 = arith.constant 0 : index
    %c0_124 = arith.constant 0 : index
    %220 = vector.load %arg6[%c1_122, %c0_123, %c0_124] : memref<2x32x32xf32, #tpu.memory_space<vmem>>, vector<1x32x32xf32>
    %221 = vector.shape_cast %220 : vector<1x32x32xf32> to vector<32x32xf32>
    %222 = vector.extract_strided_slice %25 {offsets = [0, 0], sizes = [1, 8], strides = [1, 1]} : vector<2x8xf32> to vector<1x8xf32>
    %c0_125 = arith.constant 0 : index
    %c0_126 = arith.constant 0 : index
    %223 = vector.load %arg24[%c0_125, %c0_126] : memref<16x96xf32, #tpu.memory_space<vmem>>, vector<8x16xf32>
    %c0_127 = arith.constant 0 : index
    %c32_128 = arith.constant 32 : index
    %224 = vector.load %arg24[%c0_127, %c32_128] : memref<16x96xf32, #tpu.memory_space<vmem>>, vector<8x16xf32>
    %c0_129 = arith.constant 0 : index
    %c64_130 = arith.constant 64 : index
    %225 = vector.load %arg24[%c0_129, %c64_130] : memref<16x96xf32, #tpu.memory_space<vmem>>, vector<8x16xf32>
    %cst_131 = arith.constant dense<0.000000e+00> : vector<8x8xf32>
    %226 = tpu.matmul %223, %224, %cst_131 {dimension_numbers = #tpu.dot_dimension_numbers<[1], [1], [0], [0], [0, 0, 1, 0], [], []>} : vector<8x16xf32>, vector<8x16xf32>, vector<8x8xf32> -> vector<8x8xf32>
    %cst_132 = arith.constant 2.500000e-01 : f32
    %227 = vector.broadcast %cst_132 : f32 to vector<8x8xf32>
    %228 = arith.mulf %226, %227 : vector<8x8xf32>
    %229 = vector.broadcast %222 : vector<1x8xf32> to vector<8x8xf32>
    %230 = arith.addf %228, %229 : vector<8x8xf32>
    %cst_133 = arith.constant dense<0xFF800000> : vector<8xf32>
    %231 = vector.multi_reduction <maximumf>, %230, %cst_133 [1] : vector<8x8xf32> to vector<8xf32>
    %232 = vector.shape_cast %231 : vector<8xf32> to vector<8x1xf32>
    %233 = vector.broadcast %232 : vector<8x1xf32> to vector<8x8xf32>
    %234 = arith.subf %230, %233 : vector<8x8xf32>
    %235 = math.exp %234 : vector<8x8xf32>
    %cst_134 = arith.constant dense<0.000000e+00> : vector<8xf32>
    %236 = vector.multi_reduction <add>, %235, %cst_134 [1] : vector<8x8xf32> to vector<8xf32>
    %237 = vector.shape_cast %236 : vector<8xf32> to vector<8x1xf32>
    %238 = tpu.reciprocal %237 {approx = true} : vector<8x1xf32> -> vector<8x1xf32>
    %239 = vector.broadcast %238 : vector<8x1xf32> to vector<8x8xf32>
    %240 = arith.mulf %235, %239 : vector<8x8xf32>
    %cst_135 = arith.constant dense<0.000000e+00> : vector<8x16xf32>
    %241 = tpu.matmul %240, %225, %cst_135 {dimension_numbers = #tpu.dot_dimension_numbers<[1], [0], [0], [1], [0, 0, 1, 1], [], []>} : vector<8x8xf32>, vector<8x16xf32>, vector<8x16xf32> -> vector<8x16xf32>
    %242 = vector.extract_strided_slice %221 {offsets = [0, 0], sizes = [16, 32], strides = [1, 1]} : vector<32x32xf32> to vector<16x32xf32>
    %cst_136 = arith.constant dense<0.000000e+00> : vector<8x32xf32>
    %243 = tpu.matmul %241, %242, %cst_136 {dimension_numbers = #tpu.dot_dimension_numbers<[1], [0], [0], [1], [0, 0, 1, 1], [], []>} : vector<8x16xf32>, vector<16x32xf32>, vector<8x32xf32> -> vector<8x32xf32>
    %c0_137 = arith.constant 0 : index
    %c16_138 = arith.constant 16 : index
    %244 = vector.load %arg24[%c0_137, %c16_138] : memref<16x96xf32, #tpu.memory_space<vmem>>, vector<8x16xf32>
    %c0_139 = arith.constant 0 : index
    %c48_140 = arith.constant 48 : index
    %245 = vector.load %arg24[%c0_139, %c48_140] : memref<16x96xf32, #tpu.memory_space<vmem>>, vector<8x16xf32>
    %c0_141 = arith.constant 0 : index
    %c80_142 = arith.constant 80 : index
    %246 = vector.load %arg24[%c0_141, %c80_142] : memref<16x96xf32, #tpu.memory_space<vmem>>, vector<8x16xf32>
    %cst_143 = arith.constant dense<0.000000e+00> : vector<8x8xf32>
    %247 = tpu.matmul %244, %245, %cst_143 {dimension_numbers = #tpu.dot_dimension_numbers<[1], [1], [0], [0], [0, 0, 1, 0], [], []>} : vector<8x16xf32>, vector<8x16xf32>, vector<8x8xf32> -> vector<8x8xf32>
    %cst_144 = arith.constant 2.500000e-01 : f32
    %248 = vector.broadcast %cst_144 : f32 to vector<8x8xf32>
    %249 = arith.mulf %247, %248 : vector<8x8xf32>
    %250 = vector.broadcast %222 : vector<1x8xf32> to vector<8x8xf32>
    %251 = arith.addf %249, %250 : vector<8x8xf32>
    %cst_145 = arith.constant dense<0xFF800000> : vector<8xf32>
    %252 = vector.multi_reduction <maximumf>, %251, %cst_145 [1] : vector<8x8xf32> to vector<8xf32>
    %253 = vector.shape_cast %252 : vector<8xf32> to vector<8x1xf32>
    %254 = vector.broadcast %253 : vector<8x1xf32> to vector<8x8xf32>
    %255 = arith.subf %251, %254 : vector<8x8xf32>
    %256 = math.exp %255 : vector<8x8xf32>
    %cst_146 = arith.constant dense<0.000000e+00> : vector<8xf32>
    %257 = vector.multi_reduction <add>, %256, %cst_146 [1] : vector<8x8xf32> to vector<8xf32>
    %258 = vector.shape_cast %257 : vector<8xf32> to vector<8x1xf32>
    %259 = tpu.reciprocal %258 {approx = true} : vector<8x1xf32> -> vector<8x1xf32>
    %260 = vector.broadcast %259 : vector<8x1xf32> to vector<8x8xf32>
    %261 = arith.mulf %256, %260 : vector<8x8xf32>
    %cst_147 = arith.constant dense<0.000000e+00> : vector<8x16xf32>
    %262 = tpu.matmul %261, %246, %cst_147 {dimension_numbers = #tpu.dot_dimension_numbers<[1], [0], [0], [1], [0, 0, 1, 1], [], []>} : vector<8x8xf32>, vector<8x16xf32>, vector<8x16xf32> -> vector<8x16xf32>
    %263 = vector.extract_strided_slice %221 {offsets = [16, 0], sizes = [16, 32], strides = [1, 1]} : vector<32x32xf32> to vector<16x32xf32>
    %cst_148 = arith.constant dense<0.000000e+00> : vector<8x32xf32>
    %264 = tpu.matmul %262, %263, %cst_148 {dimension_numbers = #tpu.dot_dimension_numbers<[1], [0], [0], [1], [0, 0, 1, 1], [], []>} : vector<8x16xf32>, vector<16x32xf32>, vector<8x32xf32> -> vector<8x32xf32>
    %265 = arith.addf %243, %264 : vector<8x32xf32>
    %c0_149 = arith.constant 0 : index
    %c0_150 = arith.constant 0 : index
    %266 = vector.load %arg25[%c0_149, %c0_150] : memref<16x32xf32, #tpu.memory_space<vmem>>, vector<8x32xf32>
    tpu.vector_store %arg25[%c0_149, %c0_150], %265 {strides = array<i32>} : memref<16x32xf32, #tpu.memory_space<vmem>>, vector<8x32xf32>,
    %267 = vector.extract_strided_slice %25 {offsets = [1, 0], sizes = [1, 8], strides = [1, 1]} : vector<2x8xf32> to vector<1x8xf32>
    %c8_151 = arith.constant 8 : index
    %c0_152 = arith.constant 0 : index
    %268 = vector.load %arg24[%c8_151, %c0_152] : memref<16x96xf32, #tpu.memory_space<vmem>>, vector<8x16xf32>
    %c8_153 = arith.constant 8 : index
    %c32_154 = arith.constant 32 : index
    %269 = vector.load %arg24[%c8_153, %c32_154] : memref<16x96xf32, #tpu.memory_space<vmem>>, vector<8x16xf32>
    %c8_155 = arith.constant 8 : index
    %c64_156 = arith.constant 64 : index
    %270 = vector.load %arg24[%c8_155, %c64_156] : memref<16x96xf32, #tpu.memory_space<vmem>>, vector<8x16xf32>
    %cst_157 = arith.constant dense<0.000000e+00> : vector<8x8xf32>
    %271 = tpu.matmul %268, %269, %cst_157 {dimension_numbers = #tpu.dot_dimension_numbers<[1], [1], [0], [0], [0, 0, 1, 0], [], []>} : vector<8x16xf32>, vector<8x16xf32>, vector<8x8xf32> -> vector<8x8xf32>
    %cst_158 = arith.constant 2.500000e-01 : f32
    %272 = vector.broadcast %cst_158 : f32 to vector<8x8xf32>
    %273 = arith.mulf %271, %272 : vector<8x8xf32>
    %274 = vector.broadcast %267 : vector<1x8xf32> to vector<8x8xf32>
    %275 = arith.addf %273, %274 : vector<8x8xf32>
    %cst_159 = arith.constant dense<0xFF800000> : vector<8xf32>
    %276 = vector.multi_reduction <maximumf>, %275, %cst_159 [1] : vector<8x8xf32> to vector<8xf32>
    %277 = vector.shape_cast %276 : vector<8xf32> to vector<8x1xf32>
    %278 = vector.broadcast %277 : vector<8x1xf32> to vector<8x8xf32>
    %279 = arith.subf %275, %278 : vector<8x8xf32>
    %280 = math.exp %279 : vector<8x8xf32>
    %cst_160 = arith.constant dense<0.000000e+00> : vector<8xf32>
    %281 = vector.multi_reduction <add>, %280, %cst_160 [1] : vector<8x8xf32> to vector<8xf32>
    %282 = vector.shape_cast %281 : vector<8xf32> to vector<8x1xf32>
    %283 = tpu.reciprocal %282 {approx = true} : vector<8x1xf32> -> vector<8x1xf32>
    %284 = vector.broadcast %283 : vector<8x1xf32> to vector<8x8xf32>
    %285 = arith.mulf %280, %284 : vector<8x8xf32>
    %cst_161 = arith.constant dense<0.000000e+00> : vector<8x16xf32>
    %286 = tpu.matmul %285, %270, %cst_161 {dimension_numbers = #tpu.dot_dimension_numbers<[1], [0], [0], [1], [0, 0, 1, 1], [], []>} : vector<8x8xf32>, vector<8x16xf32>, vector<8x16xf32> -> vector<8x16xf32>
    %287 = vector.extract_strided_slice %221 {offsets = [0, 0], sizes = [16, 32], strides = [1, 1]} : vector<32x32xf32> to vector<16x32xf32>
    %cst_162 = arith.constant dense<0.000000e+00> : vector<8x32xf32>
    %288 = tpu.matmul %286, %287, %cst_162 {dimension_numbers = #tpu.dot_dimension_numbers<[1], [0], [0], [1], [0, 0, 1, 1], [], []>} : vector<8x16xf32>, vector<16x32xf32>, vector<8x32xf32> -> vector<8x32xf32>
    %c8_163 = arith.constant 8 : index
    %c16_164 = arith.constant 16 : index
    %289 = vector.load %arg24[%c8_163, %c16_164] : memref<16x96xf32, #tpu.memory_space<vmem>>, vector<8x16xf32>
    %c8_165 = arith.constant 8 : index
    %c48_166 = arith.constant 48 : index
    %290 = vector.load %arg24[%c8_165, %c48_166] : memref<16x96xf32, #tpu.memory_space<vmem>>, vector<8x16xf32>
    %c8_167 = arith.constant 8 : index
    %c80_168 = arith.constant 80 : index
    %291 = vector.load %arg24[%c8_167, %c80_168] : memref<16x96xf32, #tpu.memory_space<vmem>>, vector<8x16xf32>
    %cst_169 = arith.constant dense<0.000000e+00> : vector<8x8xf32>
    %292 = tpu.matmul %289, %290, %cst_169 {dimension_numbers = #tpu.dot_dimension_numbers<[1], [1], [0], [0], [0, 0, 1, 0], [], []>} : vector<8x16xf32>, vector<8x16xf32>, vector<8x8xf32> -> vector<8x8xf32>
    %cst_170 = arith.constant 2.500000e-01 : f32
    %293 = vector.broadcast %cst_170 : f32 to vector<8x8xf32>
    %294 = arith.mulf %292, %293 : vector<8x8xf32>
    %295 = vector.broadcast %267 : vector<1x8xf32> to vector<8x8xf32>
    %296 = arith.addf %294, %295 : vector<8x8xf32>
    %cst_171 = arith.constant dense<0xFF800000> : vector<8xf32>
    %297 = vector.multi_reduction <maximumf>, %296, %cst_171 [1] : vector<8x8xf32> to vector<8xf32>
    %298 = vector.shape_cast %297 : vector<8xf32> to vector<8x1xf32>
    %299 = vector.broadcast %298 : vector<8x1xf32> to vector<8x8xf32>
    %300 = arith.subf %296, %299 : vector<8x8xf32>
    %301 = math.exp %300 : vector<8x8xf32>
    %cst_172 = arith.constant dense<0.000000e+00> : vector<8xf32>
    %302 = vector.multi_reduction <add>, %301, %cst_172 [1] : vector<8x8xf32> to vector<8xf32>
    %303 = vector.shape_cast %302 : vector<8xf32> to vector<8x1xf32>
    %304 = tpu.reciprocal %303 {approx = true} : vector<8x1xf32> -> vector<8x1xf32>
    %305 = vector.broadcast %304 : vector<8x1xf32> to vector<8x8xf32>
    %306 = arith.mulf %301, %305 : vector<8x8xf32>
    %cst_173 = arith.constant dense<0.000000e+00> : vector<8x16xf32>
    %307 = tpu.matmul %306, %291, %cst_173 {dimension_numbers = #tpu.dot_dimension_numbers<[1], [0], [0], [1], [0, 0, 1, 1], [], []>} : vector<8x8xf32>, vector<8x16xf32>, vector<8x16xf32> -> vector<8x16xf32>
    %308 = vector.extract_strided_slice %221 {offsets = [16, 0], sizes = [16, 32], strides = [1, 1]} : vector<32x32xf32> to vector<16x32xf32>
    %cst_174 = arith.constant dense<0.000000e+00> : vector<8x32xf32>
    %309 = tpu.matmul %307, %308, %cst_174 {dimension_numbers = #tpu.dot_dimension_numbers<[1], [0], [0], [1], [0, 0, 1, 1], [], []>} : vector<8x16xf32>, vector<16x32xf32>, vector<8x32xf32> -> vector<8x32xf32>
    %310 = arith.addf %288, %309 : vector<8x32xf32>
    %c8_175 = arith.constant 8 : index
    %c0_176 = arith.constant 0 : index
    %311 = vector.load %arg25[%c8_175, %c0_176] : memref<16x32xf32, #tpu.memory_space<vmem>>, vector<8x32xf32>
    tpu.vector_store %arg25[%c8_175, %c0_176], %310 {strides = array<i32>} : memref<16x32xf32, #tpu.memory_space<vmem>>, vector<8x32xf32>,
    %c0_177 = arith.constant 0 : index
    %c0_178 = arith.constant 0 : index
    %312 = vector.load %arg25[%c0_177, %c0_178] : memref<16x32xf32, #tpu.memory_space<vmem>>, vector<16x32xf32>
    %c1_179 = arith.constant 1 : index
    %c0_180 = arith.constant 0 : index
    %c0_181 = arith.constant 0 : index
    %313 = vector.load %arg7[%c1_179, %c0_180, %c0_181] : memref<2x1x32xf32, #tpu.memory_space<vmem>>, vector<1x1x32xf32>
    %314 = vector.shape_cast %313 : vector<1x1x32xf32> to vector<1x32xf32>
    %315 = vector.broadcast %314 : vector<1x32xf32> to vector<16x32xf32>
    %316 = arith.addf %312, %315 : vector<16x32xf32>
    %317 = arith.addf %316, %211 : vector<16x32xf32>
    %c1_182 = arith.constant 1 : index
    %c0_183 = arith.constant 0 : index
    %c0_184 = arith.constant 0 : index
    %318 = vector.load %arg8[%c1_182, %c0_183, %c0_184] : memref<2x1x32xf32, #tpu.memory_space<vmem>>, vector<1x1x32xf32>
    %319 = vector.shape_cast %318 : vector<1x1x32xf32> to vector<1x32xf32>
    %c1_185 = arith.constant 1 : index
    %c0_186 = arith.constant 0 : index
    %c0_187 = arith.constant 0 : index
    %320 = vector.load %arg9[%c1_185, %c0_186, %c0_187] : memref<2x1x32xf32, #tpu.memory_space<vmem>>, vector<1x1x32xf32>
    %321 = vector.shape_cast %320 : vector<1x1x32xf32> to vector<1x32xf32>
    %cst_188 = arith.constant dense<0.000000e+00> : vector<16xf32>
    %322 = vector.multi_reduction <add>, %317, %cst_188 [1] : vector<16x32xf32> to vector<16xf32>
    %323 = vector.shape_cast %322 : vector<16xf32> to vector<16x1xf32>
    %cst_189 = arith.constant 3.200000e+01 : f32
    %324 = vector.broadcast %cst_189 : f32 to vector<16x1xf32>
    %325 = arith.divf %323, %324 : vector<16x1xf32>
    %326 = vector.broadcast %325 : vector<16x1xf32> to vector<16x32xf32>
    %327 = arith.subf %317, %326 : vector<16x32xf32>
    %328 = arith.mulf %327, %327 : vector<16x32xf32>
    %cst_190 = arith.constant dense<0.000000e+00> : vector<16xf32>
    %329 = vector.multi_reduction <add>, %328, %cst_190 [1] : vector<16x32xf32> to vector<16xf32>
    %330 = vector.shape_cast %329 : vector<16xf32> to vector<16x1xf32>
    %cst_191 = arith.constant 3.200000e+01 : f32
    %331 = vector.broadcast %cst_191 : f32 to vector<16x1xf32>
    %332 = arith.divf %330, %331 : vector<16x1xf32>
    %333 = vector.broadcast %325 : vector<16x1xf32> to vector<16x32xf32>
    %334 = arith.subf %317, %333 : vector<16x32xf32>
    %cst_192 = arith.constant 9.99999996E-13 : f32
    %335 = vector.broadcast %cst_192 : f32 to vector<16x1xf32>
    %336 = arith.addf %332, %335 : vector<16x1xf32>
    %337 = math.rsqrt %336 : vector<16x1xf32>
    %338 = vector.broadcast %337 : vector<16x1xf32> to vector<16x32xf32>
    %339 = arith.mulf %334, %338 : vector<16x32xf32>
    %340 = vector.broadcast %319 : vector<1x32xf32> to vector<16x32xf32>
    %341 = arith.mulf %339, %340 : vector<16x32xf32>
    %342 = vector.broadcast %321 : vector<1x32xf32> to vector<16x32xf32>
    %343 = arith.addf %341, %342 : vector<16x32xf32>
    %c1_193 = arith.constant 1 : index
    %c0_194 = arith.constant 0 : index
    %c0_195 = arith.constant 0 : index
    %344 = vector.load %arg10[%c1_193, %c0_194, %c0_195] : memref<2x32x64xf32, #tpu.memory_space<vmem>>, vector<1x32x64xf32>
    %345 = vector.shape_cast %344 : vector<1x32x64xf32> to vector<32x64xf32>
    %cst_196 = arith.constant dense<0.000000e+00> : vector<16x64xf32>
    %346 = tpu.matmul %343, %345, %cst_196 {dimension_numbers = #tpu.dot_dimension_numbers<[1], [0], [0], [1], [0, 0, 1, 1], [], []>} : vector<16x32xf32>, vector<32x64xf32>, vector<16x64xf32> -> vector<16x64xf32>
    %c1_197 = arith.constant 1 : index
    %c0_198 = arith.constant 0 : index
    %c0_199 = arith.constant 0 : index
    %347 = vector.load %arg11[%c1_197, %c0_198, %c0_199] : memref<2x1x64xf32, #tpu.memory_space<vmem>>, vector<1x1x64xf32>
    %348 = vector.shape_cast %347 : vector<1x1x64xf32> to vector<1x64xf32>
    %349 = vector.broadcast %348 : vector<1x64xf32> to vector<16x64xf32>
    %350 = arith.addf %346, %349 : vector<16x64xf32>
    %cst_200 = arith.constant 5.000000e-01 : f32
    %351 = vector.broadcast %cst_200 : f32 to vector<16x64xf32>
    %352 = arith.mulf %351, %350 : vector<16x64xf32>
    %cst_201 = arith.constant 4.471500e-02 : f32
    %353 = vector.broadcast %cst_201 : f32 to vector<16x64xf32>
    %354 = arith.mulf %353, %350 : vector<16x64xf32>
    %355 = arith.mulf %354, %350 : vector<16x64xf32>
    %356 = arith.mulf %355, %350 : vector<16x64xf32>
    %357 = arith.addf %350, %356 : vector<16x64xf32>
    %cst_202 = arith.constant 0.797884583 : f32
    %358 = vector.broadcast %cst_202 : f32 to vector<16x64xf32>
    %359 = arith.mulf %358, %357 : vector<16x64xf32>
    %360 = math.tanh %359 : vector<16x64xf32>
    %cst_203 = arith.constant 1.000000e+00 : f32
    %361 = vector.broadcast %cst_203 : f32 to vector<16x64xf32>
    %362 = arith.addf %361, %360 : vector<16x64xf32>
    %363 = arith.mulf %352, %362 : vector<16x64xf32>
    %c1_204 = arith.constant 1 : index
    %c0_205 = arith.constant 0 : index
    %c0_206 = arith.constant 0 : index
    %364 = vector.load %arg12[%c1_204, %c0_205, %c0_206] : memref<2x64x32xf32, #tpu.memory_space<vmem>>, vector<1x64x32xf32>
    %365 = vector.shape_cast %364 : vector<1x64x32xf32> to vector<64x32xf32>
    %cst_207 = arith.constant dense<0.000000e+00> : vector<16x32xf32>
    %366 = tpu.matmul %363, %365, %cst_207 {dimension_numbers = #tpu.dot_dimension_numbers<[1], [0], [0], [1], [0, 0, 1, 1], [], []>} : vector<16x64xf32>, vector<64x32xf32>, vector<16x32xf32> -> vector<16x32xf32>
    %c1_208 = arith.constant 1 : index
    %c0_209 = arith.constant 0 : index
    %c0_210 = arith.constant 0 : index
    %367 = vector.load %arg13[%c1_208, %c0_209, %c0_210] : memref<2x1x32xf32, #tpu.memory_space<vmem>>, vector<1x1x32xf32>
    %368 = vector.shape_cast %367 : vector<1x1x32xf32> to vector<1x32xf32>
    %369 = vector.broadcast %368 : vector<1x32xf32> to vector<16x32xf32>
    %370 = arith.addf %366, %369 : vector<16x32xf32>
    %371 = arith.addf %370, %343 : vector<16x32xf32>
    %c1_211 = arith.constant 1 : index
    %c0_212 = arith.constant 0 : index
    %c0_213 = arith.constant 0 : index
    %372 = vector.load %arg14[%c1_211, %c0_212, %c0_213] : memref<2x1x32xf32, #tpu.memory_space<vmem>>, vector<1x1x32xf32>
    %373 = vector.shape_cast %372 : vector<1x1x32xf32> to vector<1x32xf32>
    %c1_214 = arith.constant 1 : index
    %c0_215 = arith.constant 0 : index
    %c0_216 = arith.constant 0 : index
    %374 = vector.load %arg15[%c1_214, %c0_215, %c0_216] : memref<2x1x32xf32, #tpu.memory_space<vmem>>, vector<1x1x32xf32>
    %375 = vector.shape_cast %374 : vector<1x1x32xf32> to vector<1x32xf32>
    %cst_217 = arith.constant dense<0.000000e+00> : vector<16xf32>
    %376 = vector.multi_reduction <add>, %371, %cst_217 [1] : vector<16x32xf32> to vector<16xf32>
    %377 = vector.shape_cast %376 : vector<16xf32> to vector<16x1xf32>
    %cst_218 = arith.constant 3.200000e+01 : f32
    %378 = vector.broadcast %cst_218 : f32 to vector<16x1xf32>
    %379 = arith.divf %377, %378 : vector<16x1xf32>
    %380 = vector.broadcast %379 : vector<16x1xf32> to vector<16x32xf32>
    %381 = arith.subf %371, %380 : vector<16x32xf32>
    %382 = arith.mulf %381, %381 : vector<16x32xf32>
    %cst_219 = arith.constant dense<0.000000e+00> : vector<16xf32>
    %383 = vector.multi_reduction <add>, %382, %cst_219 [1] : vector<16x32xf32> to vector<16xf32>
    %384 = vector.shape_cast %383 : vector<16xf32> to vector<16x1xf32>
    %cst_220 = arith.constant 3.200000e+01 : f32
    %385 = vector.broadcast %cst_220 : f32 to vector<16x1xf32>
    %386 = arith.divf %384, %385 : vector<16x1xf32>
    %387 = vector.broadcast %379 : vector<16x1xf32> to vector<16x32xf32>
    %388 = arith.subf %371, %387 : vector<16x32xf32>
    %cst_221 = arith.constant 9.99999996E-13 : f32
    %389 = vector.broadcast %cst_221 : f32 to vector<16x1xf32>
    %390 = arith.addf %386, %389 : vector<16x1xf32>
    %391 = math.rsqrt %390 : vector<16x1xf32>
    %392 = vector.broadcast %391 : vector<16x1xf32> to vector<16x32xf32>
    %393 = arith.mulf %388, %392 : vector<16x32xf32>
    %394 = vector.broadcast %373 : vector<1x32xf32> to vector<16x32xf32>
    %395 = arith.mulf %393, %394 : vector<16x32xf32>
    %396 = vector.broadcast %375 : vector<1x32xf32> to vector<16x32xf32>
    %397 = arith.addf %395, %396 : vector<16x32xf32>
    %398 = vector.extract_strided_slice %397 {offsets = [0, 0], sizes = [1, 32], strides = [1, 1]} : vector<16x32xf32> to vector<1x32xf32>
    %c0_222 = arith.constant 0 : index
    %c0_223 = arith.constant 0 : index
    %399 = vector.load %arg26[%c0_222, %c0_223] : memref<2x32xf32, #tpu.memory_space<vmem>>, vector<1x32xf32>
    tpu.vector_store %arg26[%c0_222, %c0_223], %398 {strides = array<i32>} : memref<2x32xf32, #tpu.memory_space<vmem>>, vector<1x32xf32>,
    %400 = vector.extract_strided_slice %397 {offsets = [8, 0], sizes = [1, 32], strides = [1, 1]} : vector<16x32xf32> to vector<1x32xf32>
    %c1_224 = arith.constant 1 : index
    %c0_225 = arith.constant 0 : index
    %401 = vector.load %arg26[%c1_224, %c0_225] : memref<2x32xf32, #tpu.memory_space<vmem>>, vector<1x32xf32>
    tpu.vector_store %arg26[%c1_224, %c0_225], %400 {strides = array<i32>} : memref<2x32xf32, #tpu.memory_space<vmem>>, vector<1x32xf32>,
    %c0_226 = arith.constant 0 : index
    %c0_227 = arith.constant 0 : index
    %402 = vector.load %arg26[%c0_226, %c0_227] : memref<2x32xf32, #tpu.memory_space<vmem>>, vector<2x32xf32>
    %c0_228 = arith.constant 0 : index
    %c0_229 = arith.constant 0 : index
    %403 = vector.load %arg16[%c0_228, %c0_229] : memref<32x32xf32, #tpu.memory_space<vmem>>, vector<32x32xf32>
    %cst_230 = arith.constant dense<0.000000e+00> : vector<2x32xf32>
    %404 = tpu.matmul %402, %403, %cst_230 {dimension_numbers = #tpu.dot_dimension_numbers<[1], [0], [0], [1], [0, 0, 1, 1], [], []>} : vector<2x32xf32>, vector<32x32xf32>, vector<2x32xf32> -> vector<2x32xf32>
    %c0_231 = arith.constant 0 : index
    %c0_232 = arith.constant 0 : index
    %405 = vector.load %arg17[%c0_231, %c0_232] : memref<1x32xf32, #tpu.memory_space<vmem>>, vector<1x32xf32>
    %406 = vector.broadcast %405 : vector<1x32xf32> to vector<2x32xf32>
    %407 = arith.addf %404, %406 : vector<2x32xf32>
    %408 = math.tanh %407 : vector<2x32xf32>
    %c0_233 = arith.constant 0 : index
    %c0_234 = arith.constant 0 : index
    %409 = vector.load %arg18[%c0_233, %c0_234] : memref<32x3xf32, #tpu.memory_space<vmem>>, vector<32x3xf32>
    %cst_235 = arith.constant dense<0.000000e+00> : vector<2x3xf32>
    %410 = tpu.matmul %408, %409, %cst_235 {dimension_numbers = #tpu.dot_dimension_numbers<[1], [0], [0], [1], [0, 0, 1, 1], [], []>} : vector<2x32xf32>, vector<32x3xf32>, vector<2x3xf32> -> vector<2x3xf32>
    %c0_236 = arith.constant 0 : index
    %c0_237 = arith.constant 0 : index
    %411 = vector.load %arg19[%c0_236, %c0_237] : memref<1x3xf32, #tpu.memory_space<vmem>>, vector<1x3xf32>
    %412 = vector.broadcast %411 : vector<1x3xf32> to vector<2x3xf32>
    %413 = arith.addf %410, %412 : vector<2x3xf32>
    %c0_238 = arith.constant 0 : index
    %c0_239 = arith.constant 0 : index
    %414 = vector.load %arg23[%c0_238, %c0_239] : memref<2x3xf32, #tpu.memory_space<vmem>>, vector<2x3xf32>
    tpu.vector_store %arg23[%c0_238, %c0_239], %413 {strides = array<i32>} : memref<2x3xf32, #tpu.memory_space<vmem>>, vector<2x3xf32>,
    %cst_240 = arith.constant dense<0xFF800000> : vector<2xf32>
    %415 = vector.multi_reduction <maximumf>, %413, %cst_240 [1] : vector<2x3xf32> to vector<2xf32>
    %416 = vector.shape_cast %415 : vector<2xf32> to vector<2x1xf32>
    %417 = vector.broadcast %416 : vector<2x1xf32> to vector<2x3xf32>
    %418 = arith.subf %413, %417 : vector<2x3xf32>
    %419 = math.exp %418 : vector<2x3xf32>
    %cst_241 = arith.constant dense<0.000000e+00> : vector<2xf32>
    %420 = vector.multi_reduction <add>, %419, %cst_241 [1] : vector<2x3xf32> to vector<2xf32>
    %421 = vector.shape_cast %420 : vector<2xf32> to vector<2x1xf32>
    %422 = math.log %421 : vector<2x1xf32>
    %423 = vector.broadcast %422 : vector<2x1xf32> to vector<2x3xf32>
    %424 = arith.subf %418, %423 : vector<2x3xf32>
    %425 = tpu.iota {dimensions = array<i32: 1>} : vector<2x3xi32>
    %c0_242 = arith.constant 0 : index
    %c0_243 = arith.constant 0 : index
    %426 = vector.load %arg20[%c0_242, %c0_243] : memref<2x1xi32, #tpu.memory_space<vmem>>, vector<2x1xi32>
    %427 = vector.broadcast %426 : vector<2x1xi32> to vector<2x3xi32>
    %428 = arith.cmpi eq, %425, %427 : vector<2x3xi32>
    %429 = arith.extui %428 : vector<2x3xi1> to vector<2x3xi32>
    %430 = arith.sitofp %429 : vector<2x3xi32> to vector<2x3xf32>
    %431 = arith.mulf %424, %430 : vector<2x3xf32>
    %cst_244 = arith.constant dense<0.000000e+00> : vector<2xf32>
    %432 = vector.multi_reduction <add>, %431, %cst_244 [1] : vector<2x3xf32> to vector<2xf32>
    %433 = vector.shape_cast %432 : vector<2xf32> to vector<2x1xf32>
    %cst_245 = arith.constant 0.000000e+00 : f32
    %434 = vector.broadcast %cst_245 : f32 to vector<2x1xf32>
    %435 = arith.subf %434, %433 : vector<2x1xf32>
    %c0_246 = arith.constant 0 : index
    %c0_247 = arith.constant 0 : index
    %436 = vector.load %arg21[%c0_246, %c0_247] : memref<2x1xf32, #tpu.memory_space<vmem>>, vector<2x1xf32>
    %cst_248 = arith.constant 0.000000e+00 : f32
    %437 = vector.broadcast %cst_248 : f32 to vector<2x1xf32>
    %438 = arith.addf %436, %437 : vector<2x1xf32>
    %cst_249 = arith.constant 2.000000e+00 : f32
    %439 = vector.broadcast %cst_249 : f32 to vector<2x1xf32>
    %440 = arith.mulf %438, %439 : vector<2x1xf32>
    %441 = arith.mulf %435, %440 : vector<2x1xf32>
    %442 = vector.shape_cast %441 : vector<2x1xf32> to vector<1x2x1xf32>
    %cst_250 = arith.constant dense<0.000000e+00> : vector<1xf32>
    %443 = vector.multi_reduction <add>, %442, %cst_250 [1, 2] : vector<1x2x1xf32> to vector<1xf32>
    %444 = vector.shape_cast %443 : vector<1xf32> to vector<1x1x1xf32>
    %445 = vector.extract %444[0, 0, 0] : f32 from vector<1x1x1xf32>
    %cst_251 = arith.constant 2.000000e+00 : f32
    %446 = arith.divf %445, %cst_251 : f32
    %447 = vector.broadcast %446 : f32 to vector<1x1xf32>
    %c0_252 = arith.constant 0 : index
    %c0_253 = arith.constant 0 : index
    %448 = vector.load %arg22[%c0_252, %c0_253] : memref<1x1xf32, #tpu.memory_space<vmem>>, vector<1x1xf32>
    tpu.vector_store %arg22[%c0_252, %c0_253], %447 {strides = array<i32>} : memref<1x1xf32, #tpu.memory_space<vmem>>, vector<1x1xf32>,
    return
  }
}

</mosaic_0001>

<llo_original>
// kernel: bert_with_emotion_forward.1
$region0: #{bert_with_emotion_forward.1}
  #allocation0 [shape = 'u32[]', space=smem, size = 0x4, offset = 0x4, fixed_abs, tag = 'smem constant byte address 0x4 - core index']
  #allocation1 [shape = 'u32[144,128]{1,0:T(1,128)}', space=vmem, size = 0x12000, scoped, tag = 'internal scratch']
  #allocation2 [shape = 'f32[16,96]{1,0:T(8,128)}', space=vmem, size = 0x2000, scoped, tag = 'scratch operand']
  #allocation3 [shape = 'f32[16,32]{1,0:T(8,128)}', space=vmem, size = 0x2000, scoped, tag = 'scratch operand']
  #allocation4 [shape = 'f32[2,32]{1,0:T(2,128)}', space=vmem, size = 0x400, scoped, tag = 'scratch operand']
  %s0 = inlined_call_operand.vmem [shape: f32[16,32], index: 0, kind: input, shape index: {}]
  %s1 = inlined_call_operand.vmem [shape: f32[2,8], index: 1, kind: input, shape index: {}]
  %s2 = inlined_call_operand.vmem [shape: f32[1,32], index: 2, kind: input, shape index: {}]
  %s3 = inlined_call_operand.vmem [shape: f32[1,32], index: 3, kind: input, shape index: {}]
  %s4 = inlined_call_operand.vmem [shape: f32[2,32,96], index: 4, kind: input, shape index: {}]
  %s5 = inlined_call_operand.vmem [shape: f32[2,1,96], index: 5, kind: input, shape index: {}]
  %s6 = inlined_call_operand.vmem [shape: f32[2,32,32], index: 6, kind: input, shape index: {}]
  %s7 = inlined_call_operand.vmem [shape: f32[2,1,32], index: 7, kind: input, shape index: {}]
  %s8 = inlined_call_operand.vmem [shape: f32[2,1,32], index: 8, kind: input, shape index: {}]
  %s9 = inlined_call_operand.vmem [shape: f32[2,1,32], index: 9, kind: input, shape index: {}]
  %s10 = inlined_call_operand.vmem [shape: f32[2,32,64], index: 10, kind: input, shape index: {}]
  %s11 = inlined_call_operand.vmem [shape: f32[2,1,64], index: 11, kind: input, shape index: {}]
  %s12 = inlined_call_operand.vmem [shape: f32[2,64,32], index: 12, kind: input, shape index: {}]
  %s13 = inlined_call_operand.vmem [shape: f32[2,1,32], index: 13, kind: input, shape index: {}]
  %s14 = inlined_call_operand.vmem [shape: f32[2,1,32], index: 14, kind: input, shape index: {}]
  %s15 = inlined_call_operand.vmem [shape: f32[2,1,32], index: 15, kind: input, shape index: {}]
  %s16 = inlined_call_operand.vmem [shape: f32[32,32], index: 16, kind: input, shape index: {}]
  %s17 = inlined_call_operand.vmem [shape: f32[1,32], index: 17, kind: input, shape index: {}]
  %s18 = inlined_call_operand.vmem [shape: f32[32,3], index: 18, kind: input, shape index: {}]
  %s19 = inlined_call_operand.vmem [shape: f32[1,3], index: 19, kind: input, shape index: {}]
  %s20 = inlined_call_operand.vmem [shape: s32[2,1], index: 20, kind: input, shape index: {}]
  %s21 = inlined_call_operand.vmem [shape: f32[2,1], index: 21, kind: input, shape index: {}]
  %s22 = inlined_call_operand.hbm [shape: f32[1,1], index: 22, kind: output, shape index: {0}]
  %s23 = inlined_call_operand.hbm [shape: f32[2,3], index: 23, kind: output, shape index: {1}]
  %24 = xla_tuple %s22, %s23
  %s25 = sld [smem:[#allocation0]]
  $region106: #{bert_with_emotion_forward.1} parent=0
    _
  %s27 = ssub.s32 1, %s25
  %s28 = scalar_select 0, %s27, %s25
  $region1: #{bert_with_emotion_forward.1} parent=0
    #allocation5 [shape = 'u8[512]{0}', space=vmem, size = 0x400, scoped, tag = 'output window, operand 0, single buffered']
    #allocation6 [shape = 's32[1]{0}', space=sflag, size = 0x4, scoped, tag = 'scoped memory for bert_with_emotion_forward.1']
    #allocation7 [shape = 'u8[1024]{0}', space=vmem, size = 0x400, scoped, tag = 'output window, operand 1, single buffered']
    #allocation8 [shape = 's32[1]{0}', space=sflag, size = 0x4, scoped, tag = 'scoped memory for bert_with_emotion_forward.1']
    %29 = vsyncpa [#allocation6], 0
    %30 = vsyncpa [#allocation8], 0
    // Predicated region
    $region2: #{bert_with_emotion_forward.1} parent=1 // pred_check
      _
    $region3: #{bert_with_emotion_forward.1} parent=1 // pred_check_branch
      %32 = sbr.rel (0) target = $region5
    $region4: #{bert_with_emotion_forward.1} parent=1 // pred_region
      _
    $region5: #{bert_with_emotion_forward.1} parent=1 // pred_fallthru
      _
    // Predicated region
    $region6: #{bert_with_emotion_forward.1} parent=1 // pred_check
      _
    $region7: #{bert_with_emotion_forward.1} parent=1 // pred_check_branch
      %34 = sbr.rel (0) target = $region9
    $region8: #{bert_with_emotion_forward.1} parent=1 // pred_region
      _
    $region9: #{bert_with_emotion_forward.1} parent=1 // pred_fallthru
      _
    // Predicated region
    $region10: #{bert_with_emotion_forward.1} parent=1 // pred_check
      _
    $region11: #{bert_with_emotion_forward.1} parent=1 // pred_check_branch
      %36 = sbr.rel (0) target = $region13
    $region12: #{bert_with_emotion_forward.1} parent=1 // pred_region
      _
    $region13: #{bert_with_emotion_forward.1} parent=1 // pred_fallthru
      _
    // Predicated region
    $region14: #{bert_with_emotion_forward.1} parent=1 // pred_check
      _
    $region15: #{bert_with_emotion_forward.1} parent=1 // pred_check_branch
      %38 = sbr.rel (0) target = $region17
    $region16: #{bert_with_emotion_forward.1} parent=1 // pred_region
      _
    $region17: #{bert_with_emotion_forward.1} parent=1 // pred_fallthru
      _
    // Predicated region
    $region18: #{bert_with_emotion_forward.1} parent=1 // pred_check
      _
    $region19: #{bert_with_emotion_forward.1} parent=1 // pred_check_branch
      %40 = sbr.rel (0) target = $region21
    $region20: #{bert_with_emotion_forward.1} parent=1 // pred_region
      _
    $region21: #{bert_with_emotion_forward.1} parent=1 // pred_fallthru
      _
    // Predicated region
    $region22: #{bert_with_emotion_forward.1} parent=1 // pred_check
      _
    $region23: #{bert_with_emotion_forward.1} parent=1 // pred_check_branch
      %42 = sbr.rel (0) target = $region25
    $region24: #{bert_with_emotion_forward.1} parent=1 // pred_region
      _
    $region25: #{bert_with_emotion_forward.1} parent=1 // pred_fallthru
      _
    // Predicated region
    $region26: #{bert_with_emotion_forward.1} parent=1 // pred_check
      _
    $region27: #{bert_with_emotion_forward.1} parent=1 // pred_check_branch
      %44 = sbr.rel (0) target = $region29
    $region28: #{bert_with_emotion_forward.1} parent=1 // pred_region
      _
    $region29: #{bert_with_emotion_forward.1} parent=1 // pred_fallthru
      _
    // Predicated region
    $region30: #{bert_with_emotion_forward.1} parent=1 // pred_check
      _
    $region31: #{bert_with_emotion_forward.1} parent=1 // pred_check_branch
      %46 = sbr.rel (0) target = $region33
    $region32: #{bert_with_emotion_forward.1} parent=1 // pred_region
      _
    $region33: #{bert_with_emotion_forward.1} parent=1 // pred_fallthru
      _
    // Predicated region
    $region34: #{bert_with_emotion_forward.1} parent=1 // pred_check
      _
    $region35: #{bert_with_emotion_forward.1} parent=1 // pred_check_branch
      %48 = sbr.rel (0) target = $region37
    $region36: #{bert_with_emotion_forward.1} parent=1 // pred_region
      _
    $region37: #{bert_with_emotion_forward.1} parent=1 // pred_fallthru
      _
    // Predicated region
    $region38: #{bert_with_emotion_forward.1} parent=1 // pred_check
      _
    $region39: #{bert_with_emotion_forward.1} parent=1 // pred_check_branch
      %50 = sbr.rel (0) target = $region41
    $region40: #{bert_with_emotion_forward.1} parent=1 // pred_region
      _
    $region41: #{bert_with_emotion_forward.1} parent=1 // pred_fallthru
      _
    // Predicated region
    $region42: #{bert_with_emotion_forward.1} parent=1 // pred_check
      _
    $region43: #{bert_with_emotion_forward.1} parent=1 // pred_check_branch
      %52 = sbr.rel (0) target = $region45
    $region44: #{bert_with_emotion_forward.1} parent=1 // pred_region
      _
    $region45: #{bert_with_emotion_forward.1} parent=1 // pred_fallthru
      _
    // Predicated region
    $region46: #{bert_with_emotion_forward.1} parent=1 // pred_check
      _
    $region47: #{bert_with_emotion_forward.1} parent=1 // pred_check_branch
      %54 = sbr.rel (0) target = $region49
    $region48: #{bert_with_emotion_forward.1} parent=1 // pred_region
      _
    $region49: #{bert_with_emotion_forward.1} parent=1 // pred_fallthru
      _
    // Predicated region
    $region50: #{bert_with_emotion_forward.1} parent=1 // pred_check
      _
    $region51: #{bert_with_emotion_forward.1} parent=1 // pred_check_branch
      %56 = sbr.rel (0) target = $region53
    $region52: #{bert_with_emotion_forward.1} parent=1 // pred_region
      _
    $region53: #{bert_with_emotion_forward.1} parent=1 // pred_fallthru
      _
    // Predicated region
    $region54: #{bert_with_emotion_forward.1} parent=1 // pred_check
      _
    $region55: #{bert_with_emotion_forward.1} parent=1 // pred_check_branch
      %58 = sbr.rel (0) target = $region57
    $region56: #{bert_with_emotion_forward.1} parent=1 // pred_region
      _
    $region57: #{bert_with_emotion_forward.1} parent=1 // pred_fallthru
      _
    // Predicated region
    $region58: #{bert_with_emotion_forward.1} parent=1 // pred_check
      _
    $region59: #{bert_with_emotion_forward.1} parent=1 // pred_check_branch
      %60 = sbr.rel (0) target = $region61
    $region60: #{bert_with_emotion_forward.1} parent=1 // pred_region
      _
    $region61: #{bert_with_emotion_forward.1} parent=1 // pred_fallthru
      _
    // Predicated region
    $region62: #{bert_with_emotion_forward.1} parent=1 // pred_check
      _
    $region63: #{bert_with_emotion_forward.1} parent=1 // pred_check_branch
      %62 = sbr.rel (0) target = $region65
    $region64: #{bert_with_emotion_forward.1} parent=1 // pred_region
      _
    $region65: #{bert_with_emotion_forward.1} parent=1 // pred_fallthru
      _
    // Predicated region
    $region66: #{bert_with_emotion_forward.1} parent=1 // pred_check
      _
    $region67: #{bert_with_emotion_forward.1} parent=1 // pred_check_branch
      %64 = sbr.rel (0) target = $region69
    $region68: #{bert_with_emotion_forward.1} parent=1 // pred_region
      _
    $region69: #{bert_with_emotion_forward.1} parent=1 // pred_fallthru
      _
    // Predicated region
    $region70: #{bert_with_emotion_forward.1} parent=1 // pred_check
      _
    $region71: #{bert_with_emotion_forward.1} parent=1 // pred_check_branch
      %66 = sbr.rel (0) target = $region73
    $region72: #{bert_with_emotion_forward.1} parent=1 // pred_region
      _
    $region73: #{bert_with_emotion_forward.1} parent=1 // pred_fallthru
      _
    // Predicated region
    $region74: #{bert_with_emotion_forward.1} parent=1 // pred_check
      _
    $region75: #{bert_with_emotion_forward.1} parent=1 // pred_check_branch
      %68 = sbr.rel (0) target = $region77
    $region76: #{bert_with_emotion_forward.1} parent=1 // pred_region
      _
    $region77: #{bert_with_emotion_forward.1} parent=1 // pred_fallthru
      _
    // Predicated region
    $region78: #{bert_with_emotion_forward.1} parent=1 // pred_check
      _
    $region79: #{bert_with_emotion_forward.1} parent=1 // pred_check_branch
      %70 = sbr.rel (0) target = $region81
    $region80: #{bert_with_emotion_forward.1} parent=1 // pred_region
      _
    $region81: #{bert_with_emotion_forward.1} parent=1 // pred_fallthru
      _
    // Predicated region
    $region82: #{bert_with_emotion_forward.1} parent=1 // pred_check
      _
    $region83: #{bert_with_emotion_forward.1} parent=1 // pred_check_branch
      %72 = sbr.rel (0) target = $region85
    $region84: #{bert_with_emotion_forward.1} parent=1 // pred_region
      _
    $region85: #{bert_with_emotion_forward.1} parent=1 // pred_fallthru
      _
    // Predicated region
    $region86: #{bert_with_emotion_forward.1} parent=1 // pred_check
      _
    $region87: #{bert_with_emotion_forward.1} parent=1 // pred_check_branch
      %74 = sbr.rel (0) target = $region89
    $region88: #{bert_with_emotion_forward.1} parent=1 // pred_region
      _
    $region89: #{bert_with_emotion_forward.1} parent=1 // pred_fallthru
      _
    %v75 = vld [vmem:[%s0] sm:$0xff]
    %v76 = vld [vmem:[%s0 + $0x8] sm:$0xff]
    %v77 = vld [vmem:[%s2] sm:$0x1]
    %v78 = vld [vmem:[%s3] sm:$0x1]
    %vm79 = vcmask 261120
    %v80 = vsel %vm79, %v75, 0.0
    %81 = vadd.xlane.f32.xlu0 %v80
    %v82 = vpop.xlane.xlu0 %81
    %v83 = vsel %vm79, %v76, 0.0
    %84 = vadd.xlane.f32.xlu0 %v83
    %v85 = vpop.xlane.xlu0 %84
    %v86 = vrcp.pop 32.0
    %v87 = vmul.f32 %v82, %v86
    %v88 = vmul.f32 %v85, %v86
    %v89 = vsub.f32 %v75, %v87
    %v90 = vsub.f32 %v76, %v88
    %v91 = vmul.f32 %v89, %v89
    %v92 = vmul.f32 %v90, %v90
    %v93 = vsel %vm79, %v91, 0.0
    %94 = vadd.xlane.f32.xlu0 %v93
    %v95 = vpop.xlane.xlu0 %94
    %v96 = vsel %vm79, %v92, 0.0
    %97 = vadd.xlane.f32.xlu0 %v96
    %v98 = vpop.xlane.xlu0 %97
    %v99 = vmul.f32 %v95, %v86
    %v100 = vmul.f32 %v98, %v86
    %v101 = vadd.f32 %v99, 1e-12
    %v102 = vadd.f32 %v100, 1e-12
    %v103 = vrsqrt.pop %v101
    %v104 = vrsqrt.pop %v102
    %v105 = vmul.f32 %v89, %v103
    %v106 = vmul.f32 %v90, %v104
    %v108 = vlaneseq
    %v109 = vshrl.u32 %v108, 7
    %v110 = vsub.s32 0, %v109
    %v111 = vrot.slane %v77, %v110
    %v113 = vmul.f32 %v105, %v111
    %v114 = vmul.f32 %v106, %v111
    %v116 = vlaneseq
    %v117 = vshrl.u32 %v116, 7
    %v118 = vsub.s32 0, %v117
    %v119 = vrot.slane %v78, %v118
    %v121 = vadd.f32 %v113, %v119
    %v122 = vadd.f32 %v114, %v119
    %v123 = vld [vmem:[%s1] sm:$0x3]
    %v124 = vld [vmem:[%s4] sm:$0xff]
    %v125 = vld [vmem:[%s4 + $0x8] sm:$0xff]
    %v126 = vld [vmem:[%s4 + $0x10] sm:$0xff]
    %v127 = vld [vmem:[%s4 + $0x18] sm:$0xff]
    %v128 = vld [vmem:[%s5] sm:$0x1]
    %v130 = vlaneseq
    %v131 = vshrl.u32 %v130, 7
    %v132 = vsub.s32 0, %v131
    %v133 = vrot.slane %v128, %v132
    %v136 = vsel %vm79, %v121, 0
    %v139 = vsel %vm79, %v122, 0
    %141 = vmatprep.subr.mxu0 0.0
    %142 = vmatpush1.msra.mxu0 0.0
    %143 = vmatprep.subr.mxu0 0.0
    %144 = vmatpush1.msra.mxu0 0.0
    %145 = vmatprep.subr.mxu0 0.0
    %146 = vmatpush1.msra.mxu0 0.0
    %147 = vmatprep.subr.mxu0 0.0
    %148 = vmatpush1.msra.mxu0 0.0
    %149 = vmatprep.subr.mxu0 0.0
    %150 = vmatpush1.msra.mxu0 0.0
    %151 = vmatprep.subr.mxu0 0.0
    %152 = vmatpush1.msra.mxu0 0.0
    %153 = vmatprep.subr.mxu0 0.0
    %154 = vmatpush1.msra.mxu0 0.0
    %155 = vmatprep.subr.mxu0 0.0
    %156 = vmatpush1.msra.mxu0 0.0
    %157 = vmatprep.subr.mxu0 0.0
    %158 = vmatpush1.msra.mxu0 0.0
    %159 = vmatprep.subr.mxu0 0.0
    %160 = vmatpush1.msra.mxu0 0.0
    %161 = vmatprep.subr.mxu0 0.0
    %162 = vmatpush1.msra.mxu0 0.0
    %163 = vmatprep.subr.mxu0 0.0
    %164 = vmatpush1.msra.mxu0 0.0
    %165 = vmatprep.subr.mxu0 0.0
    %166 = vmatpush1.msra.mxu0 %v127
    %167 = vmatprep.subr.mxu0 0.0
    %168 = vmatpush1.msra.mxu0 %v126
    %169 = vmatprep.subr.mxu0 0.0
    %170 = vmatpush1.msra.mxu0 %v125
    %171 = vmatprep.subr.mxu0 0.0
    %172 = vmatpush1.msra.mxu0 %v124
    %173 = vmatprep.subr.mxu0 0.0
    %174 = vmatpush2.msra.mxu0 0.0
    %175 = vmatprep.subr.mxu0 0.0
    %176 = vmatpush2.msra.mxu0 0.0
    %177 = vmatprep.subr.mxu0 0.0
    %178 = vmatpush2.msra.mxu0 0.0
    %179 = vmatprep.subr.mxu0 0.0
    %180 = vmatpush2.msra.mxu0 0.0
    %181 = vmatprep.subr.mxu0 0.0
    %182 = vmatpush2.msra.mxu0 0.0
    %183 = vmatprep.subr.mxu0 0.0
    %184 = vmatpush2.msra.mxu0 0.0
    %185 = vmatprep.subr.mxu0 0.0
    %186 = vmatpush2.msra.mxu0 0.0
    %187 = vmatprep.subr.mxu0 0.0
    %188 = vmatpush2.msra.mxu0 0.0
    %189 = vmatprep.subr.mxu0 0.0
    %190 = vmatpush2.msra.mxu0 0.0
    %191 = vmatprep.subr.mxu0 0.0
    %192 = vmatpush2.msra.mxu0 0.0
    %193 = vmatprep.subr.mxu0 0.0
    %194 = vmatpush2.msra.mxu0 0.0
    %195 = vmatprep.subr.mxu0 0.0
    %196 = vmatpush2.msra.mxu0 0.0
    %197 = vmatprep.subr.mxu0 0.0
    %198 = vmatpush2.msra.mxu0 0.0
    %199 = vmatprep.subr.mxu0 0.0
    %200 = vmatpush2.msra.mxu0 0.0
    %201 = vmatprep.subr.mxu0 0.0
    %202 = vmatpush2.msra.mxu0 0.0
    %203 = vmatprep.subr.mxu0 0.0
    %204 = vmatpush2.msra.mxu0 0.0
    %205 = vmatprep.mubr.f32.mxu0 0.0
    %206 = vmatmul.mubr.f32.gmra.mxu0 %v136
    %v207 = vpop.f32.mrf.mxu0
    %v208 = vadd.f32 %v133, %v207
    %v209 = vpop.f32.mrf.mxu0
    %210 = vmatprep.mubr.f32.mxu0 0.0
    %211 = vmatmul.mubr.f32.gmra.mxu0 %v139
    %v212 = vpop.f32.mrf.mxu0
    %v213 = vadd.f32 %v133, %v212
    %v214 = vpop.f32.mrf.mxu0
    %215 = vdwg.mxu0
    %vm216 = vcmask 785408
    %217 = vst.msk [vmem:[#allocation2] sm:$0xff] %vm216, %v208
    %218 = vst.msk [vmem:[#allocation2 + $0x8] sm:$0xff] %vm216, %v213
    %v219 = vld [vmem:[%s6] sm:$0xff]
    %v220 = vld [vmem:[%s6 + $0x8] sm:$0xff]
    %v221 = vld [vmem:[%s6 + $0x10] sm:$0xff]
    %v222 = vld [vmem:[%s6 + $0x18] sm:$0xff]
    %v223 = vld [vmem:[#allocation2] sm:$0xff]
    %225 = vrot.lane.b32.xlu0 %v223, 96
    %v226 = vpop.permute.xlu0 %225
    %vm227 = vcmask 130048
    %v228 = vsel %vm227, %v223, 0
    %v230 = vsel %vm227, %v226, 0
    %232 = vmatprep.subr.mxu0 0.0
    %233 = vmatpush1.xpose.msra.mxu0 0.0
    %234 = vmatprep.subr.mxu0 0.0
    %235 = vmatpush1.xpose.msra.mxu0 0.0
    %236 = vmatprep.subr.mxu0 0.0
    %237 = vmatpush1.xpose.msra.mxu0 0.0
    %238 = vmatprep.subr.mxu0 0.0
    %239 = vmatpush1.xpose.msra.mxu0 0.0
    %240 = vmatprep.subr.mxu0 0.0
    %241 = vmatpush1.xpose.msra.mxu0 0.0
    %242 = vmatprep.subr.mxu0 0.0
    %243 = vmatpush1.xpose.msra.mxu0 0.0
    %244 = vmatprep.subr.mxu0 0.0
    %245 = vmatpush1.xpose.msra.mxu0 0.0
    %246 = vmatprep.subr.mxu0 0.0
    %247 = vmatpush1.xpose.msra.mxu0 0.0
    %248 = vmatprep.subr.mxu0 0.0
    %249 = vmatpush1.xpose.msra.mxu0 0.0
    %250 = vmatprep.subr.mxu0 0.0
    %251 = vmatpush1.xpose.msra.mxu0 0.0
    %252 = vmatprep.subr.mxu0 0.0
    %253 = vmatpush1.xpose.msra.mxu0 0.0
    %254 = vmatprep.subr.mxu0 0.0
    %255 = vmatpush1.xpose.msra.mxu0 0.0
    %256 = vmatprep.subr.mxu0 0.0
    %257 = vmatpush1.xpose.msra.mxu0 0.0
    %258 = vmatprep.subr.mxu0 0.0
    %259 = vmatpush1.xpose.msra.mxu0 0.0
    %260 = vmatprep.subr.mxu0 0.0
    %261 = vmatpush1.xpose.msra.mxu0 0.0
    %262 = vmatprep.subr.mxu0 0.0
    %263 = vmatpush1.xpose.msra.mxu0 %v230
    %264 = vmatprep.subr.mxu0 0.0
    %265 = vmatpush2.xpose.msra.mxu0 0.0
    %266 = vmatprep.subr.mxu0 0.0
    %267 = vmatpush2.xpose.msra.mxu0 0.0
    %268 = vmatprep.subr.mxu0 0.0
    %269 = vmatpush2.xpose.msra.mxu0 0.0
    %270 = vmatprep.subr.mxu0 0.0
    %271 = vmatpush2.xpose.msra.mxu0 0.0
    %272 = vmatprep.subr.mxu0 0.0
    %273 = vmatpush2.xpose.msra.mxu0 0.0
    %274 = vmatprep.subr.mxu0 0.0
    %275 = vmatpush2.xpose.msra.mxu0 0.0
    %276 = vmatprep.subr.mxu0 0.0
    %277 = vmatpush2.xpose.msra.mxu0 0.0
    %278 = vmatprep.subr.mxu0 0.0
    %279 = vmatpush2.xpose.msra.mxu0 0.0
    %280 = vmatprep.subr.mxu0 0.0
    %281 = vmatpush2.xpose.msra.mxu0 0.0
    %282 = vmatprep.subr.mxu0 0.0
    %283 = vmatpush2.xpose.msra.mxu0 0.0
    %284 = vmatprep.subr.mxu0 0.0
    %285 = vmatpush2.xpose.msra.mxu0 0.0
    %286 = vmatprep.subr.mxu0 0.0
    %287 = vmatpush2.xpose.msra.mxu0 0.0
    %288 = vmatprep.subr.mxu0 0.0
    %289 = vmatpush2.xpose.msra.mxu0 0.0
    %290 = vmatprep.subr.mxu0 0.0
    %291 = vmatpush2.xpose.msra.mxu0 0.0
    %292 = vmatprep.subr.mxu0 0.0
    %293 = vmatpush2.xpose.msra.mxu0 0.0
    %294 = vmatprep.subr.mxu0 0.0
    %295 = vmatpush2.xpose.msra.mxu0 0.0
    %296 = vmatprep.mubr.f32.mxu0 0.0
    %297 = vmatmul.mubr.f32.gmra.mxu0 %v228
    %v298 = vpop.f32.mrf.mxu0
    %v299 = vadd.f32 0.0, %v298
    %v300 = vpop.f32.mrf.mxu0
    %301 = vdwg.mxu0
    %v302 = vmul.f32 %v299, 0.25
    %v303 = vlaneseq
    %v304 = vshrl.u32 %v303, 7
    %v305 = vsub.s32 0, %v304
    %v306 = vrot.slane %v123, %v305
    %v307 = vadd.f32 %v302, %v306
    %vm308 = vcmask 64512
    %v309 = vsel %vm308, %v307, -inf
    %310 = vmax.xlane.f32.xlu0 %v309
    %v311 = vpop.xlane.xlu0 %310
    %v312 = vsub.f32 %v307, %v311
    %v313 = vmul.f32 %v312, 1.442695
    %v314 = vpow.pop %v313
    %v315 = vsel %vm308, %v314, 0.0
    %316 = vadd.xlane.f32.xlu0 %v315
    %v317 = vpop.xlane.xlu0 %316
    %v318 = vrcp.pop %v317
    %v319 = vmul.f32 %v314, %v318
    %320 = vrot.lane.b32.xlu0 %v223, 64
    %v321 = vpop.permute.xlu0 %320
    %v324 = vsel %vm308, %v319, 0
    %326 = vmatprep.subr.mxu0 0.0
    %327 = vmatpush1.msra.mxu0 0.0
    %328 = vmatprep.subr.mxu0 0.0
    %329 = vmatpush1.msra.mxu0 0.0
    %330 = vmatprep.subr.mxu0 0.0
    %331 = vmatpush1.msra.mxu0 0.0
    %332 = vmatprep.subr.mxu0 0.0
    %333 = vmatpush1.msra.mxu0 0.0
    %334 = vmatprep.subr.mxu0 0.0
    %335 = vmatpush1.msra.mxu0 0.0
    %336 = vmatprep.subr.mxu0 0.0
    %337 = vmatpush1.msra.mxu0 0.0
    %338 = vmatprep.subr.mxu0 0.0
    %339 = vmatpush1.msra.mxu0 0.0
    %340 = vmatprep.subr.mxu0 0.0
    %341 = vmatpush1.msra.mxu0 0.0
    %342 = vmatprep.subr.mxu0 0.0
    %343 = vmatpush1.msra.mxu0 0.0
    %344 = vmatprep.subr.mxu0 0.0
    %345 = vmatpush1.msra.mxu0 0.0
    %346 = vmatprep.subr.mxu0 0.0
    %347 = vmatpush1.msra.mxu0 0.0
    %348 = vmatprep.subr.mxu0 0.0
    %349 = vmatpush1.msra.mxu0 0.0
    %350 = vmatprep.subr.mxu0 0.0
    %351 = vmatpush1.msra.mxu0 0.0
    %352 = vmatprep.subr.mxu0 0.0
    %353 = vmatpush1.msra.mxu0 0.0
    %354 = vmatprep.subr.mxu0 0.0
    %355 = vmatpush1.msra.mxu0 0.0
    %356 = vmatprep.subr.mxu0 0.0
    %357 = vmatpush1.msra.mxu0 %v321
    %358 = vmatprep.subr.mxu0 0.0
    %359 = vmatpush2.msra.mxu0 0.0
    %360 = vmatprep.subr.mxu0 0.0
    %361 = vmatpush2.msra.mxu0 0.0
    %362 = vmatprep.subr.mxu0 0.0
    %363 = vmatpush2.msra.mxu0 0.0
    %364 = vmatprep.subr.mxu0 0.0
    %365 = vmatpush2.msra.mxu0 0.0
    %366 = vmatprep.subr.mxu0 0.0
    %367 = vmatpush2.msra.mxu0 0.0
    %368 = vmatprep.subr.mxu0 0.0
    %369 = vmatpush2.msra.mxu0 0.0
    %370 = vmatprep.subr.mxu0 0.0
    %371 = vmatpush2.msra.mxu0 0.0
    %372 = vmatprep.subr.mxu0 0.0
    %373 = vmatpush2.msra.mxu0 0.0
    %374 = vmatprep.subr.mxu0 0.0
    %375 = vmatpush2.msra.mxu0 0.0
    %376 = vmatprep.subr.mxu0 0.0
    %377 = vmatpush2.msra.mxu0 0.0
    %378 = vmatprep.subr.mxu0 0.0
    %379 = vmatpush2.msra.mxu0 0.0
    %380 = vmatprep.subr.mxu0 0.0
    %381 = vmatpush2.msra.mxu0 0.0
    %382 = vmatprep.subr.mxu0 0.0
    %383 = vmatpush2.msra.mxu0 0.0
    %384 = vmatprep.subr.mxu0 0.0
    %385 = vmatpush2.msra.mxu0 0.0
    %386 = vmatprep.subr.mxu0 0.0
    %387 = vmatpush2.msra.mxu0 0.0
    %388 = vmatprep.subr.mxu0 0.0
    %389 = vmatpush2.msra.mxu0 0.0
    %390 = vmatprep.mubr.f32.mxu0 0.0
    %391 = vmatmul.mubr.f32.gmra.mxu0 %v324
    %v392 = vpop.f32.mrf.mxu0
    %v393 = vadd.f32 0.0, %v392
    %v394 = vpop.f32.mrf.mxu0
    %395 = vdwg.mxu0
    %396 = vrot.lane.b32.xlu0 %v223, 112
    %v397 = vpop.permute.xlu0 %396
    %398 = vrot.lane.b32.xlu0 %v223, 80
    %v399 = vpop.permute.xlu0 %398
    %v400 = vsel %vm227, %v397, 0
    %v402 = vsel %vm227, %v399, 0
    %404 = vmatprep.subr.mxu0 0.0
    %405 = vmatpush1.xpose.msra.mxu0 0.0
    %406 = vmatprep.subr.mxu0 0.0
    %407 = vmatpush1.xpose.msra.mxu0 0.0
    %408 = vmatprep.subr.mxu0 0.0
    %409 = vmatpush1.xpose.msra.mxu0 0.0
    %410 = vmatprep.subr.mxu0 0.0
    %411 = vmatpush1.xpose.msra.mxu0 0.0
    %412 = vmatprep.subr.mxu0 0.0
    %413 = vmatpush1.xpose.msra.mxu0 0.0
    %414 = vmatprep.subr.mxu0 0.0
    %415 = vmatpush1.xpose.msra.mxu0 0.0
    %416 = vmatprep.subr.mxu0 0.0
    %417 = vmatpush1.xpose.msra.mxu0 0.0
    %418 = vmatprep.subr.mxu0 0.0
    %419 = vmatpush1.xpose.msra.mxu0 0.0
    %420 = vmatprep.subr.mxu0 0.0
    %421 = vmatpush1.xpose.msra.mxu0 0.0
    %422 = vmatprep.subr.mxu0 0.0
    %423 = vmatpush1.xpose.msra.mxu0 0.0
    %424 = vmatprep.subr.mxu0 0.0
    %425 = vmatpush1.xpose.msra.mxu0 0.0
    %426 = vmatprep.subr.mxu0 0.0
    %427 = vmatpush1.xpose.msra.mxu0 0.0
    %428 = vmatprep.subr.mxu0 0.0
    %429 = vmatpush1.xpose.msra.mxu0 0.0
    %430 = vmatprep.subr.mxu0 0.0
    %431 = vmatpush1.xpose.msra.mxu0 0.0
    %432 = vmatprep.subr.mxu0 0.0
    %433 = vmatpush1.xpose.msra.mxu0 0.0
    %434 = vmatprep.subr.mxu0 0.0
    %435 = vmatpush1.xpose.msra.mxu0 %v402
    %436 = vmatprep.subr.mxu0 0.0
    %437 = vmatpush2.xpose.msra.mxu0 0.0
    %438 = vmatprep.subr.mxu0 0.0
    %439 = vmatpush2.xpose.msra.mxu0 0.0
    %440 = vmatprep.subr.mxu0 0.0
    %441 = vmatpush2.xpose.msra.mxu0 0.0
    %442 = vmatprep.subr.mxu0 0.0
    %443 = vmatpush2.xpose.msra.mxu0 0.0
    %444 = vmatprep.subr.mxu0 0.0
    %445 = vmatpush2.xpose.msra.mxu0 0.0
    %446 = vmatprep.subr.mxu0 0.0
    %447 = vmatpush2.xpose.msra.mxu0 0.0
    %448 = vmatprep.subr.mxu0 0.0
    %449 = vmatpush2.xpose.msra.mxu0 0.0
    %450 = vmatprep.subr.mxu0 0.0
    %451 = vmatpush2.xpose.msra.mxu0 0.0
    %452 = vmatprep.subr.mxu0 0.0
    %453 = vmatpush2.xpose.msra.mxu0 0.0
    %454 = vmatprep.subr.mxu0 0.0
    %455 = vmatpush2.xpose.msra.mxu0 0.0
    %456 = vmatprep.subr.mxu0 0.0
    %457 = vmatpush2.xpose.msra.mxu0 0.0
    %458 = vmatprep.subr.mxu0 0.0
    %459 = vmatpush2.xpose.msra.mxu0 0.0
    %460 = vmatprep.subr.mxu0 0.0
    %461 = vmatpush2.xpose.msra.mxu0 0.0
    %462 = vmatprep.subr.mxu0 0.0
    %463 = vmatpush2.xpose.msra.mxu0 0.0
    %464 = vmatprep.subr.mxu0 0.0
    %465 = vmatpush2.xpose.msra.mxu0 0.0
    %466 = vmatprep.subr.mxu0 0.0
    %467 = vmatpush2.xpose.msra.mxu0 0.0
    %468 = vmatprep.mubr.f32.mxu0 0.0
    %469 = vmatmul.mubr.f32.gmra.mxu0 %v400
    %v470 = vpop.f32.mrf.mxu0
    %v471 = vadd.f32 0.0, %v470
    %v472 = vpop.f32.mrf.mxu0
    %473 = vdwg.mxu0
    %v474 = vmul.f32 %v471, 0.25
    %v475 = vadd.f32 %v474, %v306
    %v476 = vsel %vm308, %v475, -inf
    %477 = vmax.xlane.f32.xlu0 %v476
    %v478 = vpop.xlane.xlu0 %477
    %v479 = vsub.f32 %v475, %v478
    %v480 = vmul.f32 %v479, 1.442695
    %v481 = vpow.pop %v480
    %v482 = vsel %vm308, %v481, 0.0
    %483 = vadd.xlane.f32.xlu0 %v482
    %v484 = vpop.xlane.xlu0 %483
    %v485 = vrcp.pop %v484
    %v486 = vmul.f32 %v481, %v485
    %487 = vrot.lane.b32.xlu0 %v223, 48
    %v488 = vpop.permute.xlu0 %487
    %v491 = vsel %vm308, %v486, 0
    %493 = vmatprep.subr.mxu0 0.0
    %494 = vmatpush1.msra.mxu0 0.0
    %495 = vmatprep.subr.mxu0 0.0
    %496 = vmatpush1.msra.mxu0 0.0
    %497 = vmatprep.subr.mxu0 0.0
    %498 = vmatpush1.msra.mxu0 0.0
    %499 = vmatprep.subr.mxu0 0.0
    %500 = vmatpush1.msra.mxu0 0.0
    %501 = vmatprep.subr.mxu0 0.0
    %502 = vmatpush1.msra.mxu0 0.0
    %503 = vmatprep.subr.mxu0 0.0
    %504 = vmatpush1.msra.mxu0 0.0
    %505 = vmatprep.subr.mxu0 0.0
    %506 = vmatpush1.msra.mxu0 0.0
    %507 = vmatprep.subr.mxu0 0.0
    %508 = vmatpush1.msra.mxu0 0.0
    %509 = vmatprep.subr.mxu0 0.0
    %510 = vmatpush1.msra.mxu0 0.0
    %511 = vmatprep.subr.mxu0 0.0
    %512 = vmatpush1.msra.mxu0 0.0
    %513 = vmatprep.subr.mxu0 0.0
    %514 = vmatpush1.msra.mxu0 0.0
    %515 = vmatprep.subr.mxu0 0.0
    %516 = vmatpush1.msra.mxu0 0.0
    %517 = vmatprep.subr.mxu0 0.0
    %518 = vmatpush1.msra.mxu0 0.0
    %519 = vmatprep.subr.mxu0 0.0
    %520 = vmatpush1.msra.mxu0 0.0
    %521 = vmatprep.subr.mxu0 0.0
    %522 = vmatpush1.msra.mxu0 0.0
    %523 = vmatprep.subr.mxu0 0.0
    %524 = vmatpush1.msra.mxu0 %v488
    %525 = vmatprep.subr.mxu0 0.0
    %526 = vmatpush2.msra.mxu0 0.0
    %527 = vmatprep.subr.mxu0 0.0
    %528 = vmatpush2.msra.mxu0 0.0
    %529 = vmatprep.subr.mxu0 0.0
    %530 = vmatpush2.msra.mxu0 0.0
    %531 = vmatprep.subr.mxu0 0.0
    %532 = vmatpush2.msra.mxu0 0.0
    %533 = vmatprep.subr.mxu0 0.0
    %534 = vmatpush2.msra.mxu0 0.0
    %535 = vmatprep.subr.mxu0 0.0
    %536 = vmatpush2.msra.mxu0 0.0
    %537 = vmatprep.subr.mxu0 0.0
    %538 = vmatpush2.msra.mxu0 0.0
    %539 = vmatprep.subr.mxu0 0.0
    %540 = vmatpush2.msra.mxu0 0.0
    %541 = vmatprep.subr.mxu0 0.0
    %542 = vmatpush2.msra.mxu0 0.0
    %543 = vmatprep.subr.mxu0 0.0
    %544 = vmatpush2.msra.mxu0 0.0
    %545 = vmatprep.subr.mxu0 0.0
    %546 = vmatpush2.msra.mxu0 0.0
    %547 = vmatprep.subr.mxu0 0.0
    %548 = vmatpush2.msra.mxu0 0.0
    %549 = vmatprep.subr.mxu0 0.0
    %550 = vmatpush2.msra.mxu0 0.0
    %551 = vmatprep.subr.mxu0 0.0
    %552 = vmatpush2.msra.mxu0 0.0
    %553 = vmatprep.subr.mxu0 0.0
    %554 = vmatpush2.msra.mxu0 0.0
    %555 = vmatprep.subr.mxu0 0.0
    %556 = vmatpush2.msra.mxu0 0.0
    %557 = vmatprep.mubr.f32.mxu0 0.0
    %558 = vmatmul.mubr.f32.gmra.mxu0 %v491
    %v559 = vpop.f32.mrf.mxu0
    %v560 = vadd.f32 0.0, %v559
    %v561 = vpop.f32.mrf.mxu0
    %562 = vdwg.mxu0
    %v564 = vsel %vm227, %v560, 0
    %566 = vmatprep.subr.mxu0 0.0
    %567 = vmatpush1.msra.mxu0 0.0
    %568 = vmatprep.subr.mxu0 0.0
    %569 = vmatpush1.msra.mxu0 0.0
    %570 = vmatprep.subr.mxu0 0.0
    %571 = vmatpush1.msra.mxu0 0.0
    %572 = vmatprep.subr.mxu0 0.0
    %573 = vmatpush1.msra.mxu0 0.0
    %574 = vmatprep.subr.mxu0 0.0
    %575 = vmatpush1.msra.mxu0 0.0
    %576 = vmatprep.subr.mxu0 0.0
    %577 = vmatpush1.msra.mxu0 0.0
    %578 = vmatprep.subr.mxu0 0.0
    %579 = vmatpush1.msra.mxu0 0.0
    %580 = vmatprep.subr.mxu0 0.0
    %581 = vmatpush1.msra.mxu0 0.0
    %582 = vmatprep.subr.mxu0 0.0
    %583 = vmatpush1.msra.mxu0 0.0
    %584 = vmatprep.subr.mxu0 0.0
    %585 = vmatpush1.msra.mxu0 0.0
    %586 = vmatprep.subr.mxu0 0.0
    %587 = vmatpush1.msra.mxu0 0.0
    %588 = vmatprep.subr.mxu0 0.0
    %589 = vmatpush1.msra.mxu0 0.0
    %590 = vmatprep.subr.mxu0 0.0
    %591 = vmatpush1.msra.mxu0 0.0
    %592 = vmatprep.subr.mxu0 0.0
    %593 = vmatpush1.msra.mxu0 0.0
    %594 = vmatprep.subr.mxu0 0.0
    %595 = vmatpush1.msra.mxu0 %v222
    %596 = vmatprep.subr.mxu0 0.0
    %597 = vmatpush1.msra.mxu0 %v221
    %598 = vmatprep.subr.mxu0 0.0
    %599 = vmatpush2.msra.mxu0 0.0
    %600 = vmatprep.subr.mxu0 0.0
    %601 = vmatpush2.msra.mxu0 0.0
    %602 = vmatprep.subr.mxu0 0.0
    %603 = vmatpush2.msra.mxu0 0.0
    %604 = vmatprep.subr.mxu0 0.0
    %605 = vmatpush2.msra.mxu0 0.0
    %606 = vmatprep.subr.mxu0 0.0
    %607 = vmatpush2.msra.mxu0 0.0
    %608 = vmatprep.subr.mxu0 0.0
    %609 = vmatpush2.msra.mxu0 0.0
    %610 = vmatprep.subr.mxu0 0.0
    %611 = vmatpush2.msra.mxu0 0.0
    %612 = vmatprep.subr.mxu0 0.0
    %613 = vmatpush2.msra.mxu0 0.0
    %614 = vmatprep.subr.mxu0 0.0
    %615 = vmatpush2.msra.mxu0 0.0
    %616 = vmatprep.subr.mxu0 0.0
    %617 = vmatpush2.msra.mxu0 0.0
    %618 = vmatprep.subr.mxu0 0.0
    %619 = vmatpush2.msra.mxu0 0.0
    %620 = vmatprep.subr.mxu0 0.0
    %621 = vmatpush2.msra.mxu0 0.0
    %622 = vmatprep.subr.mxu0 0.0
    %623 = vmatpush2.msra.mxu0 0.0
    %624 = vmatprep.subr.mxu0 0.0
    %625 = vmatpush2.msra.mxu0 0.0
    %626 = vmatprep.subr.mxu0 0.0
    %627 = vmatpush2.msra.mxu0 0.0
    %628 = vmatprep.subr.mxu0 0.0
    %629 = vmatpush2.msra.mxu0 0.0
    %630 = vmatprep.mubr.f32.mxu0 0.0
    %631 = vmatmul.mubr.f32.gmra.mxu0 %v564
    %v632 = vpop.f32.mrf.mxu0
    %v633 = vadd.f32 0.0, %v632
    %v634 = vpop.f32.mrf.mxu0
    %635 = vdwg.mxu0
    %v637 = vsel %vm227, %v393, 0
    %639 = vmatprep.subr.mxu0 0.0
    %640 = vmatpush1.msra.mxu0 0.0
    %641 = vmatprep.subr.mxu0 0.0
    %642 = vmatpush1.msra.mxu0 0.0
    %643 = vmatprep.subr.mxu0 0.0
    %644 = vmatpush1.msra.mxu0 0.0
    %645 = vmatprep.subr.mxu0 0.0
    %646 = vmatpush1.msra.mxu0 0.0
    %647 = vmatprep.subr.mxu0 0.0
    %648 = vmatpush1.msra.mxu0 0.0
    %649 = vmatprep.subr.mxu0 0.0
    %650 = vmatpush1.msra.mxu0 0.0
    %651 = vmatprep.subr.mxu0 0.0
    %652 = vmatpush1.msra.mxu0 0.0
    %653 = vmatprep.subr.mxu0 0.0
    %654 = vmatpush1.msra.mxu0 0.0
    %655 = vmatprep.subr.mxu0 0.0
    %656 = vmatpush1.msra.mxu0 0.0
    %657 = vmatprep.subr.mxu0 0.0
    %658 = vmatpush1.msra.mxu0 0.0
    %659 = vmatprep.subr.mxu0 0.0
    %660 = vmatpush1.msra.mxu0 0.0
    %661 = vmatprep.subr.mxu0 0.0
    %662 = vmatpush1.msra.mxu0 0.0
    %663 = vmatprep.subr.mxu0 0.0
    %664 = vmatpush1.msra.mxu0 0.0
    %665 = vmatprep.subr.mxu0 0.0
    %666 = vmatpush1.msra.mxu0 0.0
    %667 = vmatprep.subr.mxu0 0.0
    %668 = vmatpush1.msra.mxu0 %v220
    %669 = vmatprep.subr.mxu0 0.0
    %670 = vmatpush1.msra.mxu0 %v219
    %671 = vmatprep.subr.mxu0 0.0
    %672 = vmatpush2.msra.mxu0 0.0
    %673 = vmatprep.subr.mxu0 0.0
    %674 = vmatpush2.msra.mxu0 0.0
    %675 = vmatprep.subr.mxu0 0.0
    %676 = vmatpush2.msra.mxu0 0.0
    %677 = vmatprep.subr.mxu0 0.0
    %678 = vmatpush2.msra.mxu0 0.0
    %679 = vmatprep.subr.mxu0 0.0
    %680 = vmatpush2.msra.mxu0 0.0
    %681 = vmatprep.subr.mxu0 0.0
    %682 = vmatpush2.msra.mxu0 0.0
    %683 = vmatprep.subr.mxu0 0.0
    %684 = vmatpush2.msra.mxu0 0.0
    %685 = vmatprep.subr.mxu0 0.0
    %686 = vmatpush2.msra.mxu0 0.0
    %687 = vmatprep.subr.mxu0 0.0
    %688 = vmatpush2.msra.mxu0 0.0
    %689 = vmatprep.subr.mxu0 0.0
    %690 = vmatpush2.msra.mxu0 0.0
    %691 = vmatprep.subr.mxu0 0.0
    %692 = vmatpush2.msra.mxu0 0.0
    %693 = vmatprep.subr.mxu0 0.0
    %694 = vmatpush2.msra.mxu0 0.0
    %695 = vmatprep.subr.mxu0 0.0
    %696 = vmatpush2.msra.mxu0 0.0
    %697 = vmatprep.subr.mxu0 0.0
    %698 = vmatpush2.msra.mxu0 0.0
    %699 = vmatprep.subr.mxu0 0.0
    %700 = vmatpush2.msra.mxu0 0.0
    %701 = vmatprep.subr.mxu0 0.0
    %702 = vmatpush2.msra.mxu0 0.0
    %703 = vmatprep.mubr.f32.mxu0 0.0
    %704 = vmatmul.mubr.f32.gmra.mxu0 %v637
    %v705 = vpop.f32.mrf.mxu0
    %v706 = vadd.f32 %v633, %v705
    %v707 = vpop.f32.mrf.mxu0
    %708 = vdwg.mxu0
    %709 = vst.msk [vmem:[#allocation3] sm:$0xff] %vm79, %v706
    %v710 = vld [vmem:[#allocation2 + $0x8] sm:$0xff]
    %712 = vrot.lane.b32.xlu0 %v710, 96
    %v713 = vpop.permute.xlu0 %712
    %v714 = vsel %vm227, %v710, 0
    %v716 = vsel %vm227, %v713, 0
    %718 = vmatprep.subr.mxu0 0.0
    %719 = vmatpush1.xpose.msra.mxu0 0.0
    %720 = vmatprep.subr.mxu0 0.0
    %721 = vmatpush1.xpose.msra.mxu0 0.0
    %722 = vmatprep.subr.mxu0 0.0
    %723 = vmatpush1.xpose.msra.mxu0 0.0
    %724 = vmatprep.subr.mxu0 0.0
    %725 = vmatpush1.xpose.msra.mxu0 0.0
    %726 = vmatprep.subr.mxu0 0.0
    %727 = vmatpush1.xpose.msra.mxu0 0.0
    %728 = vmatprep.subr.mxu0 0.0
    %729 = vmatpush1.xpose.msra.mxu0 0.0
    %730 = vmatprep.subr.mxu0 0.0
    %731 = vmatpush1.xpose.msra.mxu0 0.0
    %732 = vmatprep.subr.mxu0 0.0
    %733 = vmatpush1.xpose.msra.mxu0 0.0
    %734 = vmatprep.subr.mxu0 0.0
    %735 = vmatpush1.xpose.msra.mxu0 0.0
    %736 = vmatprep.subr.mxu0 0.0
    %737 = vmatpush1.xpose.msra.mxu0 0.0
    %738 = vmatprep.subr.mxu0 0.0
    %739 = vmatpush1.xpose.msra.mxu0 0.0
    %740 = vmatprep.subr.mxu0 0.0
    %741 = vmatpush1.xpose.msra.mxu0 0.0
    %742 = vmatprep.subr.mxu0 0.0
    %743 = vmatpush1.xpose.msra.mxu0 0.0
    %744 = vmatprep.subr.mxu0 0.0
    %745 = vmatpush1.xpose.msra.mxu0 0.0
    %746 = vmatprep.subr.mxu0 0.0
    %747 = vmatpush1.xpose.msra.mxu0 0.0
    %748 = vmatprep.subr.mxu0 0.0
    %749 = vmatpush1.xpose.msra.mxu0 %v716
    %750 = vmatprep.subr.mxu0 0.0
    %751 = vmatpush2.xpose.msra.mxu0 0.0
    %752 = vmatprep.subr.mxu0 0.0
    %753 = vmatpush2.xpose.msra.mxu0 0.0
    %754 = vmatprep.subr.mxu0 0.0
    %755 = vmatpush2.xpose.msra.mxu0 0.0
    %756 = vmatprep.subr.mxu0 0.0
    %757 = vmatpush2.xpose.msra.mxu0 0.0
    %758 = vmatprep.subr.mxu0 0.0
    %759 = vmatpush2.xpose.msra.mxu0 0.0
    %760 = vmatprep.subr.mxu0 0.0
    %761 = vmatpush2.xpose.msra.mxu0 0.0
    %762 = vmatprep.subr.mxu0 0.0
    %763 = vmatpush2.xpose.msra.mxu0 0.0
    %764 = vmatprep.subr.mxu0 0.0
    %765 = vmatpush2.xpose.msra.mxu0 0.0
    %766 = vmatprep.subr.mxu0 0.0
    %767 = vmatpush2.xpose.msra.mxu0 0.0
    %768 = vmatprep.subr.mxu0 0.0
    %769 = vmatpush2.xpose.msra.mxu0 0.0
    %770 = vmatprep.subr.mxu0 0.0
    %771 = vmatpush2.xpose.msra.mxu0 0.0
    %772 = vmatprep.subr.mxu0 0.0
    %773 = vmatpush2.xpose.msra.mxu0 0.0
    %774 = vmatprep.subr.mxu0 0.0
    %775 = vmatpush2.xpose.msra.mxu0 0.0
    %776 = vmatprep.subr.mxu0 0.0
    %777 = vmatpush2.xpose.msra.mxu0 0.0
    %778 = vmatprep.subr.mxu0 0.0
    %779 = vmatpush2.xpose.msra.mxu0 0.0
    %780 = vmatprep.subr.mxu0 0.0
    %781 = vmatpush2.xpose.msra.mxu0 0.0
    %782 = vmatprep.mubr.f32.mxu0 0.0
    %783 = vmatmul.mubr.f32.gmra.mxu0 %v714
    %v784 = vpop.f32.mrf.mxu0
    %v785 = vadd.f32 0.0, %v784
    %v786 = vpop.f32.mrf.mxu0
    %787 = vdwg.mxu0
    %v788 = vmul.f32 %v785, 0.25
    %v789 = vlaneseq
    %v790 = vshrl.u32 %v789, 7
    %v791 = vsub.s32 1, %v790
    %v792 = vrot.slane %v123, %v791
    %v793 = vadd.f32 %v788, %v792
    %v794 = vsel %vm308, %v793, -inf
    %795 = vmax.xlane.f32.xlu0 %v794
    %v796 = vpop.xlane.xlu0 %795
    %v797 = vsub.f32 %v793, %v796
    %v798 = vmul.f32 %v797, 1.442695
    %v799 = vpow.pop %v798
    %v800 = vsel %vm308, %v799, 0.0
    %801 = vadd.xlane.f32.xlu0 %v800
    %v802 = vpop.xlane.xlu0 %801
    %v803 = vrcp.pop %v802
    %v804 = vmul.f32 %v799, %v803
    %805 = vrot.lane.b32.xlu0 %v710, 64
    %v806 = vpop.permute.xlu0 %805
    %v809 = vsel %vm308, %v804, 0
    %811 = vmatprep.subr.mxu0 0.0
    %812 = vmatpush1.msra.mxu0 0.0
    %813 = vmatprep.subr.mxu0 0.0
    %814 = vmatpush1.msra.mxu0 0.0
    %815 = vmatprep.subr.mxu0 0.0
    %816 = vmatpush1.msra.mxu0 0.0
    %817 = vmatprep.subr.mxu0 0.0
    %818 = vmatpush1.msra.mxu0 0.0
    %819 = vmatprep.subr.mxu0 0.0
    %820 = vmatpush1.msra.mxu0 0.0
    %821 = vmatprep.subr.mxu0 0.0
    %822 = vmatpush1.msra.mxu0 0.0
    %823 = vmatprep.subr.mxu0 0.0
    %824 = vmatpush1.msra.mxu0 0.0
    %825 = vmatprep.subr.mxu0 0.0
    %826 = vmatpush1.msra.mxu0 0.0
    %827 = vmatprep.subr.mxu0 0.0
    %828 = vmatpush1.msra.mxu0 0.0
    %829 = vmatprep.subr.mxu0 0.0
    %830 = vmatpush1.msra.mxu0 0.0
    %831 = vmatprep.subr.mxu0 0.0
    %832 = vmatpush1.msra.mxu0 0.0
    %833 = vmatprep.subr.mxu0 0.0
    %834 = vmatpush1.msra.mxu0 0.0
    %835 = vmatprep.subr.mxu0 0.0
    %836 = vmatpush1.msra.mxu0 0.0
    %837 = vmatprep.subr.mxu0 0.0
    %838 = vmatpush1.msra.mxu0 0.0
    %839 = vmatprep.subr.mxu0 0.0
    %840 = vmatpush1.msra.mxu0 0.0
    %841 = vmatprep.subr.mxu0 0.0
    %842 = vmatpush1.msra.mxu0 %v806
    %843 = vmatprep.subr.mxu0 0.0
    %844 = vmatpush2.msra.mxu0 0.0
    %845 = vmatprep.subr.mxu0 0.0
    %846 = vmatpush2.msra.mxu0 0.0
    %847 = vmatprep.subr.mxu0 0.0
    %848 = vmatpush2.msra.mxu0 0.0
    %849 = vmatprep.subr.mxu0 0.0
    %850 = vmatpush2.msra.mxu0 0.0
    %851 = vmatprep.subr.mxu0 0.0
    %852 = vmatpush2.msra.mxu0 0.0
    %853 = vmatprep.subr.mxu0 0.0
    %854 = vmatpush2.msra.mxu0 0.0
    %855 = vmatprep.subr.mxu0 0.0
    %856 = vmatpush2.msra.mxu0 0.0
    %857 = vmatprep.subr.mxu0 0.0
    %858 = vmatpush2.msra.mxu0 0.0
    %859 = vmatprep.subr.mxu0 0.0
    %860 = vmatpush2.msra.mxu0 0.0
    %861 = vmatprep.subr.mxu0 0.0
    %862 = vmatpush2.msra.mxu0 0.0
    %863 = vmatprep.subr.mxu0 0.0
    %864 = vmatpush2.msra.mxu0 0.0
    %865 = vmatprep.subr.mxu0 0.0
    %866 = vmatpush2.msra.mxu0 0.0
    %867 = vmatprep.subr.mxu0 0.0
    %868 = vmatpush2.msra.mxu0 0.0
    %869 = vmatprep.subr.mxu0 0.0
    %870 = vmatpush2.msra.mxu0 0.0
    %871 = vmatprep.subr.mxu0 0.0
    %872 = vmatpush2.msra.mxu0 0.0
    %873 = vmatprep.subr.mxu0 0.0
    %874 = vmatpush2.msra.mxu0 0.0
    %875 = vmatprep.mubr.f32.mxu0 0.0
    %876 = vmatmul.mubr.f32.gmra.mxu0 %v809
    %v877 = vpop.f32.mrf.mxu0
    %v878 = vadd.f32 0.0, %v877
    %v879 = vpop.f32.mrf.mxu0
    %880 = vdwg.mxu0
    %881 = vrot.lane.b32.xlu0 %v710, 112
    %v882 = vpop.permute.xlu0 %881
    %883 = vrot.lane.b32.xlu0 %v710, 80
    %v884 = vpop.permute.xlu0 %883
    %v885 = vsel %vm227, %v882, 0
    %v887 = vsel %vm227, %v884, 0
    %889 = vmatprep.subr.mxu0 0.0
    %890 = vmatpush1.xpose.msra.mxu0 0.0
    %891 = vmatprep.subr.mxu0 0.0
    %892 = vmatpush1.xpose.msra.mxu0 0.0
    %893 = vmatprep.subr.mxu0 0.0
    %894 = vmatpush1.xpose.msra.mxu0 0.0
    %895 = vmatprep.subr.mxu0 0.0
    %896 = vmatpush1.xpose.msra.mxu0 0.0
    %897 = vmatprep.subr.mxu0 0.0
    %898 = vmatpush1.xpose.msra.mxu0 0.0
    %899 = vmatprep.subr.mxu0 0.0
    %900 = vmatpush1.xpose.msra.mxu0 0.0
    %901 = vmatprep.subr.mxu0 0.0
    %902 = vmatpush1.xpose.msra.mxu0 0.0
    %903 = vmatprep.subr.mxu0 0.0
    %904 = vmatpush1.xpose.msra.mxu0 0.0
    %905 = vmatprep.subr.mxu0 0.0
    %906 = vmatpush1.xpose.msra.mxu0 0.0
    %907 = vmatprep.subr.mxu0 0.0
    %908 = vmatpush1.xpose.msra.mxu0 0.0
    %909 = vmatprep.subr.mxu0 0.0
    %910 = vmatpush1.xpose.msra.mxu0 0.0
    %911 = vmatprep.subr.mxu0 0.0
    %912 = vmatpush1.xpose.msra.mxu0 0.0
    %913 = vmatprep.subr.mxu0 0.0
    %914 = vmatpush1.xpose.msra.mxu0 0.0
    %915 = vmatprep.subr.mxu0 0.0
    %916 = vmatpush1.xpose.msra.mxu0 0.0
    %917 = vmatprep.subr.mxu0 0.0
    %918 = vmatpush1.xpose.msra.mxu0 0.0
    %919 = vmatprep.subr.mxu0 0.0
    %920 = vmatpush1.xpose.msra.mxu0 %v887
    %921 = vmatprep.subr.mxu0 0.0
    %922 = vmatpush2.xpose.msra.mxu0 0.0
    %923 = vmatprep.subr.mxu0 0.0
    %924 = vmatpush2.xpose.msra.mxu0 0.0
    %925 = vmatprep.subr.mxu0 0.0
    %926 = vmatpush2.xpose.msra.mxu0 0.0
    %927 = vmatprep.subr.mxu0 0.0
    %928 = vmatpush2.xpose.msra.mxu0 0.0
    %929 = vmatprep.subr.mxu0 0.0
    %930 = vmatpush2.xpose.msra.mxu0 0.0
    %931 = vmatprep.subr.mxu0 0.0
    %932 = vmatpush2.xpose.msra.mxu0 0.0
    %933 = vmatprep.subr.mxu0 0.0
    %934 = vmatpush2.xpose.msra.mxu0 0.0
    %935 = vmatprep.subr.mxu0 0.0
    %936 = vmatpush2.xpose.msra.mxu0 0.0
    %937 = vmatprep.subr.mxu0 0.0
    %938 = vmatpush2.xpose.msra.mxu0 0.0
    %939 = vmatprep.subr.mxu0 0.0
    %940 = vmatpush2.xpose.msra.mxu0 0.0
    %941 = vmatprep.subr.mxu0 0.0
    %942 = vmatpush2.xpose.msra.mxu0 0.0
    %943 = vmatprep.subr.mxu0 0.0
    %944 = vmatpush2.xpose.msra.mxu0 0.0
    %945 = vmatprep.subr.mxu0 0.0
    %946 = vmatpush2.xpose.msra.mxu0 0.0
    %947 = vmatprep.subr.mxu0 0.0
    %948 = vmatpush2.xpose.msra.mxu0 0.0
    %949 = vmatprep.subr.mxu0 0.0
    %950 = vmatpush2.xpose.msra.mxu0 0.0
    %951 = vmatprep.subr.mxu0 0.0
    %952 = vmatpush2.xpose.msra.mxu0 0.0
    %953 = vmatprep.mubr.f32.mxu0 0.0
    %954 = vmatmul.mubr.f32.gmra.mxu0 %v885
    %v955 = vpop.f32.mrf.mxu0
    %v956 = vadd.f32 0.0, %v955
    %v957 = vpop.f32.mrf.mxu0
    %958 = vdwg.mxu0
    %v959 = vmul.f32 %v956, 0.25
    %v960 = vadd.f32 %v959, %v792
    %v961 = vsel %vm308, %v960, -inf
    %962 = vmax.xlane.f32.xlu0 %v961
    %v963 = vpop.xlane.xlu0 %962
    %v964 = vsub.f32 %v960, %v963
    %v965 = vmul.f32 %v964, 1.442695
    %v966 = vpow.pop %v965
    %v967 = vsel %vm308, %v966, 0.0
    %968 = vadd.xlane.f32.xlu0 %v967
    %v969 = vpop.xlane.xlu0 %968
    %v970 = vrcp.pop %v969
    %v971 = vmul.f32 %v966, %v970
    %972 = vrot.lane.b32.xlu0 %v710, 48
    %v973 = vpop.permute.xlu0 %972
    %v976 = vsel %vm308, %v971, 0
    %978 = vmatprep.subr.mxu0 0.0
    %979 = vmatpush1.msra.mxu0 0.0
    %980 = vmatprep.subr.mxu0 0.0
    %981 = vmatpush1.msra.mxu0 0.0
    %982 = vmatprep.subr.mxu0 0.0
    %983 = vmatpush1.msra.mxu0 0.0
    %984 = vmatprep.subr.mxu0 0.0
    %985 = vmatpush1.msra.mxu0 0.0
    %986 = vmatprep.subr.mxu0 0.0
    %987 = vmatpush1.msra.mxu0 0.0
    %988 = vmatprep.subr.mxu0 0.0
    %989 = vmatpush1.msra.mxu0 0.0
    %990 = vmatprep.subr.mxu0 0.0
    %991 = vmatpush1.msra.mxu0 0.0
    %992 = vmatprep.subr.mxu0 0.0
    %993 = vmatpush1.msra.mxu0 0.0
    %994 = vmatprep.subr.mxu0 0.0
    %995 = vmatpush1.msra.mxu0 0.0
    %996 = vmatprep.subr.mxu0 0.0
    %997 = vmatpush1.msra.mxu0 0.0
    %998 = vmatprep.subr.mxu0 0.0
    %999 = vmatpush1.msra.mxu0 0.0
    %1000 = vmatprep.subr.mxu0 0.0
    %1001 = vmatpush1.msra.mxu0 0.0
    %1002 = vmatprep.subr.mxu0 0.0
    %1003 = vmatpush1.msra.mxu0 0.0
    %1004 = vmatprep.subr.mxu0 0.0
    %1005 = vmatpush1.msra.mxu0 0.0
    %1006 = vmatprep.subr.mxu0 0.0
    %1007 = vmatpush1.msra.mxu0 0.0
    %1008 = vmatprep.subr.mxu0 0.0
    %1009 = vmatpush1.msra.mxu0 %v973
    %1010 = vmatprep.subr.mxu0 0.0
    %1011 = vmatpush2.msra.mxu0 0.0
    %1012 = vmatprep.subr.mxu0 0.0
    %1013 = vmatpush2.msra.mxu0 0.0
    %1014 = vmatprep.subr.mxu0 0.0
    %1015 = vmatpush2.msra.mxu0 0.0
    %1016 = vmatprep.subr.mxu0 0.0
    %1017 = vmatpush2.msra.mxu0 0.0
    %1018 = vmatprep.subr.mxu0 0.0
    %1019 = vmatpush2.msra.mxu0 0.0
    %1020 = vmatprep.subr.mxu0 0.0
    %1021 = vmatpush2.msra.mxu0 0.0
    %1022 = vmatprep.subr.mxu0 0.0
    %1023 = vmatpush2.msra.mxu0 0.0
    %1024 = vmatprep.subr.mxu0 0.0
    %1025 = vmatpush2.msra.mxu0 0.0
    %1026 = vmatprep.subr.mxu0 0.0
    %1027 = vmatpush2.msra.mxu0 0.0
    %1028 = vmatprep.subr.mxu0 0.0
    %1029 = vmatpush2.msra.mxu0 0.0
    %1030 = vmatprep.subr.mxu0 0.0
    %1031 = vmatpush2.msra.mxu0 0.0
    %1032 = vmatprep.subr.mxu0 0.0
    %1033 = vmatpush2.msra.mxu0 0.0
    %1034 = vmatprep.subr.mxu0 0.0
    %1035 = vmatpush2.msra.mxu0 0.0
    %1036 = vmatprep.subr.mxu0 0.0
    %1037 = vmatpush2.msra.mxu0 0.0
    %1038 = vmatprep.subr.mxu0 0.0
    %1039 = vmatpush2.msra.mxu0 0.0
    %1040 = vmatprep.subr.mxu0 0.0
    %1041 = vmatpush2.msra.mxu0 0.0
    %1042 = vmatprep.mubr.f32.mxu0 0.0
    %1043 = vmatmul.mubr.f32.gmra.mxu0 %v976
    %v1044 = vpop.f32.mrf.mxu0
    %v1045 = vadd.f32 0.0, %v1044
    %v1046 = vpop.f32.mrf.mxu0
    %1047 = vdwg.mxu0
    %v1049 = vsel %vm227, %v1045, 0
    %1051 = vmatprep.subr.mxu0 0.0
    %1052 = vmatpush1.msra.mxu0 0.0
    %1053 = vmatprep.subr.mxu0 0.0
    %1054 = vmatpush1.msra.mxu0 0.0
    %1055 = vmatprep.subr.mxu0 0.0
    %1056 = vmatpush1.msra.mxu0 0.0
    %1057 = vmatprep.subr.mxu0 0.0
    %1058 = vmatpush1.msra.mxu0 0.0
    %1059 = vmatprep.subr.mxu0 0.0
    %1060 = vmatpush1.msra.mxu0 0.0
    %1061 = vmatprep.subr.mxu0 0.0
    %1062 = vmatpush1.msra.mxu0 0.0
    %1063 = vmatprep.subr.mxu0 0.0
    %1064 = vmatpush1.msra.mxu0 0.0
    %1065 = vmatprep.subr.mxu0 0.0
    %1066 = vmatpush1.msra.mxu0 0.0
    %1067 = vmatprep.subr.mxu0 0.0
    %1068 = vmatpush1.msra.mxu0 0.0
    %1069 = vmatprep.subr.mxu0 0.0
    %1070 = vmatpush1.msra.mxu0 0.0
    %1071 = vmatprep.subr.mxu0 0.0
    %1072 = vmatpush1.msra.mxu0 0.0
    %1073 = vmatprep.subr.mxu0 0.0
    %1074 = vmatpush1.msra.mxu0 0.0
    %1075 = vmatprep.subr.mxu0 0.0
    %1076 = vmatpush1.msra.mxu0 0.0
    %1077 = vmatprep.subr.mxu0 0.0
    %1078 = vmatpush1.msra.mxu0 0.0
    %1079 = vmatprep.subr.mxu0 0.0
    %1080 = vmatpush1.msra.mxu0 %v222
    %1081 = vmatprep.subr.mxu0 0.0
    %1082 = vmatpush1.msra.mxu0 %v221
    %1083 = vmatprep.subr.mxu0 0.0
    %1084 = vmatpush2.msra.mxu0 0.0
    %1085 = vmatprep.subr.mxu0 0.0
    %1086 = vmatpush2.msra.mxu0 0.0
    %1087 = vmatprep.subr.mxu0 0.0
    %1088 = vmatpush2.msra.mxu0 0.0
    %1089 = vmatprep.subr.mxu0 0.0
    %1090 = vmatpush2.msra.mxu0 0.0
    %1091 = vmatprep.subr.mxu0 0.0
    %1092 = vmatpush2.msra.mxu0 0.0
    %1093 = vmatprep.subr.mxu0 0.0
    %1094 = vmatpush2.msra.mxu0 0.0
    %1095 = vmatprep.subr.mxu0 0.0
    %1096 = vmatpush2.msra.mxu0 0.0
    %1097 = vmatprep.subr.mxu0 0.0
    %1098 = vmatpush2.msra.mxu0 0.0
    %1099 = vmatprep.subr.mxu0 0.0
    %1100 = vmatpush2.msra.mxu0 0.0
    %1101 = vmatprep.subr.mxu0 0.0
    %1102 = vmatpush2.msra.mxu0 0.0
    %1103 = vmatprep.subr.mxu0 0.0
    %1104 = vmatpush2.msra.mxu0 0.0
    %1105 = vmatprep.subr.mxu0 0.0
    %1106 = vmatpush2.msra.mxu0 0.0
    %1107 = vmatprep.subr.mxu0 0.0
    %1108 = vmatpush2.msra.mxu0 0.0
    %1109 = vmatprep.subr.mxu0 0.0
    %1110 = vmatpush2.msra.mxu0 0.0
    %1111 = vmatprep.subr.mxu0 0.0
    %1112 = vmatpush2.msra.mxu0 0.0
    %1113 = vmatprep.subr.mxu0 0.0
    %1114 = vmatpush2.msra.mxu0 0.0
    %1115 = vmatprep.mubr.f32.mxu0 0.0
    %1116 = vmatmul.mubr.f32.gmra.mxu0 %v1049
    %v1117 = vpop.f32.mrf.mxu0
    %v1118 = vadd.f32 0.0, %v1117
    %v1119 = vpop.f32.mrf.mxu0
    %1120 = vdwg.mxu0
    %v1122 = vsel %vm227, %v878, 0
    %1124 = vmatprep.subr.mxu0 0.0
    %1125 = vmatpush1.msra.mxu0 0.0
    %1126 = vmatprep.subr.mxu0 0.0
    %1127 = vmatpush1.msra.mxu0 0.0
    %1128 = vmatprep.subr.mxu0 0.0
    %1129 = vmatpush1.msra.mxu0 0.0
    %1130 = vmatprep.subr.mxu0 0.0
    %1131 = vmatpush1.msra.mxu0 0.0
    %1132 = vmatprep.subr.mxu0 0.0
    %1133 = vmatpush1.msra.mxu0 0.0
    %1134 = vmatprep.subr.mxu0 0.0
    %1135 = vmatpush1.msra.mxu0 0.0
    %1136 = vmatprep.subr.mxu0 0.0
    %1137 = vmatpush1.msra.mxu0 0.0
    %1138 = vmatprep.subr.mxu0 0.0
    %1139 = vmatpush1.msra.mxu0 0.0
    %1140 = vmatprep.subr.mxu0 0.0
    %1141 = vmatpush1.msra.mxu0 0.0
    %1142 = vmatprep.subr.mxu0 0.0
    %1143 = vmatpush1.msra.mxu0 0.0
    %1144 = vmatprep.subr.mxu0 0.0
    %1145 = vmatpush1.msra.mxu0 0.0
    %1146 = vmatprep.subr.mxu0 0.0
    %1147 = vmatpush1.msra.mxu0 0.0
    %1148 = vmatprep.subr.mxu0 0.0
    %1149 = vmatpush1.msra.mxu0 0.0
    %1150 = vmatprep.subr.mxu0 0.0
    %1151 = vmatpush1.msra.mxu0 0.0
    %1152 = vmatprep.subr.mxu0 0.0
    %1153 = vmatpush1.msra.mxu0 %v220
    %1154 = vmatprep.subr.mxu0 0.0
    %1155 = vmatpush1.msra.mxu0 %v219
    %1156 = vmatprep.subr.mxu0 0.0
    %1157 = vmatpush2.msra.mxu0 0.0
    %1158 = vmatprep.subr.mxu0 0.0
    %1159 = vmatpush2.msra.mxu0 0.0
    %1160 = vmatprep.subr.mxu0 0.0
    %1161 = vmatpush2.msra.mxu0 0.0
    %1162 = vmatprep.subr.mxu0 0.0
    %1163 = vmatpush2.msra.mxu0 0.0
    %1164 = vmatprep.subr.mxu0 0.0
    %1165 = vmatpush2.msra.mxu0 0.0
    %1166 = vmatprep.subr.mxu0 0.0
    %1167 = vmatpush2.msra.mxu0 0.0
    %1168 = vmatprep.subr.mxu0 0.0
    %1169 = vmatpush2.msra.mxu0 0.0
    %1170 = vmatprep.subr.mxu0 0.0
    %1171 = vmatpush2.msra.mxu0 0.0
    %1172 = vmatprep.subr.mxu0 0.0
    %1173 = vmatpush2.msra.mxu0 0.0
    %1174 = vmatprep.subr.mxu0 0.0
    %1175 = vmatpush2.msra.mxu0 0.0
    %1176 = vmatprep.subr.mxu0 0.0
    %1177 = vmatpush2.msra.mxu0 0.0
    %1178 = vmatprep.subr.mxu0 0.0
    %1179 = vmatpush2.msra.mxu0 0.0
    %1180 = vmatprep.subr.mxu0 0.0
    %1181 = vmatpush2.msra.mxu0 0.0
    %1182 = vmatprep.subr.mxu0 0.0
    %1183 = vmatpush2.msra.mxu0 0.0
    %1184 = vmatprep.subr.mxu0 0.0
    %1185 = vmatpush2.msra.mxu0 0.0
    %1186 = vmatprep.subr.mxu0 0.0
    %1187 = vmatpush2.msra.mxu0 0.0
    %1188 = vmatprep.mubr.f32.mxu0 0.0
    %1189 = vmatmul.mubr.f32.gmra.mxu0 %v1122
    %v1190 = vpop.f32.mrf.mxu0
    %v1191 = vadd.f32 %v1118, %v1190
    %v1192 = vpop.f32.mrf.mxu0
    %1193 = vdwg.mxu0
    %1194 = vst.msk [vmem:[#allocation3 + $0x8] sm:$0xff] %vm79, %v1191
    %v1195 = vld [vmem:[#allocation3] sm:$0xff]
    %v1196 = vld [vmem:[#allocation3 + $0x8] sm:$0xff]
    %v1197 = vld [vmem:[%s7] sm:$0x1]
    %v1199 = vlaneseq
    %v1200 = vshrl.u32 %v1199, 7
    %v1201 = vsub.s32 0, %v1200
    %v1202 = vrot.slane %v1197, %v1201
    %v1204 = vadd.f32 %v1195, %v1202
    %v1205 = vadd.f32 %v1196, %v1202
    %v1206 = vadd.f32 %v1204, %v121
    %v1207 = vadd.f32 %v1205, %v122
    %v1208 = vld [vmem:[%s8] sm:$0x1]
    %v1209 = vld [vmem:[%s9] sm:$0x1]
    %v1210 = vsel %vm79, %v1206, 0.0
    %1211 = vadd.xlane.f32.xlu0 %v1210
    %v1212 = vpop.xlane.xlu0 %1211
    %v1213 = vsel %vm79, %v1207, 0.0
    %1214 = vadd.xlane.f32.xlu0 %v1213
    %v1215 = vpop.xlane.xlu0 %1214
    %v1216 = vmul.f32 %v1212, %v86
    %v1217 = vmul.f32 %v1215, %v86
    %v1218 = vsub.f32 %v1206, %v1216
    %v1219 = vsub.f32 %v1207, %v1217
    %v1220 = vmul.f32 %v1218, %v1218
    %v1221 = vmul.f32 %v1219, %v1219
    %v1222 = vsel %vm79, %v1220, 0.0
    %1223 = vadd.xlane.f32.xlu0 %v1222
    %v1224 = vpop.xlane.xlu0 %1223
    %v1225 = vsel %vm79, %v1221, 0.0
    %1226 = vadd.xlane.f32.xlu0 %v1225
    %v1227 = vpop.xlane.xlu0 %1226
    %v1228 = vmul.f32 %v1224, %v86
    %v1229 = vmul.f32 %v1227, %v86
    %v1230 = vadd.f32 %v1228, 1e-12
    %v1231 = vadd.f32 %v1229, 1e-12
    %v1232 = vrsqrt.pop %v1230
    %v1233 = vrsqrt.pop %v1231
    %v1234 = vmul.f32 %v1218, %v1232
    %v1235 = vmul.f32 %v1219, %v1233
    %v1237 = vlaneseq
    %v1238 = vshrl.u32 %v1237, 7
    %v1239 = vsub.s32 0, %v1238
    %v1240 = vrot.slane %v1208, %v1239
    %v1242 = vmul.f32 %v1234, %v1240
    %v1243 = vmul.f32 %v1235, %v1240
    %v1245 = vlaneseq
    %v1246 = vshrl.u32 %v1245, 7
    %v1247 = vsub.s32 0, %v1246
    %v1248 = vrot.slane %v1209, %v1247
    %v1250 = vadd.f32 %v1242, %v1248
    %v1251 = vadd.f32 %v1243, %v1248
    %v1252 = vld [vmem:[%s10] sm:$0xff]
    %v1253 = vld [vmem:[%s10 + $0x8] sm:$0xff]
    %v1254 = vld [vmem:[%s10 + $0x10] sm:$0xff]
    %v1255 = vld [vmem:[%s10 + $0x18] sm:$0xff]
    %v1256 = vld [vmem:[%s11] sm:$0x1]
    %v1258 = vlaneseq
    %v1259 = vshrl.u32 %v1258, 7
    %v1260 = vsub.s32 0, %v1259
    %v1261 = vrot.slane %v1256, %v1260
    %v1264 = vsel %vm79, %v1250, 0
    %v1267 = vsel %vm79, %v1251, 0
    %1269 = vmatprep.subr.mxu0 0.0
    %1270 = vmatpush1.msra.mxu0 0.0
    %1271 = vmatprep.subr.mxu0 0.0
    %1272 = vmatpush1.msra.mxu0 0.0
    %1273 = vmatprep.subr.mxu0 0.0
    %1274 = vmatpush1.msra.mxu0 0.0
    %1275 = vmatprep.subr.mxu0 0.0
    %1276 = vmatpush1.msra.mxu0 0.0
    %1277 = vmatprep.subr.mxu0 0.0
    %1278 = vmatpush1.msra.mxu0 0.0
    %1279 = vmatprep.subr.mxu0 0.0
    %1280 = vmatpush1.msra.mxu0 0.0
    %1281 = vmatprep.subr.mxu0 0.0
    %1282 = vmatpush1.msra.mxu0 0.0
    %1283 = vmatprep.subr.mxu0 0.0
    %1284 = vmatpush1.msra.mxu0 0.0
    %1285 = vmatprep.subr.mxu0 0.0
    %1286 = vmatpush1.msra.mxu0 0.0
    %1287 = vmatprep.subr.mxu0 0.0
    %1288 = vmatpush1.msra.mxu0 0.0
    %1289 = vmatprep.subr.mxu0 0.0
    %1290 = vmatpush1.msra.mxu0 0.0
    %1291 = vmatprep.subr.mxu0 0.0
    %1292 = vmatpush1.msra.mxu0 0.0
    %1293 = vmatprep.subr.mxu0 0.0
    %1294 = vmatpush1.msra.mxu0 %v1255
    %1295 = vmatprep.subr.mxu0 0.0
    %1296 = vmatpush1.msra.mxu0 %v1254
    %1297 = vmatprep.subr.mxu0 0.0
    %1298 = vmatpush1.msra.mxu0 %v1253
    %1299 = vmatprep.subr.mxu0 0.0
    %1300 = vmatpush1.msra.mxu0 %v1252
    %1301 = vmatprep.subr.mxu0 0.0
    %1302 = vmatpush2.msra.mxu0 0.0
    %1303 = vmatprep.subr.mxu0 0.0
    %1304 = vmatpush2.msra.mxu0 0.0
    %1305 = vmatprep.subr.mxu0 0.0
    %1306 = vmatpush2.msra.mxu0 0.0
    %1307 = vmatprep.subr.mxu0 0.0
    %1308 = vmatpush2.msra.mxu0 0.0
    %1309 = vmatprep.subr.mxu0 0.0
    %1310 = vmatpush2.msra.mxu0 0.0
    %1311 = vmatprep.subr.mxu0 0.0
    %1312 = vmatpush2.msra.mxu0 0.0
    %1313 = vmatprep.subr.mxu0 0.0
    %1314 = vmatpush2.msra.mxu0 0.0
    %1315 = vmatprep.subr.mxu0 0.0
    %1316 = vmatpush2.msra.mxu0 0.0
    %1317 = vmatprep.subr.mxu0 0.0
    %1318 = vmatpush2.msra.mxu0 0.0
    %1319 = vmatprep.subr.mxu0 0.0
    %1320 = vmatpush2.msra.mxu0 0.0
    %1321 = vmatprep.subr.mxu0 0.0
    %1322 = vmatpush2.msra.mxu0 0.0
    %1323 = vmatprep.subr.mxu0 0.0
    %1324 = vmatpush2.msra.mxu0 0.0
    %1325 = vmatprep.subr.mxu0 0.0
    %1326 = vmatpush2.msra.mxu0 0.0
    %1327 = vmatprep.subr.mxu0 0.0
    %1328 = vmatpush2.msra.mxu0 0.0
    %1329 = vmatprep.subr.mxu0 0.0
    %1330 = vmatpush2.msra.mxu0 0.0
    %1331 = vmatprep.subr.mxu0 0.0
    %1332 = vmatpush2.msra.mxu0 0.0
    %1333 = vmatprep.mubr.f32.mxu0 0.0
    %1334 = vmatmul.mubr.f32.gmra.mxu0 %v1264
    %v1335 = vpop.f32.mrf.mxu0
    %v1336 = vadd.f32 %v1261, %v1335
    %v1337 = vpop.f32.mrf.mxu0
    %1338 = vmatprep.mubr.f32.mxu0 0.0
    %1339 = vmatmul.mubr.f32.gmra.mxu0 %v1267
    %v1340 = vpop.f32.mrf.mxu0
    %v1341 = vadd.f32 %v1261, %v1340
    %v1342 = vpop.f32.mrf.mxu0
    %1343 = vdwg.mxu0
    %v1344 = vmul.f32 %v1336, 0.5
    %v1345 = vmul.f32 %v1341, 0.5
    %v1346 = vmul.f32 %v1336, 0.044715
    %v1347 = vmul.f32 %v1341, 0.044715
    %v1348 = vmul.f32 %v1346, %v1336
    %v1349 = vmul.f32 %v1347, %v1341
    %v1350 = vmul.f32 %v1348, %v1336
    %v1351 = vmul.f32 %v1349, %v1341
    %v1352 = vadd.f32 %v1336, %v1350
    %v1353 = vadd.f32 %v1341, %v1351
    %v1354 = vmul.f32 %v1352, 0.7978846
    %v1355 = vmul.f32 %v1353, 0.7978846
    %v1356 = vtanh.pop %v1354
    %v1357 = vtanh.pop %v1355
    %v1358 = vadd.f32 %v1356, 1.0
    %v1359 = vadd.f32 %v1357, 1.0
    %v1360 = vmul.f32 %v1344, %v1358
    %v1361 = vmul.f32 %v1345, %v1359
    %v1362 = vld [vmem:[%s12] sm:$0xff]
    %v1363 = vld [vmem:[%s12 + $0x8] sm:$0xff]
    %v1364 = vld [vmem:[%s12 + $0x10] sm:$0xff]
    %v1365 = vld [vmem:[%s12 + $0x18] sm:$0xff]
    %v1366 = vld [vmem:[%s12 + $0x20] sm:$0xff]
    %v1367 = vld [vmem:[%s12 + $0x28] sm:$0xff]
    %v1368 = vld [vmem:[%s12 + $0x30] sm:$0xff]
    %v1369 = vld [vmem:[%s12 + $0x38] sm:$0xff]
    %v1370 = vld [vmem:[%s13] sm:$0x1]
    %v1372 = vlaneseq
    %v1373 = vshrl.u32 %v1372, 7
    %v1374 = vsub.s32 0, %v1373
    %v1375 = vrot.slane %v1370, %v1374
    %vm1377 = vcmask 523264
    %v1379 = vsel %vm1377, %v1360, 0
    %v1382 = vsel %vm1377, %v1361, 0
    %1384 = vmatprep.subr.mxu0 0.0
    %1385 = vmatpush1.msra.mxu0 0.0
    %1386 = vmatprep.subr.mxu0 0.0
    %1387 = vmatpush1.msra.mxu0 0.0
    %1388 = vmatprep.subr.mxu0 0.0
    %1389 = vmatpush1.msra.mxu0 0.0
    %1390 = vmatprep.subr.mxu0 0.0
    %1391 = vmatpush1.msra.mxu0 0.0
    %1392 = vmatprep.subr.mxu0 0.0
    %1393 = vmatpush1.msra.mxu0 0.0
    %1394 = vmatprep.subr.mxu0 0.0
    %1395 = vmatpush1.msra.mxu0 0.0
    %1396 = vmatprep.subr.mxu0 0.0
    %1397 = vmatpush1.msra.mxu0 0.0
    %1398 = vmatprep.subr.mxu0 0.0
    %1399 = vmatpush1.msra.mxu0 0.0
    %1400 = vmatprep.subr.mxu0 0.0
    %1401 = vmatpush1.msra.mxu0 %v1369
    %1402 = vmatprep.subr.mxu0 0.0
    %1403 = vmatpush1.msra.mxu0 %v1368
    %1404 = vmatprep.subr.mxu0 0.0
    %1405 = vmatpush1.msra.mxu0 %v1367
    %1406 = vmatprep.subr.mxu0 0.0
    %1407 = vmatpush1.msra.mxu0 %v1366
    %1408 = vmatprep.subr.mxu0 0.0
    %1409 = vmatpush1.msra.mxu0 %v1365
    %1410 = vmatprep.subr.mxu0 0.0
    %1411 = vmatpush1.msra.mxu0 %v1364
    %1412 = vmatprep.subr.mxu0 0.0
    %1413 = vmatpush1.msra.mxu0 %v1363
    %1414 = vmatprep.subr.mxu0 0.0
    %1415 = vmatpush1.msra.mxu0 %v1362
    %1416 = vmatprep.subr.mxu0 0.0
    %1417 = vmatpush2.msra.mxu0 0.0
    %1418 = vmatprep.subr.mxu0 0.0
    %1419 = vmatpush2.msra.mxu0 0.0
    %1420 = vmatprep.subr.mxu0 0.0
    %1421 = vmatpush2.msra.mxu0 0.0
    %1422 = vmatprep.subr.mxu0 0.0
    %1423 = vmatpush2.msra.mxu0 0.0
    %1424 = vmatprep.subr.mxu0 0.0
    %1425 = vmatpush2.msra.mxu0 0.0
    %1426 = vmatprep.subr.mxu0 0.0
    %1427 = vmatpush2.msra.mxu0 0.0
    %1428 = vmatprep.subr.mxu0 0.0
    %1429 = vmatpush2.msra.mxu0 0.0
    %1430 = vmatprep.subr.mxu0 0.0
    %1431 = vmatpush2.msra.mxu0 0.0
    %1432 = vmatprep.subr.mxu0 0.0
    %1433 = vmatpush2.msra.mxu0 0.0
    %1434 = vmatprep.subr.mxu0 0.0
    %1435 = vmatpush2.msra.mxu0 0.0
    %1436 = vmatprep.subr.mxu0 0.0
    %1437 = vmatpush2.msra.mxu0 0.0
    %1438 = vmatprep.subr.mxu0 0.0
    %1439 = vmatpush2.msra.mxu0 0.0
    %1440 = vmatprep.subr.mxu0 0.0
    %1441 = vmatpush2.msra.mxu0 0.0
    %1442 = vmatprep.subr.mxu0 0.0
    %1443 = vmatpush2.msra.mxu0 0.0
    %1444 = vmatprep.subr.mxu0 0.0
    %1445 = vmatpush2.msra.mxu0 0.0
    %1446 = vmatprep.subr.mxu0 0.0
    %1447 = vmatpush2.msra.mxu0 0.0
    %1448 = vmatprep.mubr.f32.mxu0 0.0
    %1449 = vmatmul.mubr.f32.gmra.mxu0 %v1379
    %v1450 = vpop.f32.mrf.mxu0
    %v1451 = vadd.f32 %v1375, %v1450
    %v1452 = vpop.f32.mrf.mxu0
    %1453 = vmatprep.mubr.f32.mxu0 0.0
    %1454 = vmatmul.mubr.f32.gmra.mxu0 %v1382
    %v1455 = vpop.f32.mrf.mxu0
    %v1456 = vadd.f32 %v1375, %v1455
    %v1457 = vpop.f32.mrf.mxu0
    %1458 = vdwg.mxu0
    %v1459 = vadd.f32 %v1451, %v1250
    %v1460 = vadd.f32 %v1456, %v1251
    %v1461 = vld [vmem:[%s14] sm:$0x1]
    %v1462 = vld [vmem:[%s15] sm:$0x1]
    %v1463 = vsel %vm79, %v1459, 0.0
    %1464 = vadd.xlane.f32.xlu0 %v1463
    %v1465 = vpop.xlane.xlu0 %1464
    %v1466 = vsel %vm79, %v1460, 0.0
    %1467 = vadd.xlane.f32.xlu0 %v1466
    %v1468 = vpop.xlane.xlu0 %1467
    %v1469 = vmul.f32 %v1465, %v86
    %v1470 = vmul.f32 %v1468, %v86
    %v1471 = vsub.f32 %v1459, %v1469
    %v1472 = vsub.f32 %v1460, %v1470
    %v1473 = vmul.f32 %v1471, %v1471
    %v1474 = vmul.f32 %v1472, %v1472
    %v1475 = vsel %vm79, %v1473, 0.0
    %1476 = vadd.xlane.f32.xlu0 %v1475
    %v1477 = vpop.xlane.xlu0 %1476
    %v1478 = vsel %vm79, %v1474, 0.0
    %1479 = vadd.xlane.f32.xlu0 %v1478
    %v1480 = vpop.xlane.xlu0 %1479
    %v1481 = vmul.f32 %v1477, %v86
    %v1482 = vmul.f32 %v1480, %v86
    %v1483 = vadd.f32 %v1481, 1e-12
    %v1484 = vadd.f32 %v1482, 1e-12
    %v1485 = vrsqrt.pop %v1483
    %v1486 = vrsqrt.pop %v1484
    %v1487 = vmul.f32 %v1471, %v1485
    %v1488 = vmul.f32 %v1472, %v1486
    %v1490 = vlaneseq
    %v1491 = vshrl.u32 %v1490, 7
    %v1492 = vsub.s32 0, %v1491
    %v1493 = vrot.slane %v1461, %v1492
    %v1495 = vmul.f32 %v1487, %v1493
    %v1496 = vmul.f32 %v1488, %v1493
    %v1498 = vlaneseq
    %v1499 = vshrl.u32 %v1498, 7
    %v1500 = vsub.s32 0, %v1499
    %v1501 = vrot.slane %v1462, %v1500
    %v1503 = vadd.f32 %v1495, %v1501
    %v1504 = vadd.f32 %v1496, %v1501
    %s1505 = scalar_lea.vmem %s4, 32
    %v1506 = vld [vmem:[%s1505] sm:$0xff]
    %v1507 = vld [vmem:[%s1505 + $0x8] sm:$0xff]
    %v1508 = vld [vmem:[%s1505 + $0x10] sm:$0xff]
    %v1509 = vld [vmem:[%s1505 + $0x18] sm:$0xff]
    %s1510 = scalar_lea.vmem %s5, 1
    %v1511 = vld [vmem:[%s1510] sm:$0x1]
    %v1513 = vlaneseq
    %v1514 = vshrl.u32 %v1513, 7
    %v1515 = vsub.s32 0, %v1514
    %v1516 = vrot.slane %v1511, %v1515
    %v1519 = vsel %vm79, %v1503, 0
    %v1522 = vsel %vm79, %v1504, 0
    %1524 = vmatprep.subr.mxu0 0.0
    %1525 = vmatpush1.msra.mxu0 0.0
    %1526 = vmatprep.subr.mxu0 0.0
    %1527 = vmatpush1.msra.mxu0 0.0
    %1528 = vmatprep.subr.mxu0 0.0
    %1529 = vmatpush1.msra.mxu0 0.0
    %1530 = vmatprep.subr.mxu0 0.0
    %1531 = vmatpush1.msra.mxu0 0.0
    %1532 = vmatprep.subr.mxu0 0.0
    %1533 = vmatpush1.msra.mxu0 0.0
    %1534 = vmatprep.subr.mxu0 0.0
    %1535 = vmatpush1.msra.mxu0 0.0
    %1536 = vmatprep.subr.mxu0 0.0
    %1537 = vmatpush1.msra.mxu0 0.0
    %1538 = vmatprep.subr.mxu0 0.0
    %1539 = vmatpush1.msra.mxu0 0.0
    %1540 = vmatprep.subr.mxu0 0.0
    %1541 = vmatpush1.msra.mxu0 0.0
    %1542 = vmatprep.subr.mxu0 0.0
    %1543 = vmatpush1.msra.mxu0 0.0
    %1544 = vmatprep.subr.mxu0 0.0
    %1545 = vmatpush1.msra.mxu0 0.0
    %1546 = vmatprep.subr.mxu0 0.0
    %1547 = vmatpush1.msra.mxu0 0.0
    %1548 = vmatprep.subr.mxu0 0.0
    %1549 = vmatpush1.msra.mxu0 %v1509
    %1550 = vmatprep.subr.mxu0 0.0
    %1551 = vmatpush1.msra.mxu0 %v1508
    %1552 = vmatprep.subr.mxu0 0.0
    %1553 = vmatpush1.msra.mxu0 %v1507
    %1554 = vmatprep.subr.mxu0 0.0
    %1555 = vmatpush1.msra.mxu0 %v1506
    %1556 = vmatprep.subr.mxu0 0.0
    %1557 = vmatpush2.msra.mxu0 0.0
    %1558 = vmatprep.subr.mxu0 0.0
    %1559 = vmatpush2.msra.mxu0 0.0
    %1560 = vmatprep.subr.mxu0 0.0
    %1561 = vmatpush2.msra.mxu0 0.0
    %1562 = vmatprep.subr.mxu0 0.0
    %1563 = vmatpush2.msra.mxu0 0.0
    %1564 = vmatprep.subr.mxu0 0.0
    %1565 = vmatpush2.msra.mxu0 0.0
    %1566 = vmatprep.subr.mxu0 0.0
    %1567 = vmatpush2.msra.mxu0 0.0
    %1568 = vmatprep.subr.mxu0 0.0
    %1569 = vmatpush2.msra.mxu0 0.0
    %1570 = vmatprep.subr.mxu0 0.0
    %1571 = vmatpush2.msra.mxu0 0.0
    %1572 = vmatprep.subr.mxu0 0.0
    %1573 = vmatpush2.msra.mxu0 0.0
    %1574 = vmatprep.subr.mxu0 0.0
    %1575 = vmatpush2.msra.mxu0 0.0
    %1576 = vmatprep.subr.mxu0 0.0
    %1577 = vmatpush2.msra.mxu0 0.0
    %1578 = vmatprep.subr.mxu0 0.0
    %1579 = vmatpush2.msra.mxu0 0.0
    %1580 = vmatprep.subr.mxu0 0.0
    %1581 = vmatpush2.msra.mxu0 0.0
    %1582 = vmatprep.subr.mxu0 0.0
    %1583 = vmatpush2.msra.mxu0 0.0
    %1584 = vmatprep.subr.mxu0 0.0
    %1585 = vmatpush2.msra.mxu0 0.0
    %1586 = vmatprep.subr.mxu0 0.0
    %1587 = vmatpush2.msra.mxu0 0.0
    %1588 = vmatprep.mubr.f32.mxu0 0.0
    %1589 = vmatmul.mubr.f32.gmra.mxu0 %v1519
    %v1590 = vpop.f32.mrf.mxu0
    %v1591 = vadd.f32 %v1516, %v1590
    %v1592 = vpop.f32.mrf.mxu0
    %1593 = vmatprep.mubr.f32.mxu0 0.0
    %1594 = vmatmul.mubr.f32.gmra.mxu0 %v1522
    %v1595 = vpop.f32.mrf.mxu0
    %v1596 = vadd.f32 %v1516, %v1595
    %v1597 = vpop.f32.mrf.mxu0
    %1598 = vdwg.mxu0
    %1599 = vst.msk [vmem:[#allocation2] sm:$0xff] %vm216, %v1591
    %1600 = vst.msk [vmem:[#allocation2 + $0x8] sm:$0xff] %vm216, %v1596
    %s1601 = scalar_lea.vmem %s6, 32
    %v1602 = vld [vmem:[%s1601] sm:$0xff]
    %v1603 = vld [vmem:[%s1601 + $0x8] sm:$0xff]
    %v1604 = vld [vmem:[%s1601 + $0x10] sm:$0xff]
    %v1605 = vld [vmem:[%s1601 + $0x18] sm:$0xff]
    %v1606 = vld [vmem:[#allocation2] sm:$0xff]
    %1608 = vrot.lane.b32.xlu0 %v1606, 96
    %v1609 = vpop.permute.xlu0 %1608
    %v1610 = vsel %vm227, %v1606, 0
    %v1612 = vsel %vm227, %v1609, 0
    %1614 = vmatprep.subr.mxu0 0.0
    %1615 = vmatpush1.xpose.msra.mxu0 0.0
    %1616 = vmatprep.subr.mxu0 0.0
    %1617 = vmatpush1.xpose.msra.mxu0 0.0
    %1618 = vmatprep.subr.mxu0 0.0
    %1619 = vmatpush1.xpose.msra.mxu0 0.0
    %1620 = vmatprep.subr.mxu0 0.0
    %1621 = vmatpush1.xpose.msra.mxu0 0.0
    %1622 = vmatprep.subr.mxu0 0.0
    %1623 = vmatpush1.xpose.msra.mxu0 0.0
    %1624 = vmatprep.subr.mxu0 0.0
    %1625 = vmatpush1.xpose.msra.mxu0 0.0
    %1626 = vmatprep.subr.mxu0 0.0
    %1627 = vmatpush1.xpose.msra.mxu0 0.0
    %1628 = vmatprep.subr.mxu0 0.0
    %1629 = vmatpush1.xpose.msra.mxu0 0.0
    %1630 = vmatprep.subr.mxu0 0.0
    %1631 = vmatpush1.xpose.msra.mxu0 0.0
    %1632 = vmatprep.subr.mxu0 0.0
    %1633 = vmatpush1.xpose.msra.mxu0 0.0
    %1634 = vmatprep.subr.mxu0 0.0
    %1635 = vmatpush1.xpose.msra.mxu0 0.0
    %1636 = vmatprep.subr.mxu0 0.0
    %1637 = vmatpush1.xpose.msra.mxu0 0.0
    %1638 = vmatprep.subr.mxu0 0.0
    %1639 = vmatpush1.xpose.msra.mxu0 0.0
    %1640 = vmatprep.subr.mxu0 0.0
    %1641 = vmatpush1.xpose.msra.mxu0 0.0
    %1642 = vmatprep.subr.mxu0 0.0
    %1643 = vmatpush1.xpose.msra.mxu0 0.0
    %1644 = vmatprep.subr.mxu0 0.0
    %1645 = vmatpush1.xpose.msra.mxu0 %v1612
    %1646 = vmatprep.subr.mxu0 0.0
    %1647 = vmatpush2.xpose.msra.mxu0 0.0
    %1648 = vmatprep.subr.mxu0 0.0
    %1649 = vmatpush2.xpose.msra.mxu0 0.0
    %1650 = vmatprep.subr.mxu0 0.0
    %1651 = vmatpush2.xpose.msra.mxu0 0.0
    %1652 = vmatprep.subr.mxu0 0.0
    %1653 = vmatpush2.xpose.msra.mxu0 0.0
    %1654 = vmatprep.subr.mxu0 0.0
    %1655 = vmatpush2.xpose.msra.mxu0 0.0
    %1656 = vmatprep.subr.mxu0 0.0
    %1657 = vmatpush2.xpose.msra.mxu0 0.0
    %1658 = vmatprep.subr.mxu0 0.0
    %1659 = vmatpush2.xpose.msra.mxu0 0.0
    %1660 = vmatprep.subr.mxu0 0.0
    %1661 = vmatpush2.xpose.msra.mxu0 0.0
    %1662 = vmatprep.subr.mxu0 0.0
    %1663 = vmatpush2.xpose.msra.mxu0 0.0
    %1664 = vmatprep.subr.mxu0 0.0
    %1665 = vmatpush2.xpose.msra.mxu0 0.0
    %1666 = vmatprep.subr.mxu0 0.0
    %1667 = vmatpush2.xpose.msra.mxu0 0.0
    %1668 = vmatprep.subr.mxu0 0.0
    %1669 = vmatpush2.xpose.msra.mxu0 0.0
    %1670 = vmatprep.subr.mxu0 0.0
    %1671 = vmatpush2.xpose.msra.mxu0 0.0
    %1672 = vmatprep.subr.mxu0 0.0
    %1673 = vmatpush2.xpose.msra.mxu0 0.0
    %1674 = vmatprep.subr.mxu0 0.0
    %1675 = vmatpush2.xpose.msra.mxu0 0.0
    %1676 = vmatprep.subr.mxu0 0.0
    %1677 = vmatpush2.xpose.msra.mxu0 0.0
    %1678 = vmatprep.mubr.f32.mxu0 0.0
    %1679 = vmatmul.mubr.f32.gmra.mxu0 %v1610
    %v1680 = vpop.f32.mrf.mxu0
    %v1681 = vadd.f32 0.0, %v1680
    %v1682 = vpop.f32.mrf.mxu0
    %1683 = vdwg.mxu0
    %v1684 = vmul.f32 %v1681, 0.25
    %v1685 = vadd.f32 %v1684, %v306
    %v1686 = vsel %vm308, %v1685, -inf
    %1687 = vmax.xlane.f32.xlu0 %v1686
    %v1688 = vpop.xlane.xlu0 %1687
    %v1689 = vsub.f32 %v1685, %v1688
    %v1690 = vmul.f32 %v1689, 1.442695
    %v1691 = vpow.pop %v1690
    %v1692 = vsel %vm308, %v1691, 0.0
    %1693 = vadd.xlane.f32.xlu0 %v1692
    %v1694 = vpop.xlane.xlu0 %1693
    %v1695 = vrcp.pop %v1694
    %v1696 = vmul.f32 %v1691, %v1695
    %1697 = vrot.lane.b32.xlu0 %v1606, 64
    %v1698 = vpop.permute.xlu0 %1697
    %v1701 = vsel %vm308, %v1696, 0
    %1703 = vmatprep.subr.mxu0 0.0
    %1704 = vmatpush1.msra.mxu0 0.0
    %1705 = vmatprep.subr.mxu0 0.0
    %1706 = vmatpush1.msra.mxu0 0.0
    %1707 = vmatprep.subr.mxu0 0.0
    %1708 = vmatpush1.msra.mxu0 0.0
    %1709 = vmatprep.subr.mxu0 0.0
    %1710 = vmatpush1.msra.mxu0 0.0
    %1711 = vmatprep.subr.mxu0 0.0
    %1712 = vmatpush1.msra.mxu0 0.0
    %1713 = vmatprep.subr.mxu0 0.0
    %1714 = vmatpush1.msra.mxu0 0.0
    %1715 = vmatprep.subr.mxu0 0.0
    %1716 = vmatpush1.msra.mxu0 0.0
    %1717 = vmatprep.subr.mxu0 0.0
    %1718 = vmatpush1.msra.mxu0 0.0
    %1719 = vmatprep.subr.mxu0 0.0
    %1720 = vmatpush1.msra.mxu0 0.0
    %1721 = vmatprep.subr.mxu0 0.0
    %1722 = vmatpush1.msra.mxu0 0.0
    %1723 = vmatprep.subr.mxu0 0.0
    %1724 = vmatpush1.msra.mxu0 0.0
    %1725 = vmatprep.subr.mxu0 0.0
    %1726 = vmatpush1.msra.mxu0 0.0
    %1727 = vmatprep.subr.mxu0 0.0
    %1728 = vmatpush1.msra.mxu0 0.0
    %1729 = vmatprep.subr.mxu0 0.0
    %1730 = vmatpush1.msra.mxu0 0.0
    %1731 = vmatprep.subr.mxu0 0.0
    %1732 = vmatpush1.msra.mxu0 0.0
    %1733 = vmatprep.subr.mxu0 0.0
    %1734 = vmatpush1.msra.mxu0 %v1698
    %1735 = vmatprep.subr.mxu0 0.0
    %1736 = vmatpush2.msra.mxu0 0.0
    %1737 = vmatprep.subr.mxu0 0.0
    %1738 = vmatpush2.msra.mxu0 0.0
    %1739 = vmatprep.subr.mxu0 0.0
    %1740 = vmatpush2.msra.mxu0 0.0
    %1741 = vmatprep.subr.mxu0 0.0
    %1742 = vmatpush2.msra.mxu0 0.0
    %1743 = vmatprep.subr.mxu0 0.0
    %1744 = vmatpush2.msra.mxu0 0.0
    %1745 = vmatprep.subr.mxu0 0.0
    %1746 = vmatpush2.msra.mxu0 0.0
    %1747 = vmatprep.subr.mxu0 0.0
    %1748 = vmatpush2.msra.mxu0 0.0
    %1749 = vmatprep.subr.mxu0 0.0
    %1750 = vmatpush2.msra.mxu0 0.0
    %1751 = vmatprep.subr.mxu0 0.0
    %1752 = vmatpush2.msra.mxu0 0.0
    %1753 = vmatprep.subr.mxu0 0.0
    %1754 = vmatpush2.msra.mxu0 0.0
    %1755 = vmatprep.subr.mxu0 0.0
    %1756 = vmatpush2.msra.mxu0 0.0
    %1757 = vmatprep.subr.mxu0 0.0
    %1758 = vmatpush2.msra.mxu0 0.0
    %1759 = vmatprep.subr.mxu0 0.0
    %1760 = vmatpush2.msra.mxu0 0.0
    %1761 = vmatprep.subr.mxu0 0.0
    %1762 = vmatpush2.msra.mxu0 0.0
    %1763 = vmatprep.subr.mxu0 0.0
    %1764 = vmatpush2.msra.mxu0 0.0
    %1765 = vmatprep.subr.mxu0 0.0
    %1766 = vmatpush2.msra.mxu0 0.0
    %1767 = vmatprep.mubr.f32.mxu0 0.0
    %1768 = vmatmul.mubr.f32.gmra.mxu0 %v1701
    %v1769 = vpop.f32.mrf.mxu0
    %v1770 = vadd.f32 0.0, %v1769
    %v1771 = vpop.f32.mrf.mxu0
    %1772 = vdwg.mxu0
    %1773 = vrot.lane.b32.xlu0 %v1606, 112
    %v1774 = vpop.permute.xlu0 %1773
    %1775 = vrot.lane.b32.xlu0 %v1606, 80
    %v1776 = vpop.permute.xlu0 %1775
    %v1777 = vsel %vm227, %v1774, 0
    %v1779 = vsel %vm227, %v1776, 0
    %1781 = vmatprep.subr.mxu0 0.0
    %1782 = vmatpush1.xpose.msra.mxu0 0.0
    %1783 = vmatprep.subr.mxu0 0.0
    %1784 = vmatpush1.xpose.msra.mxu0 0.0
    %1785 = vmatprep.subr.mxu0 0.0
    %1786 = vmatpush1.xpose.msra.mxu0 0.0
    %1787 = vmatprep.subr.mxu0 0.0
    %1788 = vmatpush1.xpose.msra.mxu0 0.0
    %1789 = vmatprep.subr.mxu0 0.0
    %1790 = vmatpush1.xpose.msra.mxu0 0.0
    %1791 = vmatprep.subr.mxu0 0.0
    %1792 = vmatpush1.xpose.msra.mxu0 0.0
    %1793 = vmatprep.subr.mxu0 0.0
    %1794 = vmatpush1.xpose.msra.mxu0 0.0
    %1795 = vmatprep.subr.mxu0 0.0
    %1796 = vmatpush1.xpose.msra.mxu0 0.0
    %1797 = vmatprep.subr.mxu0 0.0
    %1798 = vmatpush1.xpose.msra.mxu0 0.0
    %1799 = vmatprep.subr.mxu0 0.0
    %1800 = vmatpush1.xpose.msra.mxu0 0.0
    %1801 = vmatprep.subr.mxu0 0.0
    %1802 = vmatpush1.xpose.msra.mxu0 0.0
    %1803 = vmatprep.subr.mxu0 0.0
    %1804 = vmatpush1.xpose.msra.mxu0 0.0
    %1805 = vmatprep.subr.mxu0 0.0
    %1806 = vmatpush1.xpose.msra.mxu0 0.0
    %1807 = vmatprep.subr.mxu0 0.0
    %1808 = vmatpush1.xpose.msra.mxu0 0.0
    %1809 = vmatprep.subr.mxu0 0.0
    %1810 = vmatpush1.xpose.msra.mxu0 0.0
    %1811 = vmatprep.subr.mxu0 0.0
    %1812 = vmatpush1.xpose.msra.mxu0 %v1779
    %1813 = vmatprep.subr.mxu0 0.0
    %1814 = vmatpush2.xpose.msra.mxu0 0.0
    %1815 = vmatprep.subr.mxu0 0.0
    %1816 = vmatpush2.xpose.msra.mxu0 0.0
    %1817 = vmatprep.subr.mxu0 0.0
    %1818 = vmatpush2.xpose.msra.mxu0 0.0
    %1819 = vmatprep.subr.mxu0 0.0
    %1820 = vmatpush2.xpose.msra.mxu0 0.0
    %1821 = vmatprep.subr.mxu0 0.0
    %1822 = vmatpush2.xpose.msra.mxu0 0.0
    %1823 = vmatprep.subr.mxu0 0.0
    %1824 = vmatpush2.xpose.msra.mxu0 0.0
    %1825 = vmatprep.subr.mxu0 0.0
    %1826 = vmatpush2.xpose.msra.mxu0 0.0
    %1827 = vmatprep.subr.mxu0 0.0
    %1828 = vmatpush2.xpose.msra.mxu0 0.0
    %1829 = vmatprep.subr.mxu0 0.0
    %1830 = vmatpush2.xpose.msra.mxu0 0.0
    %1831 = vmatprep.subr.mxu0 0.0
    %1832 = vmatpush2.xpose.msra.mxu0 0.0
    %1833 = vmatprep.subr.mxu0 0.0
    %1834 = vmatpush2.xpose.msra.mxu0 0.0
    %1835 = vmatprep.subr.mxu0 0.0
    %1836 = vmatpush2.xpose.msra.mxu0 0.0
    %1837 = vmatprep.subr.mxu0 0.0
    %1838 = vmatpush2.xpose.msra.mxu0 0.0
    %1839 = vmatprep.subr.mxu0 0.0
    %1840 = vmatpush2.xpose.msra.mxu0 0.0
    %1841 = vmatprep.subr.mxu0 0.0
    %1842 = vmatpush2.xpose.msra.mxu0 0.0
    %1843 = vmatprep.subr.mxu0 0.0
    %1844 = vmatpush2.xpose.msra.mxu0 0.0
    %1845 = vmatprep.mubr.f32.mxu0 0.0
    %1846 = vmatmul.mubr.f32.gmra.mxu0 %v1777
    %v1847 = vpop.f32.mrf.mxu0
    %v1848 = vadd.f32 0.0, %v1847
    %v1849 = vpop.f32.mrf.mxu0
    %1850 = vdwg.mxu0
    %v1851 = vmul.f32 %v1848, 0.25
    %v1852 = vadd.f32 %v1851, %v306
    %v1853 = vsel %vm308, %v1852, -inf
    %1854 = vmax.xlane.f32.xlu0 %v1853
    %v1855 = vpop.xlane.xlu0 %1854
    %v1856 = vsub.f32 %v1852, %v1855
    %v1857 = vmul.f32 %v1856, 1.442695
    %v1858 = vpow.pop %v1857
    %v1859 = vsel %vm308, %v1858, 0.0
    %1860 = vadd.xlane.f32.xlu0 %v1859
    %v1861 = vpop.xlane.xlu0 %1860
    %v1862 = vrcp.pop %v1861
    %v1863 = vmul.f32 %v1858, %v1862
    %1864 = vrot.lane.b32.xlu0 %v1606, 48
    %v1865 = vpop.permute.xlu0 %1864
    %v1868 = vsel %vm308, %v1863, 0
    %1870 = vmatprep.subr.mxu0 0.0
    %1871 = vmatpush1.msra.mxu0 0.0
    %1872 = vmatprep.subr.mxu0 0.0
    %1873 = vmatpush1.msra.mxu0 0.0
    %1874 = vmatprep.subr.mxu0 0.0
    %1875 = vmatpush1.msra.mxu0 0.0
    %1876 = vmatprep.subr.mxu0 0.0
    %1877 = vmatpush1.msra.mxu0 0.0
    %1878 = vmatprep.subr.mxu0 0.0
    %1879 = vmatpush1.msra.mxu0 0.0
    %1880 = vmatprep.subr.mxu0 0.0
    %1881 = vmatpush1.msra.mxu0 0.0
    %1882 = vmatprep.subr.mxu0 0.0
    %1883 = vmatpush1.msra.mxu0 0.0
    %1884 = vmatprep.subr.mxu0 0.0
    %1885 = vmatpush1.msra.mxu0 0.0
    %1886 = vmatprep.subr.mxu0 0.0
    %1887 = vmatpush1.msra.mxu0 0.0
    %1888 = vmatprep.subr.mxu0 0.0
    %1889 = vmatpush1.msra.mxu0 0.0
    %1890 = vmatprep.subr.mxu0 0.0
    %1891 = vmatpush1.msra.mxu0 0.0
    %1892 = vmatprep.subr.mxu0 0.0
    %1893 = vmatpush1.msra.mxu0 0.0
    %1894 = vmatprep.subr.mxu0 0.0
    %1895 = vmatpush1.msra.mxu0 0.0
    %1896 = vmatprep.subr.mxu0 0.0
    %1897 = vmatpush1.msra.mxu0 0.0
    %1898 = vmatprep.subr.mxu0 0.0
    %1899 = vmatpush1.msra.mxu0 0.0
    %1900 = vmatprep.subr.mxu0 0.0
    %1901 = vmatpush1.msra.mxu0 %v1865
    %1902 = vmatprep.subr.mxu0 0.0
    %1903 = vmatpush2.msra.mxu0 0.0
    %1904 = vmatprep.subr.mxu0 0.0
    %1905 = vmatpush2.msra.mxu0 0.0
    %1906 = vmatprep.subr.mxu0 0.0
    %1907 = vmatpush2.msra.mxu0 0.0
    %1908 = vmatprep.subr.mxu0 0.0
    %1909 = vmatpush2.msra.mxu0 0.0
    %1910 = vmatprep.subr.mxu0 0.0
    %1911 = vmatpush2.msra.mxu0 0.0
    %1912 = vmatprep.subr.mxu0 0.0
    %1913 = vmatpush2.msra.mxu0 0.0
    %1914 = vmatprep.subr.mxu0 0.0
    %1915 = vmatpush2.msra.mxu0 0.0
    %1916 = vmatprep.subr.mxu0 0.0
    %1917 = vmatpush2.msra.mxu0 0.0
    %1918 = vmatprep.subr.mxu0 0.0
    %1919 = vmatpush2.msra.mxu0 0.0
    %1920 = vmatprep.subr.mxu0 0.0
    %1921 = vmatpush2.msra.mxu0 0.0
    %1922 = vmatprep.subr.mxu0 0.0
    %1923 = vmatpush2.msra.mxu0 0.0
    %1924 = vmatprep.subr.mxu0 0.0
    %1925 = vmatpush2.msra.mxu0 0.0
    %1926 = vmatprep.subr.mxu0 0.0
    %1927 = vmatpush2.msra.mxu0 0.0
    %1928 = vmatprep.subr.mxu0 0.0
    %1929 = vmatpush2.msra.mxu0 0.0
    %1930 = vmatprep.subr.mxu0 0.0
    %1931 = vmatpush2.msra.mxu0 0.0
    %1932 = vmatprep.subr.mxu0 0.0
    %1933 = vmatpush2.msra.mxu0 0.0
    %1934 = vmatprep.mubr.f32.mxu0 0.0
    %1935 = vmatmul.mubr.f32.gmra.mxu0 %v1868
    %v1936 = vpop.f32.mrf.mxu0
    %v1937 = vadd.f32 0.0, %v1936
    %v1938 = vpop.f32.mrf.mxu0
    %1939 = vdwg.mxu0
    %v1941 = vsel %vm227, %v1937, 0
    %1943 = vmatprep.subr.mxu0 0.0
    %1944 = vmatpush1.msra.mxu0 0.0
    %1945 = vmatprep.subr.mxu0 0.0
    %1946 = vmatpush1.msra.mxu0 0.0
    %1947 = vmatprep.subr.mxu0 0.0
    %1948 = vmatpush1.msra.mxu0 0.0
    %1949 = vmatprep.subr.mxu0 0.0
    %1950 = vmatpush1.msra.mxu0 0.0
    %1951 = vmatprep.subr.mxu0 0.0
    %1952 = vmatpush1.msra.mxu0 0.0
    %1953 = vmatprep.subr.mxu0 0.0
    %1954 = vmatpush1.msra.mxu0 0.0
    %1955 = vmatprep.subr.mxu0 0.0
    %1956 = vmatpush1.msra.mxu0 0.0
    %1957 = vmatprep.subr.mxu0 0.0
    %1958 = vmatpush1.msra.mxu0 0.0
    %1959 = vmatprep.subr.mxu0 0.0
    %1960 = vmatpush1.msra.mxu0 0.0
    %1961 = vmatprep.subr.mxu0 0.0
    %1962 = vmatpush1.msra.mxu0 0.0
    %1963 = vmatprep.subr.mxu0 0.0
    %1964 = vmatpush1.msra.mxu0 0.0
    %1965 = vmatprep.subr.mxu0 0.0
    %1966 = vmatpush1.msra.mxu0 0.0
    %1967 = vmatprep.subr.mxu0 0.0
    %1968 = vmatpush1.msra.mxu0 0.0
    %1969 = vmatprep.subr.mxu0 0.0
    %1970 = vmatpush1.msra.mxu0 0.0
    %1971 = vmatprep.subr.mxu0 0.0
    %1972 = vmatpush1.msra.mxu0 %v1605
    %1973 = vmatprep.subr.mxu0 0.0
    %1974 = vmatpush1.msra.mxu0 %v1604
    %1975 = vmatprep.subr.mxu0 0.0
    %1976 = vmatpush2.msra.mxu0 0.0
    %1977 = vmatprep.subr.mxu0 0.0
    %1978 = vmatpush2.msra.mxu0 0.0
    %1979 = vmatprep.subr.mxu0 0.0
    %1980 = vmatpush2.msra.mxu0 0.0
    %1981 = vmatprep.subr.mxu0 0.0
    %1982 = vmatpush2.msra.mxu0 0.0
    %1983 = vmatprep.subr.mxu0 0.0
    %1984 = vmatpush2.msra.mxu0 0.0
    %1985 = vmatprep.subr.mxu0 0.0
    %1986 = vmatpush2.msra.mxu0 0.0
    %1987 = vmatprep.subr.mxu0 0.0
    %1988 = vmatpush2.msra.mxu0 0.0
    %1989 = vmatprep.subr.mxu0 0.0
    %1990 = vmatpush2.msra.mxu0 0.0
    %1991 = vmatprep.subr.mxu0 0.0
    %1992 = vmatpush2.msra.mxu0 0.0
    %1993 = vmatprep.subr.mxu0 0.0
    %1994 = vmatpush2.msra.mxu0 0.0
    %1995 = vmatprep.subr.mxu0 0.0
    %1996 = vmatpush2.msra.mxu0 0.0
    %1997 = vmatprep.subr.mxu0 0.0
    %1998 = vmatpush2.msra.mxu0 0.0
    %1999 = vmatprep.subr.mxu0 0.0
    %2000 = vmatpush2.msra.mxu0 0.0
    %2001 = vmatprep.subr.mxu0 0.0
    %2002 = vmatpush2.msra.mxu0 0.0
    %2003 = vmatprep.subr.mxu0 0.0
    %2004 = vmatpush2.msra.mxu0 0.0
    %2005 = vmatprep.subr.mxu0 0.0
    %2006 = vmatpush2.msra.mxu0 0.0
    %2007 = vmatprep.mubr.f32.mxu0 0.0
    %2008 = vmatmul.mubr.f32.gmra.mxu0 %v1941
    %v2009 = vpop.f32.mrf.mxu0
    %v2010 = vadd.f32 0.0, %v2009
    %v2011 = vpop.f32.mrf.mxu0
    %2012 = vdwg.mxu0
    %v2014 = vsel %vm227, %v1770, 0
    %2016 = vmatprep.subr.mxu0 0.0
    %2017 = vmatpush1.msra.mxu0 0.0
    %2018 = vmatprep.subr.mxu0 0.0
    %2019 = vmatpush1.msra.mxu0 0.0
    %2020 = vmatprep.subr.mxu0 0.0
    %2021 = vmatpush1.msra.mxu0 0.0
    %2022 = vmatprep.subr.mxu0 0.0
    %2023 = vmatpush1.msra.mxu0 0.0
    %2024 = vmatprep.subr.mxu0 0.0
    %2025 = vmatpush1.msra.mxu0 0.0
    %2026 = vmatprep.subr.mxu0 0.0
    %2027 = vmatpush1.msra.mxu0 0.0
    %2028 = vmatprep.subr.mxu0 0.0
    %2029 = vmatpush1.msra.mxu0 0.0
    %2030 = vmatprep.subr.mxu0 0.0
    %2031 = vmatpush1.msra.mxu0 0.0
    %2032 = vmatprep.subr.mxu0 0.0
    %2033 = vmatpush1.msra.mxu0 0.0
    %2034 = vmatprep.subr.mxu0 0.0
    %2035 = vmatpush1.msra.mxu0 0.0
    %2036 = vmatprep.subr.mxu0 0.0
    %2037 = vmatpush1.msra.mxu0 0.0
    %2038 = vmatprep.subr.mxu0 0.0
    %2039 = vmatpush1.msra.mxu0 0.0
    %2040 = vmatprep.subr.mxu0 0.0
    %2041 = vmatpush1.msra.mxu0 0.0
    %2042 = vmatprep.subr.mxu0 0.0
    %2043 = vmatpush1.msra.mxu0 0.0
    %2044 = vmatprep.subr.mxu0 0.0
    %2045 = vmatpush1.msra.mxu0 %v1603
    %2046 = vmatprep.subr.mxu0 0.0
    %2047 = vmatpush1.msra.mxu0 %v1602
    %2048 = vmatprep.subr.mxu0 0.0
    %2049 = vmatpush2.msra.mxu0 0.0
    %2050 = vmatprep.subr.mxu0 0.0
    %2051 = vmatpush2.msra.mxu0 0.0
    %2052 = vmatprep.subr.mxu0 0.0
    %2053 = vmatpush2.msra.mxu0 0.0
    %2054 = vmatprep.subr.mxu0 0.0
    %2055 = vmatpush2.msra.mxu0 0.0
    %2056 = vmatprep.subr.mxu0 0.0
    %2057 = vmatpush2.msra.mxu0 0.0
    %2058 = vmatprep.subr.mxu0 0.0
    %2059 = vmatpush2.msra.mxu0 0.0
    %2060 = vmatprep.subr.mxu0 0.0
    %2061 = vmatpush2.msra.mxu0 0.0
    %2062 = vmatprep.subr.mxu0 0.0
    %2063 = vmatpush2.msra.mxu0 0.0
    %2064 = vmatprep.subr.mxu0 0.0
    %2065 = vmatpush2.msra.mxu0 0.0
    %2066 = vmatprep.subr.mxu0 0.0
    %2067 = vmatpush2.msra.mxu0 0.0
    %2068 = vmatprep.subr.mxu0 0.0
    %2069 = vmatpush2.msra.mxu0 0.0
    %2070 = vmatprep.subr.mxu0 0.0
    %2071 = vmatpush2.msra.mxu0 0.0
    %2072 = vmatprep.subr.mxu0 0.0
    %2073 = vmatpush2.msra.mxu0 0.0
    %2074 = vmatprep.subr.mxu0 0.0
    %2075 = vmatpush2.msra.mxu0 0.0
    %2076 = vmatprep.subr.mxu0 0.0
    %2077 = vmatpush2.msra.mxu0 0.0
    %2078 = vmatprep.subr.mxu0 0.0
    %2079 = vmatpush2.msra.mxu0 0.0
    %2080 = vmatprep.mubr.f32.mxu0 0.0
    %2081 = vmatmul.mubr.f32.gmra.mxu0 %v2014
    %v2082 = vpop.f32.mrf.mxu0
    %v2083 = vadd.f32 %v2010, %v2082
    %v2084 = vpop.f32.mrf.mxu0
    %2085 = vdwg.mxu0
    %2086 = vst.msk [vmem:[#allocation3] sm:$0xff] %vm79, %v2083
    %v2087 = vld [vmem:[#allocation2 + $0x8] sm:$0xff]
    %2089 = vrot.lane.b32.xlu0 %v2087, 96
    %v2090 = vpop.permute.xlu0 %2089
    %v2091 = vsel %vm227, %v2087, 0
    %v2093 = vsel %vm227, %v2090, 0
    %2095 = vmatprep.subr.mxu0 0.0
    %2096 = vmatpush1.xpose.msra.mxu0 0.0
    %2097 = vmatprep.subr.mxu0 0.0
    %2098 = vmatpush1.xpose.msra.mxu0 0.0
    %2099 = vmatprep.subr.mxu0 0.0
    %2100 = vmatpush1.xpose.msra.mxu0 0.0
    %2101 = vmatprep.subr.mxu0 0.0
    %2102 = vmatpush1.xpose.msra.mxu0 0.0
    %2103 = vmatprep.subr.mxu0 0.0
    %2104 = vmatpush1.xpose.msra.mxu0 0.0
    %2105 = vmatprep.subr.mxu0 0.0
    %2106 = vmatpush1.xpose.msra.mxu0 0.0
    %2107 = vmatprep.subr.mxu0 0.0
    %2108 = vmatpush1.xpose.msra.mxu0 0.0
    %2109 = vmatprep.subr.mxu0 0.0
    %2110 = vmatpush1.xpose.msra.mxu0 0.0
    %2111 = vmatprep.subr.mxu0 0.0
    %2112 = vmatpush1.xpose.msra.mxu0 0.0
    %2113 = vmatprep.subr.mxu0 0.0
    %2114 = vmatpush1.xpose.msra.mxu0 0.0
    %2115 = vmatprep.subr.mxu0 0.0
    %2116 = vmatpush1.xpose.msra.mxu0 0.0
    %2117 = vmatprep.subr.mxu0 0.0
    %2118 = vmatpush1.xpose.msra.mxu0 0.0
    %2119 = vmatprep.subr.mxu0 0.0
    %2120 = vmatpush1.xpose.msra.mxu0 0.0
    %2121 = vmatprep.subr.mxu0 0.0
    %2122 = vmatpush1.xpose.msra.mxu0 0.0
    %2123 = vmatprep.subr.mxu0 0.0
    %2124 = vmatpush1.xpose.msra.mxu0 0.0
    %2125 = vmatprep.subr.mxu0 0.0
    %2126 = vmatpush1.xpose.msra.mxu0 %v2093
    %2127 = vmatprep.subr.mxu0 0.0
    %2128 = vmatpush2.xpose.msra.mxu0 0.0
    %2129 = vmatprep.subr.mxu0 0.0
    %2130 = vmatpush2.xpose.msra.mxu0 0.0
    %2131 = vmatprep.subr.mxu0 0.0
    %2132 = vmatpush2.xpose.msra.mxu0 0.0
    %2133 = vmatprep.subr.mxu0 0.0
    %2134 = vmatpush2.xpose.msra.mxu0 0.0
    %2135 = vmatprep.subr.mxu0 0.0
    %2136 = vmatpush2.xpose.msra.mxu0 0.0
    %2137 = vmatprep.subr.mxu0 0.0
    %2138 = vmatpush2.xpose.msra.mxu0 0.0
    %2139 = vmatprep.subr.mxu0 0.0
    %2140 = vmatpush2.xpose.msra.mxu0 0.0
    %2141 = vmatprep.subr.mxu0 0.0
    %2142 = vmatpush2.xpose.msra.mxu0 0.0
    %2143 = vmatprep.subr.mxu0 0.0
    %2144 = vmatpush2.xpose.msra.mxu0 0.0
    %2145 = vmatprep.subr.mxu0 0.0
    %2146 = vmatpush2.xpose.msra.mxu0 0.0
    %2147 = vmatprep.subr.mxu0 0.0
    %2148 = vmatpush2.xpose.msra.mxu0 0.0
    %2149 = vmatprep.subr.mxu0 0.0
    %2150 = vmatpush2.xpose.msra.mxu0 0.0
    %2151 = vmatprep.subr.mxu0 0.0
    %2152 = vmatpush2.xpose.msra.mxu0 0.0
    %2153 = vmatprep.subr.mxu0 0.0
    %2154 = vmatpush2.xpose.msra.mxu0 0.0
    %2155 = vmatprep.subr.mxu0 0.0
    %2156 = vmatpush2.xpose.msra.mxu0 0.0
    %2157 = vmatprep.subr.mxu0 0.0
    %2158 = vmatpush2.xpose.msra.mxu0 0.0
    %2159 = vmatprep.mubr.f32.mxu0 0.0
    %2160 = vmatmul.mubr.f32.gmra.mxu0 %v2091
    %v2161 = vpop.f32.mrf.mxu0
    %v2162 = vadd.f32 0.0, %v2161
    %v2163 = vpop.f32.mrf.mxu0
    %2164 = vdwg.mxu0
    %v2165 = vmul.f32 %v2162, 0.25
    %v2166 = vadd.f32 %v2165, %v792
    %v2167 = vsel %vm308, %v2166, -inf
    %2168 = vmax.xlane.f32.xlu0 %v2167
    %v2169 = vpop.xlane.xlu0 %2168
    %v2170 = vsub.f32 %v2166, %v2169
    %v2171 = vmul.f32 %v2170, 1.442695
    %v2172 = vpow.pop %v2171
    %v2173 = vsel %vm308, %v2172, 0.0
    %2174 = vadd.xlane.f32.xlu0 %v2173
    %v2175 = vpop.xlane.xlu0 %2174
    %v2176 = vrcp.pop %v2175
    %v2177 = vmul.f32 %v2172, %v2176
    %2178 = vrot.lane.b32.xlu0 %v2087, 64
    %v2179 = vpop.permute.xlu0 %2178
    %v2182 = vsel %vm308, %v2177, 0
    %2184 = vmatprep.subr.mxu0 0.0
    %2185 = vmatpush1.msra.mxu0 0.0
    %2186 = vmatprep.subr.mxu0 0.0
    %2187 = vmatpush1.msra.mxu0 0.0
    %2188 = vmatprep.subr.mxu0 0.0
    %2189 = vmatpush1.msra.mxu0 0.0
    %2190 = vmatprep.subr.mxu0 0.0
    %2191 = vmatpush1.msra.mxu0 0.0
    %2192 = vmatprep.subr.mxu0 0.0
    %2193 = vmatpush1.msra.mxu0 0.0
    %2194 = vmatprep.subr.mxu0 0.0
    %2195 = vmatpush1.msra.mxu0 0.0
    %2196 = vmatprep.subr.mxu0 0.0
    %2197 = vmatpush1.msra.mxu0 0.0
    %2198 = vmatprep.subr.mxu0 0.0
    %2199 = vmatpush1.msra.mxu0 0.0
    %2200 = vmatprep.subr.mxu0 0.0
    %2201 = vmatpush1.msra.mxu0 0.0
    %2202 = vmatprep.subr.mxu0 0.0
    %2203 = vmatpush1.msra.mxu0 0.0
    %2204 = vmatprep.subr.mxu0 0.0
    %2205 = vmatpush1.msra.mxu0 0.0
    %2206 = vmatprep.subr.mxu0 0.0
    %2207 = vmatpush1.msra.mxu0 0.0
    %2208 = vmatprep.subr.mxu0 0.0
    %2209 = vmatpush1.msra.mxu0 0.0
    %2210 = vmatprep.subr.mxu0 0.0
    %2211 = vmatpush1.msra.mxu0 0.0
    %2212 = vmatprep.subr.mxu0 0.0
    %2213 = vmatpush1.msra.mxu0 0.0
    %2214 = vmatprep.subr.mxu0 0.0
    %2215 = vmatpush1.msra.mxu0 %v2179
    %2216 = vmatprep.subr.mxu0 0.0
    %2217 = vmatpush2.msra.mxu0 0.0
    %2218 = vmatprep.subr.mxu0 0.0
    %2219 = vmatpush2.msra.mxu0 0.0
    %2220 = vmatprep.subr.mxu0 0.0
    %2221 = vmatpush2.msra.mxu0 0.0
    %2222 = vmatprep.subr.mxu0 0.0
    %2223 = vmatpush2.msra.mxu0 0.0
    %2224 = vmatprep.subr.mxu0 0.0
    %2225 = vmatpush2.msra.mxu0 0.0
    %2226 = vmatprep.subr.mxu0 0.0
    %2227 = vmatpush2.msra.mxu0 0.0
    %2228 = vmatprep.subr.mxu0 0.0
    %2229 = vmatpush2.msra.mxu0 0.0
    %2230 = vmatprep.subr.mxu0 0.0
    %2231 = vmatpush2.msra.mxu0 0.0
    %2232 = vmatprep.subr.mxu0 0.0
    %2233 = vmatpush2.msra.mxu0 0.0
    %2234 = vmatprep.subr.mxu0 0.0
    %2235 = vmatpush2.msra.mxu0 0.0
    %2236 = vmatprep.subr.mxu0 0.0
    %2237 = vmatpush2.msra.mxu0 0.0
    %2238 = vmatprep.subr.mxu0 0.0
    %2239 = vmatpush2.msra.mxu0 0.0
    %2240 = vmatprep.subr.mxu0 0.0
    %2241 = vmatpush2.msra.mxu0 0.0
    %2242 = vmatprep.subr.mxu0 0.0
    %2243 = vmatpush2.msra.mxu0 0.0
    %2244 = vmatprep.subr.mxu0 0.0
    %2245 = vmatpush2.msra.mxu0 0.0
    %2246 = vmatprep.subr.mxu0 0.0
    %2247 = vmatpush2.msra.mxu0 0.0
    %2248 = vmatprep.mubr.f32.mxu0 0.0
    %2249 = vmatmul.mubr.f32.gmra.mxu0 %v2182
    %v2250 = vpop.f32.mrf.mxu0
    %v2251 = vadd.f32 0.0, %v2250
    %v2252 = vpop.f32.mrf.mxu0
    %2253 = vdwg.mxu0
    %2254 = vrot.lane.b32.xlu0 %v2087, 112
    %v2255 = vpop.permute.xlu0 %2254
    %2256 = vrot.lane.b32.xlu0 %v2087, 80
    %v2257 = vpop.permute.xlu0 %2256
    %v2258 = vsel %vm227, %v2255, 0
    %v2260 = vsel %vm227, %v2257, 0
    %2262 = vmatprep.subr.mxu0 0.0
    %2263 = vmatpush1.xpose.msra.mxu0 0.0
    %2264 = vmatprep.subr.mxu0 0.0
    %2265 = vmatpush1.xpose.msra.mxu0 0.0
    %2266 = vmatprep.subr.mxu0 0.0
    %2267 = vmatpush1.xpose.msra.mxu0 0.0
    %2268 = vmatprep.subr.mxu0 0.0
    %2269 = vmatpush1.xpose.msra.mxu0 0.0
    %2270 = vmatprep.subr.mxu0 0.0
    %2271 = vmatpush1.xpose.msra.mxu0 0.0
    %2272 = vmatprep.subr.mxu0 0.0
    %2273 = vmatpush1.xpose.msra.mxu0 0.0
    %2274 = vmatprep.subr.mxu0 0.0
    %2275 = vmatpush1.xpose.msra.mxu0 0.0
    %2276 = vmatprep.subr.mxu0 0.0
    %2277 = vmatpush1.xpose.msra.mxu0 0.0
    %2278 = vmatprep.subr.mxu0 0.0
    %2279 = vmatpush1.xpose.msra.mxu0 0.0
    %2280 = vmatprep.subr.mxu0 0.0
    %2281 = vmatpush1.xpose.msra.mxu0 0.0
    %2282 = vmatprep.subr.mxu0 0.0
    %2283 = vmatpush1.xpose.msra.mxu0 0.0
    %2284 = vmatprep.subr.mxu0 0.0
    %2285 = vmatpush1.xpose.msra.mxu0 0.0
    %2286 = vmatprep.subr.mxu0 0.0
    %2287 = vmatpush1.xpose.msra.mxu0 0.0
    %2288 = vmatprep.subr.mxu0 0.0
    %2289 = vmatpush1.xpose.msra.mxu0 0.0
    %2290 = vmatprep.subr.mxu0 0.0
    %2291 = vmatpush1.xpose.msra.mxu0 0.0
    %2292 = vmatprep.subr.mxu0 0.0
    %2293 = vmatpush1.xpose.msra.mxu0 %v2260
    %2294 = vmatprep.subr.mxu0 0.0
    %2295 = vmatpush2.xpose.msra.mxu0 0.0
    %2296 = vmatprep.subr.mxu0 0.0
    %2297 = vmatpush2.xpose.msra.mxu0 0.0
    %2298 = vmatprep.subr.mxu0 0.0
    %2299 = vmatpush2.xpose.msra.mxu0 0.0
    %2300 = vmatprep.subr.mxu0 0.0
    %2301 = vmatpush2.xpose.msra.mxu0 0.0
    %2302 = vmatprep.subr.mxu0 0.0
    %2303 = vmatpush2.xpose.msra.mxu0 0.0
    %2304 = vmatprep.subr.mxu0 0.0
    %2305 = vmatpush2.xpose.msra.mxu0 0.0
    %2306 = vmatprep.subr.mxu0 0.0
    %2307 = vmatpush2.xpose.msra.mxu0 0.0
    %2308 = vmatprep.subr.mxu0 0.0
    %2309 = vmatpush2.xpose.msra.mxu0 0.0
    %2310 = vmatprep.subr.mxu0 0.0
    %2311 = vmatpush2.xpose.msra.mxu0 0.0
    %2312 = vmatprep.subr.mxu0 0.0
    %2313 = vmatpush2.xpose.msra.mxu0 0.0
    %2314 = vmatprep.subr.mxu0 0.0
    %2315 = vmatpush2.xpose.msra.mxu0 0.0
    %2316 = vmatprep.subr.mxu0 0.0
    %2317 = vmatpush2.xpose.msra.mxu0 0.0
    %2318 = vmatprep.subr.mxu0 0.0
    %2319 = vmatpush2.xpose.msra.mxu0 0.0
    %2320 = vmatprep.subr.mxu0 0.0
    %2321 = vmatpush2.xpose.msra.mxu0 0.0
    %2322 = vmatprep.subr.mxu0 0.0
    %2323 = vmatpush2.xpose.msra.mxu0 0.0
    %2324 = vmatprep.subr.mxu0 0.0
    %2325 = vmatpush2.xpose.msra.mxu0 0.0
    %2326 = vmatprep.mubr.f32.mxu0 0.0
    %2327 = vmatmul.mubr.f32.gmra.mxu0 %v2258
    %v2328 = vpop.f32.mrf.mxu0
    %v2329 = vadd.f32 0.0, %v2328
    %v2330 = vpop.f32.mrf.mxu0
    %2331 = vdwg.mxu0
    %v2332 = vmul.f32 %v2329, 0.25
    %v2333 = vadd.f32 %v2332, %v792
    %v2334 = vsel %vm308, %v2333, -inf
    %2335 = vmax.xlane.f32.xlu0 %v2334
    %v2336 = vpop.xlane.xlu0 %2335
    %v2337 = vsub.f32 %v2333, %v2336
    %v2338 = vmul.f32 %v2337, 1.442695
    %v2339 = vpow.pop %v2338
    %v2340 = vsel %vm308, %v2339, 0.0
    %2341 = vadd.xlane.f32.xlu0 %v2340
    %v2342 = vpop.xlane.xlu0 %2341
    %v2343 = vrcp.pop %v2342
    %v2344 = vmul.f32 %v2339, %v2343
    %2345 = vrot.lane.b32.xlu0 %v2087, 48
    %v2346 = vpop.permute.xlu0 %2345
    %v2349 = vsel %vm308, %v2344, 0
    %2351 = vmatprep.subr.mxu0 0.0
    %2352 = vmatpush1.msra.mxu0 0.0
    %2353 = vmatprep.subr.mxu0 0.0
    %2354 = vmatpush1.msra.mxu0 0.0
    %2355 = vmatprep.subr.mxu0 0.0
    %2356 = vmatpush1.msra.mxu0 0.0
    %2357 = vmatprep.subr.mxu0 0.0
    %2358 = vmatpush1.msra.mxu0 0.0
    %2359 = vmatprep.subr.mxu0 0.0
    %2360 = vmatpush1.msra.mxu0 0.0
    %2361 = vmatprep.subr.mxu0 0.0
    %2362 = vmatpush1.msra.mxu0 0.0
    %2363 = vmatprep.subr.mxu0 0.0
    %2364 = vmatpush1.msra.mxu0 0.0
    %2365 = vmatprep.subr.mxu0 0.0
    %2366 = vmatpush1.msra.mxu0 0.0
    %2367 = vmatprep.subr.mxu0 0.0
    %2368 = vmatpush1.msra.mxu0 0.0
    %2369 = vmatprep.subr.mxu0 0.0
    %2370 = vmatpush1.msra.mxu0 0.0
    %2371 = vmatprep.subr.mxu0 0.0
    %2372 = vmatpush1.msra.mxu0 0.0
    %2373 = vmatprep.subr.mxu0 0.0
    %2374 = vmatpush1.msra.mxu0 0.0
    %2375 = vmatprep.subr.mxu0 0.0
    %2376 = vmatpush1.msra.mxu0 0.0
    %2377 = vmatprep.subr.mxu0 0.0
    %2378 = vmatpush1.msra.mxu0 0.0
    %2379 = vmatprep.subr.mxu0 0.0
    %2380 = vmatpush1.msra.mxu0 0.0
    %2381 = vmatprep.subr.mxu0 0.0
    %2382 = vmatpush1.msra.mxu0 %v2346
    %2383 = vmatprep.subr.mxu0 0.0
    %2384 = vmatpush2.msra.mxu0 0.0
    %2385 = vmatprep.subr.mxu0 0.0
    %2386 = vmatpush2.msra.mxu0 0.0
    %2387 = vmatprep.subr.mxu0 0.0
    %2388 = vmatpush2.msra.mxu0 0.0
    %2389 = vmatprep.subr.mxu0 0.0
    %2390 = vmatpush2.msra.mxu0 0.0
    %2391 = vmatprep.subr.mxu0 0.0
    %2392 = vmatpush2.msra.mxu0 0.0
    %2393 = vmatprep.subr.mxu0 0.0
    %2394 = vmatpush2.msra.mxu0 0.0
    %2395 = vmatprep.subr.mxu0 0.0
    %2396 = vmatpush2.msra.mxu0 0.0
    %2397 = vmatprep.subr.mxu0 0.0
    %2398 = vmatpush2.msra.mxu0 0.0
    %2399 = vmatprep.subr.mxu0 0.0
    %2400 = vmatpush2.msra.mxu0 0.0
    %2401 = vmatprep.subr.mxu0 0.0
    %2402 = vmatpush2.msra.mxu0 0.0
    %2403 = vmatprep.subr.mxu0 0.0
    %2404 = vmatpush2.msra.mxu0 0.0
    %2405 = vmatprep.subr.mxu0 0.0
    %2406 = vmatpush2.msra.mxu0 0.0
    %2407 = vmatprep.subr.mxu0 0.0
    %2408 = vmatpush2.msra.mxu0 0.0
    %2409 = vmatprep.subr.mxu0 0.0
    %2410 = vmatpush2.msra.mxu0 0.0
    %2411 = vmatprep.subr.mxu0 0.0
    %2412 = vmatpush2.msra.mxu0 0.0
    %2413 = vmatprep.subr.mxu0 0.0
    %2414 = vmatpush2.msra.mxu0 0.0
    %2415 = vmatprep.mubr.f32.mxu0 0.0
    %2416 = vmatmul.mubr.f32.gmra.mxu0 %v2349
    %v2417 = vpop.f32.mrf.mxu0
    %v2418 = vadd.f32 0.0, %v2417
    %v2419 = vpop.f32.mrf.mxu0
    %2420 = vdwg.mxu0
    %v2422 = vsel %vm227, %v2418, 0
    %2424 = vmatprep.subr.mxu0 0.0
    %2425 = vmatpush1.msra.mxu0 0.0
    %2426 = vmatprep.subr.mxu0 0.0
    %2427 = vmatpush1.msra.mxu0 0.0
    %2428 = vmatprep.subr.mxu0 0.0
    %2429 = vmatpush1.msra.mxu0 0.0
    %2430 = vmatprep.subr.mxu0 0.0
    %2431 = vmatpush1.msra.mxu0 0.0
    %2432 = vmatprep.subr.mxu0 0.0
    %2433 = vmatpush1.msra.mxu0 0.0
    %2434 = vmatprep.subr.mxu0 0.0
    %2435 = vmatpush1.msra.mxu0 0.0
    %2436 = vmatprep.subr.mxu0 0.0
    %2437 = vmatpush1.msra.mxu0 0.0
    %2438 = vmatprep.subr.mxu0 0.0
    %2439 = vmatpush1.msra.mxu0 0.0
    %2440 = vmatprep.subr.mxu0 0.0
    %2441 = vmatpush1.msra.mxu0 0.0
    %2442 = vmatprep.subr.mxu0 0.0
    %2443 = vmatpush1.msra.mxu0 0.0
    %2444 = vmatprep.subr.mxu0 0.0
    %2445 = vmatpush1.msra.mxu0 0.0
    %2446 = vmatprep.subr.mxu0 0.0
    %2447 = vmatpush1.msra.mxu0 0.0
    %2448 = vmatprep.subr.mxu0 0.0
    %2449 = vmatpush1.msra.mxu0 0.0
    %2450 = vmatprep.subr.mxu0 0.0
    %2451 = vmatpush1.msra.mxu0 0.0
    %2452 = vmatprep.subr.mxu0 0.0
    %2453 = vmatpush1.msra.mxu0 %v1605
    %2454 = vmatprep.subr.mxu0 0.0
    %2455 = vmatpush1.msra.mxu0 %v1604
    %2456 = vmatprep.subr.mxu0 0.0
    %2457 = vmatpush2.msra.mxu0 0.0
    %2458 = vmatprep.subr.mxu0 0.0
    %2459 = vmatpush2.msra.mxu0 0.0
    %2460 = vmatprep.subr.mxu0 0.0
    %2461 = vmatpush2.msra.mxu0 0.0
    %2462 = vmatprep.subr.mxu0 0.0
    %2463 = vmatpush2.msra.mxu0 0.0
    %2464 = vmatprep.subr.mxu0 0.0
    %2465 = vmatpush2.msra.mxu0 0.0
    %2466 = vmatprep.subr.mxu0 0.0
    %2467 = vmatpush2.msra.mxu0 0.0
    %2468 = vmatprep.subr.mxu0 0.0
    %2469 = vmatpush2.msra.mxu0 0.0
    %2470 = vmatprep.subr.mxu0 0.0
    %2471 = vmatpush2.msra.mxu0 0.0
    %2472 = vmatprep.subr.mxu0 0.0
    %2473 = vmatpush2.msra.mxu0 0.0
    %2474 = vmatprep.subr.mxu0 0.0
    %2475 = vmatpush2.msra.mxu0 0.0
    %2476 = vmatprep.subr.mxu0 0.0
    %2477 = vmatpush2.msra.mxu0 0.0
    %2478 = vmatprep.subr.mxu0 0.0
    %2479 = vmatpush2.msra.mxu0 0.0
    %2480 = vmatprep.subr.mxu0 0.0
    %2481 = vmatpush2.msra.mxu0 0.0
    %2482 = vmatprep.subr.mxu0 0.0
    %2483 = vmatpush2.msra.mxu0 0.0
    %2484 = vmatprep.subr.mxu0 0.0
    %2485 = vmatpush2.msra.mxu0 0.0
    %2486 = vmatprep.subr.mxu0 0.0
    %2487 = vmatpush2.msra.mxu0 0.0
    %2488 = vmatprep.mubr.f32.mxu0 0.0
    %2489 = vmatmul.mubr.f32.gmra.mxu0 %v2422
    %v2490 = vpop.f32.mrf.mxu0
    %v2491 = vadd.f32 0.0, %v2490
    %v2492 = vpop.f32.mrf.mxu0
    %2493 = vdwg.mxu0
    %v2495 = vsel %vm227, %v2251, 0
    %2497 = vmatprep.subr.mxu0 0.0
    %2498 = vmatpush1.msra.mxu0 0.0
    %2499 = vmatprep.subr.mxu0 0.0
    %2500 = vmatpush1.msra.mxu0 0.0
    %2501 = vmatprep.subr.mxu0 0.0
    %2502 = vmatpush1.msra.mxu0 0.0
    %2503 = vmatprep.subr.mxu0 0.0
    %2504 = vmatpush1.msra.mxu0 0.0
    %2505 = vmatprep.subr.mxu0 0.0
    %2506 = vmatpush1.msra.mxu0 0.0
    %2507 = vmatprep.subr.mxu0 0.0
    %2508 = vmatpush1.msra.mxu0 0.0
    %2509 = vmatprep.subr.mxu0 0.0
    %2510 = vmatpush1.msra.mxu0 0.0
    %2511 = vmatprep.subr.mxu0 0.0
    %2512 = vmatpush1.msra.mxu0 0.0
    %2513 = vmatprep.subr.mxu0 0.0
    %2514 = vmatpush1.msra.mxu0 0.0
    %2515 = vmatprep.subr.mxu0 0.0
    %2516 = vmatpush1.msra.mxu0 0.0
    %2517 = vmatprep.subr.mxu0 0.0
    %2518 = vmatpush1.msra.mxu0 0.0
    %2519 = vmatprep.subr.mxu0 0.0
    %2520 = vmatpush1.msra.mxu0 0.0
    %2521 = vmatprep.subr.mxu0 0.0
    %2522 = vmatpush1.msra.mxu0 0.0
    %2523 = vmatprep.subr.mxu0 0.0
    %2524 = vmatpush1.msra.mxu0 0.0
    %2525 = vmatprep.subr.mxu0 0.0
    %2526 = vmatpush1.msra.mxu0 %v1603
    %2527 = vmatprep.subr.mxu0 0.0
    %2528 = vmatpush1.msra.mxu0 %v1602
    %2529 = vmatprep.subr.mxu0 0.0
    %2530 = vmatpush2.msra.mxu0 0.0
    %2531 = vmatprep.subr.mxu0 0.0
    %2532 = vmatpush2.msra.mxu0 0.0
    %2533 = vmatprep.subr.mxu0 0.0
    %2534 = vmatpush2.msra.mxu0 0.0
    %2535 = vmatprep.subr.mxu0 0.0
    %2536 = vmatpush2.msra.mxu0 0.0
    %2537 = vmatprep.subr.mxu0 0.0
    %2538 = vmatpush2.msra.mxu0 0.0
    %2539 = vmatprep.subr.mxu0 0.0
    %2540 = vmatpush2.msra.mxu0 0.0
    %2541 = vmatprep.subr.mxu0 0.0
    %2542 = vmatpush2.msra.mxu0 0.0
    %2543 = vmatprep.subr.mxu0 0.0
    %2544 = vmatpush2.msra.mxu0 0.0
    %2545 = vmatprep.subr.mxu0 0.0
    %2546 = vmatpush2.msra.mxu0 0.0
    %2547 = vmatprep.subr.mxu0 0.0
    %2548 = vmatpush2.msra.mxu0 0.0
    %2549 = vmatprep.subr.mxu0 0.0
    %2550 = vmatpush2.msra.mxu0 0.0
    %2551 = vmatprep.subr.mxu0 0.0
    %2552 = vmatpush2.msra.mxu0 0.0
    %2553 = vmatprep.subr.mxu0 0.0
    %2554 = vmatpush2.msra.mxu0 0.0
    %2555 = vmatprep.subr.mxu0 0.0
    %2556 = vmatpush2.msra.mxu0 0.0
    %2557 = vmatprep.subr.mxu0 0.0
    %2558 = vmatpush2.msra.mxu0 0.0
    %2559 = vmatprep.subr.mxu0 0.0
    %2560 = vmatpush2.msra.mxu0 0.0
    %2561 = vmatprep.mubr.f32.mxu0 0.0
    %2562 = vmatmul.mubr.f32.gmra.mxu0 %v2495
    %v2563 = vpop.f32.mrf.mxu0
    %v2564 = vadd.f32 %v2491, %v2563
    %v2565 = vpop.f32.mrf.mxu0
    %2566 = vdwg.mxu0
    %2567 = vst.msk [vmem:[#allocation3 + $0x8] sm:$0xff] %vm79, %v2564
    %v2568 = vld [vmem:[#allocation3] sm:$0xff]
    %v2569 = vld [vmem:[#allocation3 + $0x8] sm:$0xff]
    %s2570 = scalar_lea.vmem %s7, 1
    %v2571 = vld [vmem:[%s2570] sm:$0x1]
    %v2573 = vlaneseq
    %v2574 = vshrl.u32 %v2573, 7
    %v2575 = vsub.s32 0, %v2574
    %v2576 = vrot.slane %v2571, %v2575
    %v2578 = vadd.f32 %v2568, %v2576
    %v2579 = vadd.f32 %v2569, %v2576
    %v2580 = vadd.f32 %v2578, %v1503
    %v2581 = vadd.f32 %v2579, %v1504
    %s2582 = scalar_lea.vmem %s8, 1
    %v2583 = vld [vmem:[%s2582] sm:$0x1]
    %s2584 = scalar_lea.vmem %s9, 1
    %v2585 = vld [vmem:[%s2584] sm:$0x1]
    %v2586 = vsel %vm79, %v2580, 0.0
    %2587 = vadd.xlane.f32.xlu0 %v2586
    %v2588 = vpop.xlane.xlu0 %2587
    %v2589 = vsel %vm79, %v2581, 0.0
    %2590 = vadd.xlane.f32.xlu0 %v2589
    %v2591 = vpop.xlane.xlu0 %2590
    %v2592 = vmul.f32 %v2588, %v86
    %v2593 = vmul.f32 %v2591, %v86
    %v2594 = vsub.f32 %v2580, %v2592
    %v2595 = vsub.f32 %v2581, %v2593
    %v2596 = vmul.f32 %v2594, %v2594
    %v2597 = vmul.f32 %v2595, %v2595
    %v2598 = vsel %vm79, %v2596, 0.0
    %2599 = vadd.xlane.f32.xlu0 %v2598
    %v2600 = vpop.xlane.xlu0 %2599
    %v2601 = vsel %vm79, %v2597, 0.0
    %2602 = vadd.xlane.f32.xlu0 %v2601
    %v2603 = vpop.xlane.xlu0 %2602
    %v2604 = vmul.f32 %v2600, %v86
    %v2605 = vmul.f32 %v2603, %v86
    %v2606 = vadd.f32 %v2604, 1e-12
    %v2607 = vadd.f32 %v2605, 1e-12
    %v2608 = vrsqrt.pop %v2606
    %v2609 = vrsqrt.pop %v2607
    %v2610 = vmul.f32 %v2594, %v2608
    %v2611 = vmul.f32 %v2595, %v2609
    %v2613 = vlaneseq
    %v2614 = vshrl.u32 %v2613, 7
    %v2615 = vsub.s32 0, %v2614
    %v2616 = vrot.slane %v2583, %v2615
    %v2618 = vmul.f32 %v2610, %v2616
    %v2619 = vmul.f32 %v2611, %v2616
    %v2621 = vlaneseq
    %v2622 = vshrl.u32 %v2621, 7
    %v2623 = vsub.s32 0, %v2622
    %v2624 = vrot.slane %v2585, %v2623
    %v2626 = vadd.f32 %v2618, %v2624
    %v2627 = vadd.f32 %v2619, %v2624
    %s2628 = scalar_lea.vmem %s10, 32
    %v2629 = vld [vmem:[%s2628] sm:$0xff]
    %v2630 = vld [vmem:[%s2628 + $0x8] sm:$0xff]
    %v2631 = vld [vmem:[%s2628 + $0x10] sm:$0xff]
    %v2632 = vld [vmem:[%s2628 + $0x18] sm:$0xff]
    %s2633 = scalar_lea.vmem %s11, 1
    %v2634 = vld [vmem:[%s2633] sm:$0x1]
    %v2636 = vlaneseq
    %v2637 = vshrl.u32 %v2636, 7
    %v2638 = vsub.s32 0, %v2637
    %v2639 = vrot.slane %v2634, %v2638
    %v2642 = vsel %vm79, %v2626, 0
    %v2645 = vsel %vm79, %v2627, 0
    %2647 = vmatprep.subr.mxu0 0.0
    %2648 = vmatpush1.msra.mxu0 0.0
    %2649 = vmatprep.subr.mxu0 0.0
    %2650 = vmatpush1.msra.mxu0 0.0
    %2651 = vmatprep.subr.mxu0 0.0
    %2652 = vmatpush1.msra.mxu0 0.0
    %2653 = vmatprep.subr.mxu0 0.0
    %2654 = vmatpush1.msra.mxu0 0.0
    %2655 = vmatprep.subr.mxu0 0.0
    %2656 = vmatpush1.msra.mxu0 0.0
    %2657 = vmatprep.subr.mxu0 0.0
    %2658 = vmatpush1.msra.mxu0 0.0
    %2659 = vmatprep.subr.mxu0 0.0
    %2660 = vmatpush1.msra.mxu0 0.0
    %2661 = vmatprep.subr.mxu0 0.0
    %2662 = vmatpush1.msra.mxu0 0.0
    %2663 = vmatprep.subr.mxu0 0.0
    %2664 = vmatpush1.msra.mxu0 0.0
    %2665 = vmatprep.subr.mxu0 0.0
    %2666 = vmatpush1.msra.mxu0 0.0
    %2667 = vmatprep.subr.mxu0 0.0
    %2668 = vmatpush1.msra.mxu0 0.0
    %2669 = vmatprep.subr.mxu0 0.0
    %2670 = vmatpush1.msra.mxu0 0.0
    %2671 = vmatprep.subr.mxu0 0.0
    %2672 = vmatpush1.msra.mxu0 %v2632
    %2673 = vmatprep.subr.mxu0 0.0
    %2674 = vmatpush1.msra.mxu0 %v2631
    %2675 = vmatprep.subr.mxu0 0.0
    %2676 = vmatpush1.msra.mxu0 %v2630
    %2677 = vmatprep.subr.mxu0 0.0
    %2678 = vmatpush1.msra.mxu0 %v2629
    %2679 = vmatprep.subr.mxu0 0.0
    %2680 = vmatpush2.msra.mxu0 0.0
    %2681 = vmatprep.subr.mxu0 0.0
    %2682 = vmatpush2.msra.mxu0 0.0
    %2683 = vmatprep.subr.mxu0 0.0
    %2684 = vmatpush2.msra.mxu0 0.0
    %2685 = vmatprep.subr.mxu0 0.0
    %2686 = vmatpush2.msra.mxu0 0.0
    %2687 = vmatprep.subr.mxu0 0.0
    %2688 = vmatpush2.msra.mxu0 0.0
    %2689 = vmatprep.subr.mxu0 0.0
    %2690 = vmatpush2.msra.mxu0 0.0
    %2691 = vmatprep.subr.mxu0 0.0
    %2692 = vmatpush2.msra.mxu0 0.0
    %2693 = vmatprep.subr.mxu0 0.0
    %2694 = vmatpush2.msra.mxu0 0.0
    %2695 = vmatprep.subr.mxu0 0.0
    %2696 = vmatpush2.msra.mxu0 0.0
    %2697 = vmatprep.subr.mxu0 0.0
    %2698 = vmatpush2.msra.mxu0 0.0
    %2699 = vmatprep.subr.mxu0 0.0
    %2700 = vmatpush2.msra.mxu0 0.0
    %2701 = vmatprep.subr.mxu0 0.0
    %2702 = vmatpush2.msra.mxu0 0.0
    %2703 = vmatprep.subr.mxu0 0.0
    %2704 = vmatpush2.msra.mxu0 0.0
    %2705 = vmatprep.subr.mxu0 0.0
    %2706 = vmatpush2.msra.mxu0 0.0
    %2707 = vmatprep.subr.mxu0 0.0
    %2708 = vmatpush2.msra.mxu0 0.0
    %2709 = vmatprep.subr.mxu0 0.0
    %2710 = vmatpush2.msra.mxu0 0.0
    %2711 = vmatprep.mubr.f32.mxu0 0.0
    %2712 = vmatmul.mubr.f32.gmra.mxu0 %v2642
    %v2713 = vpop.f32.mrf.mxu0
    %v2714 = vadd.f32 %v2639, %v2713
    %v2715 = vpop.f32.mrf.mxu0
    %2716 = vmatprep.mubr.f32.mxu0 0.0
    %2717 = vmatmul.mubr.f32.gmra.mxu0 %v2645
    %v2718 = vpop.f32.mrf.mxu0
    %v2719 = vadd.f32 %v2639, %v2718
    %v2720 = vpop.f32.mrf.mxu0
    %2721 = vdwg.mxu0
    %v2722 = vmul.f32 %v2714, 0.5
    %v2723 = vmul.f32 %v2719, 0.5
    %v2724 = vmul.f32 %v2714, 0.044715
    %v2725 = vmul.f32 %v2719, 0.044715
    %v2726 = vmul.f32 %v2724, %v2714
    %v2727 = vmul.f32 %v2725, %v2719
    %v2728 = vmul.f32 %v2726, %v2714
    %v2729 = vmul.f32 %v2727, %v2719
    %v2730 = vadd.f32 %v2714, %v2728
    %v2731 = vadd.f32 %v2719, %v2729
    %v2732 = vmul.f32 %v2730, 0.7978846
    %v2733 = vmul.f32 %v2731, 0.7978846
    %v2734 = vtanh.pop %v2732
    %v2735 = vtanh.pop %v2733
    %v2736 = vadd.f32 %v2734, 1.0
    %v2737 = vadd.f32 %v2735, 1.0
    %v2738 = vmul.f32 %v2722, %v2736
    %v2739 = vmul.f32 %v2723, %v2737
    %s2740 = scalar_lea.vmem %s12, 64
    %v2741 = vld [vmem:[%s2740] sm:$0xff]
    %v2742 = vld [vmem:[%s2740 + $0x8] sm:$0xff]
    %v2743 = vld [vmem:[%s2740 + $0x10] sm:$0xff]
    %v2744 = vld [vmem:[%s2740 + $0x18] sm:$0xff]
    %v2745 = vld [vmem:[%s2740 + $0x20] sm:$0xff]
    %v2746 = vld [vmem:[%s2740 + $0x28] sm:$0xff]
    %v2747 = vld [vmem:[%s2740 + $0x30] sm:$0xff]
    %v2748 = vld [vmem:[%s2740 + $0x38] sm:$0xff]
    %s2749 = scalar_lea.vmem %s13, 1
    %v2750 = vld [vmem:[%s2749] sm:$0x1]
    %v2752 = vlaneseq
    %v2753 = vshrl.u32 %v2752, 7
    %v2754 = vsub.s32 0, %v2753
    %v2755 = vrot.slane %v2750, %v2754
    %v2758 = vsel %vm1377, %v2738, 0
    %v2761 = vsel %vm1377, %v2739, 0
    %2763 = vmatprep.subr.mxu0 0.0
    %2764 = vmatpush1.msra.mxu0 0.0
    %2765 = vmatprep.subr.mxu0 0.0
    %2766 = vmatpush1.msra.mxu0 0.0
    %2767 = vmatprep.subr.mxu0 0.0
    %2768 = vmatpush1.msra.mxu0 0.0
    %2769 = vmatprep.subr.mxu0 0.0
    %2770 = vmatpush1.msra.mxu0 0.0
    %2771 = vmatprep.subr.mxu0 0.0
    %2772 = vmatpush1.msra.mxu0 0.0
    %2773 = vmatprep.subr.mxu0 0.0
    %2774 = vmatpush1.msra.mxu0 0.0
    %2775 = vmatprep.subr.mxu0 0.0
    %2776 = vmatpush1.msra.mxu0 0.0
    %2777 = vmatprep.subr.mxu0 0.0
    %2778 = vmatpush1.msra.mxu0 0.0
    %2779 = vmatprep.subr.mxu0 0.0
    %2780 = vmatpush1.msra.mxu0 %v2748
    %2781 = vmatprep.subr.mxu0 0.0
    %2782 = vmatpush1.msra.mxu0 %v2747
    %2783 = vmatprep.subr.mxu0 0.0
    %2784 = vmatpush1.msra.mxu0 %v2746
    %2785 = vmatprep.subr.mxu0 0.0
    %2786 = vmatpush1.msra.mxu0 %v2745
    %2787 = vmatprep.subr.mxu0 0.0
    %2788 = vmatpush1.msra.mxu0 %v2744
    %2789 = vmatprep.subr.mxu0 0.0
    %2790 = vmatpush1.msra.mxu0 %v2743
    %2791 = vmatprep.subr.mxu0 0.0
    %2792 = vmatpush1.msra.mxu0 %v2742
    %2793 = vmatprep.subr.mxu0 0.0
    %2794 = vmatpush1.msra.mxu0 %v2741
    %2795 = vmatprep.subr.mxu0 0.0
    %2796 = vmatpush2.msra.mxu0 0.0
    %2797 = vmatprep.subr.mxu0 0.0
    %2798 = vmatpush2.msra.mxu0 0.0
    %2799 = vmatprep.subr.mxu0 0.0
    %2800 = vmatpush2.msra.mxu0 0.0
    %2801 = vmatprep.subr.mxu0 0.0
    %2802 = vmatpush2.msra.mxu0 0.0
    %2803 = vmatprep.subr.mxu0 0.0
    %2804 = vmatpush2.msra.mxu0 0.0
    %2805 = vmatprep.subr.mxu0 0.0
    %2806 = vmatpush2.msra.mxu0 0.0
    %2807 = vmatprep.subr.mxu0 0.0
    %2808 = vmatpush2.msra.mxu0 0.0
    %2809 = vmatprep.subr.mxu0 0.0
    %2810 = vmatpush2.msra.mxu0 0.0
    %2811 = vmatprep.subr.mxu0 0.0
    %2812 = vmatpush2.msra.mxu0 0.0
    %2813 = vmatprep.subr.mxu0 0.0
    %2814 = vmatpush2.msra.mxu0 0.0
    %2815 = vmatprep.subr.mxu0 0.0
    %2816 = vmatpush2.msra.mxu0 0.0
    %2817 = vmatprep.subr.mxu0 0.0
    %2818 = vmatpush2.msra.mxu0 0.0
    %2819 = vmatprep.subr.mxu0 0.0
    %2820 = vmatpush2.msra.mxu0 0.0
    %2821 = vmatprep.subr.mxu0 0.0
    %2822 = vmatpush2.msra.mxu0 0.0
    %2823 = vmatprep.subr.mxu0 0.0
    %2824 = vmatpush2.msra.mxu0 0.0
    %2825 = vmatprep.subr.mxu0 0.0
    %2826 = vmatpush2.msra.mxu0 0.0
    %2827 = vmatprep.mubr.f32.mxu0 0.0
    %2828 = vmatmul.mubr.f32.gmra.mxu0 %v2758
    %v2829 = vpop.f32.mrf.mxu0
    %v2830 = vadd.f32 %v2755, %v2829
    %v2831 = vpop.f32.mrf.mxu0
    %2832 = vmatprep.mubr.f32.mxu0 0.0
    %2833 = vmatmul.mubr.f32.gmra.mxu0 %v2761
    %v2834 = vpop.f32.mrf.mxu0
    %v2835 = vadd.f32 %v2755, %v2834
    %v2836 = vpop.f32.mrf.mxu0
    %2837 = vdwg.mxu0
    %v2838 = vadd.f32 %v2830, %v2626
    %v2839 = vadd.f32 %v2835, %v2627
    %s2840 = scalar_lea.vmem %s14, 1
    %v2841 = vld [vmem:[%s2840] sm:$0x1]
    %s2842 = scalar_lea.vmem %s15, 1
    %v2843 = vld [vmem:[%s2842] sm:$0x1]
    %v2844 = vsel %vm79, %v2838, 0.0
    %2845 = vadd.xlane.f32.xlu0 %v2844
    %v2846 = vpop.xlane.xlu0 %2845
    %v2847 = vsel %vm79, %v2839, 0.0
    %2848 = vadd.xlane.f32.xlu0 %v2847
    %v2849 = vpop.xlane.xlu0 %2848
    %v2850 = vmul.f32 %v2846, %v86
    %v2851 = vmul.f32 %v2849, %v86
    %v2852 = vsub.f32 %v2838, %v2850
    %v2853 = vsub.f32 %v2839, %v2851
    %v2854 = vmul.f32 %v2852, %v2852
    %v2855 = vmul.f32 %v2853, %v2853
    %v2856 = vsel %vm79, %v2854, 0.0
    %2857 = vadd.xlane.f32.xlu0 %v2856
    %v2858 = vpop.xlane.xlu0 %2857
    %v2859 = vsel %vm79, %v2855, 0.0
    %2860 = vadd.xlane.f32.xlu0 %v2859
    %v2861 = vpop.xlane.xlu0 %2860
    %v2862 = vmul.f32 %v2858, %v86
    %v2863 = vmul.f32 %v2861, %v86
    %v2864 = vadd.f32 %v2862, 1e-12
    %v2865 = vadd.f32 %v2863, 1e-12
    %v2866 = vrsqrt.pop %v2864
    %v2867 = vrsqrt.pop %v2865
    %v2868 = vmul.f32 %v2852, %v2866
    %v2869 = vmul.f32 %v2853, %v2867
    %v2871 = vlaneseq
    %v2872 = vshrl.u32 %v2871, 7
    %v2873 = vsub.s32 0, %v2872
    %v2874 = vrot.slane %v2841, %v2873
    %v2876 = vmul.f32 %v2868, %v2874
    %v2877 = vmul.f32 %v2869, %v2874
    %v2879 = vlaneseq
    %v2880 = vshrl.u32 %v2879, 7
    %v2881 = vsub.s32 0, %v2880
    %v2882 = vrot.slane %v2843, %v2881
    %v2884 = vadd.f32 %v2876, %v2882
    %v2885 = vadd.f32 %v2877, %v2882
    %vm2886 = vcmask 253952
    %2887 = vst.msk [vmem:[#allocation4] sm:$0x1] %vm2886, %v2884
    %2888 = vst.msk [vmem:[#allocation4 + $0x1] sm:$0x1] %vm2886, %v2885
    %v2889 = vld [vmem:[#allocation4] sm:$0x3]
    %v2890 = vld [vmem:[%s16] sm:$0xff]
    %v2891 = vld [vmem:[%s16 + $0x8] sm:$0xff]
    %v2892 = vld [vmem:[%s16 + $0x10] sm:$0xff]
    %v2893 = vld [vmem:[%s16 + $0x18] sm:$0xff]
    %v2894 = vld [vmem:[%s17] sm:$0x1]
    %v2896 = vlaneseq
    %v2897 = vshrl.u32 %v2896, 7
    %v2898 = vsub.s32 0, %v2897
    %v2899 = vrot.slane %v2894, %v2898
    %v2902 = vsel %vm79, %v2889, 0
    %2904 = vmatprep.subr.mxu0 0.0
    %2905 = vmatpush1.msra.mxu0 0.0
    %2906 = vmatprep.subr.mxu0 0.0
    %2907 = vmatpush1.msra.mxu0 0.0
    %2908 = vmatprep.subr.mxu0 0.0
    %2909 = vmatpush1.msra.mxu0 0.0
    %2910 = vmatprep.subr.mxu0 0.0
    %2911 = vmatpush1.msra.mxu0 0.0
    %2912 = vmatprep.subr.mxu0 0.0
    %2913 = vmatpush1.msra.mxu0 0.0
    %2914 = vmatprep.subr.mxu0 0.0
    %2915 = vmatpush1.msra.mxu0 0.0
    %2916 = vmatprep.subr.mxu0 0.0
    %2917 = vmatpush1.msra.mxu0 0.0
    %2918 = vmatprep.subr.mxu0 0.0
    %2919 = vmatpush1.msra.mxu0 0.0
    %2920 = vmatprep.subr.mxu0 0.0
    %2921 = vmatpush1.msra.mxu0 0.0
    %2922 = vmatprep.subr.mxu0 0.0
    %2923 = vmatpush1.msra.mxu0 0.0
    %2924 = vmatprep.subr.mxu0 0.0
    %2925 = vmatpush1.msra.mxu0 0.0
    %2926 = vmatprep.subr.mxu0 0.0
    %2927 = vmatpush1.msra.mxu0 0.0
    %2928 = vmatprep.subr.mxu0 0.0
    %2929 = vmatpush1.msra.mxu0 %v2893
    %2930 = vmatprep.subr.mxu0 0.0
    %2931 = vmatpush1.msra.mxu0 %v2892
    %2932 = vmatprep.subr.mxu0 0.0
    %2933 = vmatpush1.msra.mxu0 %v2891
    %2934 = vmatprep.subr.mxu0 0.0
    %2935 = vmatpush1.msra.mxu0 %v2890
    %2936 = vmatprep.subr.mxu0 0.0
    %2937 = vmatpush2.msra.mxu0 0.0
    %2938 = vmatprep.subr.mxu0 0.0
    %2939 = vmatpush2.msra.mxu0 0.0
    %2940 = vmatprep.subr.mxu0 0.0
    %2941 = vmatpush2.msra.mxu0 0.0
    %2942 = vmatprep.subr.mxu0 0.0
    %2943 = vmatpush2.msra.mxu0 0.0
    %2944 = vmatprep.subr.mxu0 0.0
    %2945 = vmatpush2.msra.mxu0 0.0
    %2946 = vmatprep.subr.mxu0 0.0
    %2947 = vmatpush2.msra.mxu0 0.0
    %2948 = vmatprep.subr.mxu0 0.0
    %2949 = vmatpush2.msra.mxu0 0.0
    %2950 = vmatprep.subr.mxu0 0.0
    %2951 = vmatpush2.msra.mxu0 0.0
    %2952 = vmatprep.subr.mxu0 0.0
    %2953 = vmatpush2.msra.mxu0 0.0
    %2954 = vmatprep.subr.mxu0 0.0
    %2955 = vmatpush2.msra.mxu0 0.0
    %2956 = vmatprep.subr.mxu0 0.0
    %2957 = vmatpush2.msra.mxu0 0.0
    %2958 = vmatprep.subr.mxu0 0.0
    %2959 = vmatpush2.msra.mxu0 0.0
    %2960 = vmatprep.subr.mxu0 0.0
    %2961 = vmatpush2.msra.mxu0 0.0
    %2962 = vmatprep.subr.mxu0 0.0
    %2963 = vmatpush2.msra.mxu0 0.0
    %2964 = vmatprep.subr.mxu0 0.0
    %2965 = vmatpush2.msra.mxu0 0.0
    %2966 = vmatprep.subr.mxu0 0.0
    %2967 = vmatpush2.msra.mxu0 0.0
    %2968 = vmatprep.mubr.f32.mxu0 0.0
    %2969 = vmatmul.mubr.f32.gmra.mxu0 %v2902
    %v2970 = vpop.f32.mrf.mxu0
    %v2971 = vadd.f32 %v2899, %v2970
    %v2972 = vpop.f32.mrf.mxu0
    %2973 = vdwg.mxu0
    %v2974 = vtanh.pop %v2971
    %v2975 = vld [vmem:[%s18] sm:$0xff]
    %v2976 = vld [vmem:[%s18 + $0x8] sm:$0xff]
    %v2977 = vld [vmem:[%s18 + $0x10] sm:$0xff]
    %v2978 = vld [vmem:[%s18 + $0x18] sm:$0xff]
    %v2979 = vld [vmem:[%s19] sm:$0x1]
    %v2981 = vlaneseq
    %v2982 = vshrl.u32 %v2981, 7
    %v2983 = vsub.s32 0, %v2982
    %v2984 = vrot.slane %v2979, %v2983
    %v2987 = vsel %vm79, %v2974, 0
    %2989 = vmatprep.subr.mxu0 0.0
    %2990 = vmatpush1.msra.mxu0 0.0
    %2991 = vmatprep.subr.mxu0 0.0
    %2992 = vmatpush1.msra.mxu0 0.0
    %2993 = vmatprep.subr.mxu0 0.0
    %2994 = vmatpush1.msra.mxu0 0.0
    %2995 = vmatprep.subr.mxu0 0.0
    %2996 = vmatpush1.msra.mxu0 0.0
    %2997 = vmatprep.subr.mxu0 0.0
    %2998 = vmatpush1.msra.mxu0 0.0
    %2999 = vmatprep.subr.mxu0 0.0
    %3000 = vmatpush1.msra.mxu0 0.0
    %3001 = vmatprep.subr.mxu0 0.0
    %3002 = vmatpush1.msra.mxu0 0.0
    %3003 = vmatprep.subr.mxu0 0.0
    %3004 = vmatpush1.msra.mxu0 0.0
    %3005 = vmatprep.subr.mxu0 0.0
    %3006 = vmatpush1.msra.mxu0 0.0
    %3007 = vmatprep.subr.mxu0 0.0
    %3008 = vmatpush1.msra.mxu0 0.0
    %3009 = vmatprep.subr.mxu0 0.0
    %3010 = vmatpush1.msra.mxu0 0.0
    %3011 = vmatprep.subr.mxu0 0.0
    %3012 = vmatpush1.msra.mxu0 0.0
    %3013 = vmatprep.subr.mxu0 0.0
    %3014 = vmatpush1.msra.mxu0 %v2978
    %3015 = vmatprep.subr.mxu0 0.0
    %3016 = vmatpush1.msra.mxu0 %v2977
    %3017 = vmatprep.subr.mxu0 0.0
    %3018 = vmatpush1.msra.mxu0 %v2976
    %3019 = vmatprep.subr.mxu0 0.0
    %3020 = vmatpush1.msra.mxu0 %v2975
    %3021 = vmatprep.subr.mxu0 0.0
    %3022 = vmatpush2.msra.mxu0 0.0
    %3023 = vmatprep.subr.mxu0 0.0
    %3024 = vmatpush2.msra.mxu0 0.0
    %3025 = vmatprep.subr.mxu0 0.0
    %3026 = vmatpush2.msra.mxu0 0.0
    %3027 = vmatprep.subr.mxu0 0.0
    %3028 = vmatpush2.msra.mxu0 0.0
    %3029 = vmatprep.subr.mxu0 0.0
    %3030 = vmatpush2.msra.mxu0 0.0
    %3031 = vmatprep.subr.mxu0 0.0
    %3032 = vmatpush2.msra.mxu0 0.0
    %3033 = vmatprep.subr.mxu0 0.0
    %3034 = vmatpush2.msra.mxu0 0.0
    %3035 = vmatprep.subr.mxu0 0.0
    %3036 = vmatpush2.msra.mxu0 0.0
    %3037 = vmatprep.subr.mxu0 0.0
    %3038 = vmatpush2.msra.mxu0 0.0
    %3039 = vmatprep.subr.mxu0 0.0
    %3040 = vmatpush2.msra.mxu0 0.0
    %3041 = vmatprep.subr.mxu0 0.0
    %3042 = vmatpush2.msra.mxu0 0.0
    %3043 = vmatprep.subr.mxu0 0.0
    %3044 = vmatpush2.msra.mxu0 0.0
    %3045 = vmatprep.subr.mxu0 0.0
    %3046 = vmatpush2.msra.mxu0 0.0
    %3047 = vmatprep.subr.mxu0 0.0
    %3048 = vmatpush2.msra.mxu0 0.0
    %3049 = vmatprep.subr.mxu0 0.0
    %3050 = vmatpush2.msra.mxu0 0.0
    %3051 = vmatprep.subr.mxu0 0.0
    %3052 = vmatpush2.msra.mxu0 0.0
    %3053 = vmatprep.mubr.f32.mxu0 0.0
    %3054 = vmatmul.mubr.f32.gmra.mxu0 %v2987
    %v3055 = vpop.f32.mrf.mxu0
    %v3056 = vadd.f32 %v2984, %v3055
    %v3057 = vpop.f32.mrf.mxu0
    %3058 = vdwg.mxu0
    %vm3059 = vcmask 17408
    %3060 = vst.msk [vmem:[#allocation7] sm:$0x3] %vm3059, %v3056
    %v3061 = vsel %vm3059, %v3056, -inf
    %3062 = vmax.xlane.f32.xlu0 %v3061
    %v3063 = vpop.xlane.xlu0 %3062
    %v3064 = vsub.f32 %v3056, %v3063
    %v3065 = vmul.f32 %v3064, 1.442695
    %v3066 = vpow.pop %v3065
    %v3067 = vsel %vm3059, %v3066, 0.0
    %3068 = vadd.xlane.f32.xlu0 %v3067
    %v3069 = vpop.xlane.xlu0 %3068
    %v3070 = vlog2.pop %v3069
    %v3071 = vmul.f32 %v3070, 0.6931472
    %v3072 = vsub.f32 %v3064, %v3071
    %v3073 = vlaneseq
    %v3074 = vand.u32 %v3073, 127
    %v3075 = vld [vmem:[%s20] sm:$0x3]
    %3076 = vset.pattern.permute.xlu0 0
    %3077 = vperm.xlu0 %3076, %v3075
    %v3078 = vpop.permute.xlu0 %3077
    %vm3079 = vcmp.eq.s32.totalorder %v3074, %v3078
    %v3080 = vsel %vm3079, 1, 0
    %v3081 = vcvt.s32.f32 %v3080
    %v3082 = vmul.f32 %v3072, %v3081
    %v3083 = vsel %vm3059, %v3082, 0.0
    %3084 = vadd.xlane.f32.xlu0 %v3083
    %v3085 = vpop.xlane.xlu0 %3084
    %v3086 = vsub.f32 0.0, %v3085
    %v3087 = vld [vmem:[%s21] sm:$0x3]
    %v3088 = vadd.f32 %v3087, 0.0
    %v3089 = vmul.f32 %v3088, 2.0
    %v3090 = vmul.f32 %v3086, %v3089
    %vm3091 = vcmask 1024
    %v3092 = vsel %vm3091, %v3090, 0.0
    %3093 = vadd.xlane.f32.xlu0 %v3092
    %v3094 = vpop.xlane.xlu0 %3093
    %v3095 = vrot.slane %v3094, 4
    %v3096 = vadd.f32 %v3094, %v3095
    %v3097 = vrot.slane %v3096, 2
    %v3098 = vadd.f32 %v3096, %v3097
    %v3099 = vrot.slane %v3098, 1
    %v3100 = vadd.f32 %v3098, %v3099
    %s3101 = vtos %v3100
    %v3102 = vrcp.pop 2.0
    %s3103 = vtos %v3102
    %s3104 = smul.f32 %s3101, %s3103
    %v3105 = vstv %s3104
    %vm3106 = vcmask 0
    %3107 = vst.msk [vmem:[#allocation5] sm:$0x1] %vm3106, %v3105
    // Predicated region
    $region90: #{bert_with_emotion_forward.1} parent=1 // pred_check
      _
    $region91: #{bert_with_emotion_forward.1} parent=1 // pred_check_branch
      %3109 = sbr.rel (0) target = $region93
    $region92: #{bert_with_emotion_forward.1} parent=1 // pred_region
      %s3111 = ssub.s32 16, 16
      %3112 = vsyncadd [#allocation6], %s3111
      %s3114 = sshll.u32 [#allocation5], 4
      %s3115 = int_to_ptr.vmem [resolvable:$true] %s3114
      %3117 = dma.vmem_to_hbm [thread:$0]  %s3115, 16, %s22, [#allocation6]
    $region93: #{bert_with_emotion_forward.1} parent=1 // pred_fallthru
      _
    // Predicated region
    $region94: #{bert_with_emotion_forward.1} parent=1 // pred_check
      _
    $region95: #{bert_with_emotion_forward.1} parent=1 // pred_check_branch
      %3119 = sbr.rel (0) target = $region97
    $region96: #{bert_with_emotion_forward.1} parent=1 // pred_region
      %s3121 = ssub.s32 32, 32
      %3122 = vsyncadd [#allocation8], %s3121
      %s3124 = sshll.u32 [#allocation7], 4
      %s3125 = int_to_ptr.vmem [resolvable:$true] %s3124
      %3127 = dma.vmem_to_hbm [thread:$0]  %s3125, 32, %s23, [#allocation8]
    $region97: #{bert_with_emotion_forward.1} parent=1 // pred_fallthru
      _
    // Predicated region
    $region98: #{bert_with_emotion_forward.1} parent=1 // pred_check
      _
    $region99: #{bert_with_emotion_forward.1} parent=1 // pred_check_branch
      %3129 = sbr.rel (0) target = $region101
    $region100: #{bert_with_emotion_forward.1} parent=1 // pred_region
      %3130 = dma.done [#allocation6], 16
    $region101: #{bert_with_emotion_forward.1} parent=1 // pred_fallthru
      _
    // Predicated region
    $region102: #{bert_with_emotion_forward.1} parent=1 // pred_check
      _
    $region103: #{bert_with_emotion_forward.1} parent=1 // pred_check_branch
      %3132 = sbr.rel (0) target = $region105
    $region104: #{bert_with_emotion_forward.1} parent=1 // pred_region
      %3133 = dma.done [#allocation8], 32
    $region105: #{bert_with_emotion_forward.1} parent=1 // pred_fallthru
      _
    %3134 = vsyncpa [#allocation6], 1
    %3135 = vsyncpa [#allocation8], 1

</llo_original>
